<compile_context>
chip_gen: v5e
topology: v5e:2x2
jax: 0.10.0
libtpu: 0.0.40
codegen_flags: <defaults>
</compile_context>

<pallas_src>
import functools

import numpy as np
import jax
import jax.numpy as jnp
from jax.experimental import pallas as pl
from jax.experimental.pallas import tpu as pltpu


# ------------------------------------------------------------ VMEM budget ---

def _detect_vmem_limit_bytes() -> int:
    """Generation-aware scoped-VMEM budget.

    ~100 MiB on 128 MiB parts (v5e/v6e), conservative 48 MiB on 64 MiB parts
    (v7x) and unknown chips.  Actual per-step working sets below are only a
    few MiB, so this is a ceiling, never a requirement.
    """
    try:
        info = pltpu.get_tpu_info()
        cap = int(getattr(info, "vmem_capacity_bytes"))
        if cap >= 96 * 1024 * 1024:
            return 100 * 1024 * 1024
        return min(48 * 1024 * 1024, int(cap * 0.8))
    except Exception:
        pass
    try:
        kind = jax.devices()[0].device_kind.lower()
        if "v5" in kind or "v6" in kind:
            return 100 * 1024 * 1024
    except Exception:
        pass
    return 48 * 1024 * 1024


_VMEM_LIMIT = _detect_vmem_limit_bytes()


def _pick_exp_dtype(compute_dtype):
    """bf16 EUP exp only where the hardware has it (v6e/v7x) and the kernel
    already runs bf16 activations; f32 everywhere else (v5e has no bf16 EUP)."""
    if np.dtype(compute_dtype) != np.dtype(jnp.bfloat16):
        return jnp.float32
    try:
        kind = jax.devices()[0].device_kind.lower()
    except Exception:
        return jnp.float32
    if "v6" in kind or "v7" in kind:
        return jnp.bfloat16
    return jnp.float32


def _pick_tile(dim: int, desired: int, *, align: int = 128) -> int:
    """Largest `align`-multiple divisor of `dim` that is <= desired.

    Falls back to the full extent (always a legal block) if no aligned divisor
    exists below `desired`.
    """
    if dim <= desired:
        return dim
    t = (min(desired, dim) // align) * align
    while t >= align:
        if dim % t == 0:
            return t
        t -= align
    # TODO(synk): switch to pl.cdiv grids with masked edge tiles for dims with
    # no aligned divisor instead of the full-extent fallback.
    return dim


# ----------------------------------------------------- projection matmuls ---

def _matmul_nt(a, b):
    """a @ b.T (contract the last dims of both), f32 accumulation on the MXU."""
    return jax.lax.dot_general(
        a, b, dimension_numbers=(((1,), (1,)), ((), ())),
        preferred_element_type=jnp.float32)


def _linear_1k_kernel(x_ref, w_ref, o_ref):
    o_ref[...] = _matmul_nt(x_ref[...], w_ref[...]).astype(o_ref.dtype)


def _linear_bias_1k_kernel(x_ref, w_ref, b_ref, o_ref):
    acc = _matmul_nt(x_ref[...], w_ref[...])
    o_ref[...] = (acc + b_ref[...].astype(jnp.float32)).astype(o_ref.dtype)


def _linear_acc_kernel(x_ref, w_ref, o_ref, acc_ref):
    @pl.when(pl.program_id(2) == 0)
    def _():
        acc_ref[...] = jnp.zeros_like(acc_ref)

    acc_ref[...] += _matmul_nt(x_ref[...], w_ref[...])

    @pl.when(pl.program_id(2) == pl.num_programs(2) - 1)
    def _():
        o_ref[...] = acc_ref[...].astype(o_ref.dtype)


def _linear_bias_acc_kernel(x_ref, w_ref, b_ref, o_ref, acc_ref):
    @pl.when(pl.program_id(2) == 0)
    def _():
        acc_ref[...] = jnp.zeros_like(acc_ref)

    acc_ref[...] += _matmul_nt(x_ref[...], w_ref[...])

    @pl.when(pl.program_id(2) == pl.num_programs(2) - 1)
    def _():
        o_ref[...] = (acc_ref[...] + b_ref[...].astype(jnp.float32)
                      ).astype(o_ref.dtype)


def _linear(x, w, b=None, *, tm=512, tn=512, tk=None):
    """y = x @ w.T (+ b); w is in nn.Linear (out_features, in_features) layout."""
    M, K = x.shape
    Nout, K2 = w.shape
    assert K == K2
    tm = _pick_tile(M, tm, align=8)
    tn = _pick_tile(Nout, tn, align=128)

    itemsize = x.dtype.itemsize
    if tk is None:
        # Prefer collapsing K into a single step: no accumulator RMW, no
        # init/finalize branches, x and w slabs read exactly once per tile.
        full_k_bytes = 2 * (tm + tn) * K * itemsize + 2 * tm * tn * itemsize
        tk = K if full_k_bytes <= int(_VMEM_LIMIT * 0.6) else 512
    tk = _pick_tile(K, min(tk, K), align=128)

    args = [x, w]
    has_bias = b is not None
    if has_bias:
        args.append(b.reshape(1, Nout))

    if tk == K:
        grid = (M // tm, Nout // tn)
        in_specs = [
            pl.BlockSpec((tm, K), lambda i, j: (i, 0)),
            pl.BlockSpec((tn, K), lambda i, j: (j, 0)),
        ]
        if has_bias:
            in_specs.append(pl.BlockSpec((1, tn), lambda i, j: (0, j)))
        kernel = _linear_bias_1k_kernel if has_bias else _linear_1k_kernel
        out_specs = pl.BlockSpec((tm, tn), lambda i, j: (i, j))
        scratch_shapes = []
        semantics = ("parallel", "parallel")
    else:
        grid = (M // tm, Nout // tn, K // tk)
        in_specs = [
            pl.BlockSpec((tm, tk), lambda i, j, k: (i, k)),
            pl.BlockSpec((tn, tk), lambda i, j, k: (j, k)),
        ]
        if has_bias:
            in_specs.append(pl.BlockSpec((1, tn), lambda i, j, k: (0, j)))
        kernel = _linear_bias_acc_kernel if has_bias else _linear_acc_kernel
        out_specs = pl.BlockSpec((tm, tn), lambda i, j, k: (i, j))
        scratch_shapes = [pltpu.VMEM((tm, tn), jnp.float32)]
        semantics = ("parallel", "parallel", "arbitrary")

    return pl.pallas_call(
        kernel,
        out_shape=jax.ShapeDtypeStruct((M, Nout), x.dtype),
        grid_spec=pltpu.PrefetchScalarGridSpec(
            num_scalar_prefetch=0,
            grid=grid,
            in_specs=in_specs,
            out_specs=out_specs,
            scratch_shapes=scratch_shapes,
        ),
        compiler_params=pltpu.CompilerParams(
            dimension_semantics=semantics,
            vmem_limit_bytes=_VMEM_LIMIT,
        ),
    )(*args)


# ----------------------------------------------------- flash attention ------

def _flash_attn_kernel(q_ref, k_ref, v_ref, o_ref, m_ref, l_ref, acc_ref, *,
                       exp_dtype):
    """Online-softmax attention for one (batch, head, q-tile); KV on axis 3.

    The 1/sqrt(D) scale is already folded into the qkv weight, so q arrives
    pre-scaled — no per-kv-step multiply here.
    """
    kv_step = pl.program_id(3)

    @pl.when(kv_step == 0)
    def _():
        m_ref[...] = jnp.full_like(m_ref, -jnp.inf)
        l_ref[...] = jnp.zeros_like(l_ref)
        acc_ref[...] = jnp.zeros_like(acc_ref)

    q = q_ref[0]                  # (tq, D), input dtype (bf16 at full MXU rate)
    k = k_ref[0]                  # (tkv, D)
    v = v_ref[0]                  # (tkv, D)

    # s = q @ k^T via contraction over D — no explicit transpose of k.
    s = jax.lax.dot_general(
        q, k, dimension_numbers=(((1,), (1,)), ((), ())),
        preferred_element_type=jnp.float32)           # (tq, tkv) f32

    m_prev = m_ref[...]                                             # (tq, 1)
    m_new = jnp.maximum(m_prev, jnp.max(s, axis=-1, keepdims=True))
    alpha = jnp.exp(m_prev - m_new)
    # bf16 exp on v6e/v7x (halves EUP cost); f32 elsewhere.
    p = jnp.exp((s - m_new).astype(exp_dtype))

    l_ref[...] = alpha * l_ref[...] + jnp.sum(
        p.astype(jnp.float32), axis=-1, keepdims=True)
    acc_ref[...] = alpha * acc_ref[...] + jax.lax.dot_general(
        p.astype(v.dtype), v,
        dimension_numbers=(((1,), (0,)), ((), ())),
        preferred_element_type=jnp.float32)
    m_ref[...] = m_new

    @pl.when(kv_step == pl.num_programs(3) - 1)
    def _():
        # approx reciprocal -> EUP path; ~2^-12 relative error in the softmax
        # normalization (fine for bf16 outputs; documented).
        inv_l = pl.reciprocal(l_ref[...], approx=True)
        o_ref[0] = (acc_ref[...] * inv_l).astype(o_ref.dtype)


def _flash_attention(qkv, num_heads, head_dim, *, q_block, kv_block, exp_dtype):
    """qkv: (B, N, 3C) with last dim ordered [3][H][D] -> out (B, N, C)."""
    B, N, C3 = qkv.shape
    H, D = num_heads, head_dim
    C = H * D
    assert C3 == 3 * C
    # TODO(synk): for head_dim < 128 (e.g. 64), pack 128 // D heads per block to
    # keep lane-dense loads/stores and full-width MXU operands; this version
    # requires head_dim to be a multiple of 128.
    assert D % 128 == 0, "head_dim must be a multiple of 128 in this kernel"

    tq = _pick_tile(N, min(q_block, N), align=8)
    tkv = _pick_tile(N, min(kv_block, N), align=8)
    grid = (B, H, N // tq, N // tkv)

    # Slice q/k/v directly out of the (B, N, 3C) qkv activation via index_maps:
    # last-axis block index h / H+h / 2H+h selects head h of q / k / v.
    q_spec = pl.BlockSpec((1, tq, D), lambda b, h, qi, ki: (b, qi, h))
    k_spec = pl.BlockSpec((1, tkv, D), lambda b, h, qi, ki: (b, ki, H + h))
    v_spec = pl.BlockSpec((1, tkv, D), lambda b, h, qi, ki: (b, ki, 2 * H + h))
    # Output written directly in merged-head (B, N, H*D) layout: the PyTorch
    # transpose(1,2).reshape(B,N,C) disappears.
    o_spec = pl.BlockSpec((1, tq, D), lambda b, h, qi, ki: (b, qi, h))

    return pl.pallas_call(
        functools.partial(_flash_attn_kernel, exp_dtype=exp_dtype),
        out_shape=jax.ShapeDtypeStruct((B, N, C), qkv.dtype),
        grid_spec=pltpu.PrefetchScalarGridSpec(
            num_scalar_prefetch=0,
            grid=grid,
            in_specs=[q_spec, k_spec, v_spec],
            out_specs=o_spec,
            scratch_shapes=[
                pltpu.VMEM((tq, 1), jnp.float32),   # running max
                pltpu.VMEM((tq, 1), jnp.float32),   # running sum
                pltpu.VMEM((tq, D), jnp.float32),   # output accumulator
            ],
        ),
        compiler_params=pltpu.CompilerParams(
            dimension_semantics=("parallel", "parallel", "parallel",
                                 "arbitrary"),
            vmem_limit_bytes=_VMEM_LIMIT,
        ),
    )(qkv, qkv, qkv)


# ----------------------------------------------------------- forward pass ---

def attention_forward(x, params, num_heads, *, q_block=256, kv_block=512,
                      compute_dtype=jnp.bfloat16):
    """Forward pass matching Attention.forward (eval mode, module defaults)."""
    B, N, C = x.shape
    assert C % num_heads == 0
    head_dim = C // num_heads
    scale = head_dim ** (-0.5)

    # Fold 1/sqrt(D) into the q rows of the qkv weight (in f32, then cast).
    # In a real model this is done once at parameter-load time, not per call.
    w_qkv = params["w_qkv"].astype(jnp.float32).at[:C, :].multiply(scale)

    x_c = x.astype(compute_dtype)
    w_qkv = w_qkv.astype(compute_dtype)
    w_proj = params["w_proj"].astype(compute_dtype)
    b_proj = params["b_proj"].astype(jnp.float32)   # bias added in f32

    exp_dtype = _pick_exp_dtype(compute_dtype)

    # qkv projection (no bias): (B*N, C) @ (C, 3C) -> (B, N, 3C), last dim
    # ordered [3][H][D] exactly as the PyTorch reshape expects.
    qkv = _linear(x_c.reshape(B * N, C), w_qkv)
    qkv = qkv.reshape(B, N, 3 * C)                  # free reshape, no copy

    # q_norm / k_norm are Identity (qk_norm=False), rope is None,
    # attn_drop / proj_drop are no-ops in eval.
    o = _flash_attention(qkv, num_heads, head_dim,
                         q_block=q_block, kv_block=kv_block,
                         exp_dtype=exp_dtype)

    # output projection with bias
    out = _linear(o.reshape(B * N, C), w_proj, b_proj)
    return out.reshape(B, N, C)


# -------------------------------------------------------------- reference ---

def attention_reference(x, params, num_heads):
    B, N, C = x.shape
    head_dim = C // num_heads
    scale = head_dim ** (-0.5)
    qkv = x @ params["w_qkv"].T
    qkv = qkv.reshape(B, N, 3, num_heads, head_dim)
    qkv = jnp.transpose(qkv, (2, 0, 3, 1, 4))
    q, k, v = qkv[0], qkv[1], qkv[2]
    s = jnp.einsum("bhqd,bhkd->bhqk", q, k) * scale
    p = jax.nn.softmax(s, axis=-1)
    o = jnp.einsum("bhqk,bhkd->bhqd", p, v)
    o = jnp.transpose(o, (0, 2, 1, 3)).reshape(B, N, C)
    return o @ params["w_proj"].T + params["b_proj"]


# ------------------------------------------------------------------- main ---

if __name__ == "__main__":
    # Small but alignment-friendly shapes: head_dim = 128 (lane-dense blocks).
    B, N, C = 2, 256, 256
    num_heads = 2

    key = jax.random.PRNGKey(0)
    kx, kw1, kw2, kb = jax.random.split(key, 4)

    x = jax.random.normal(kx, (B, N, C), dtype=jnp.float32)
    params = {
        # nn.Linear(dim, dim*3, bias=False): weight shape (3C, C)
        "w_qkv": jax.random.normal(kw1, (3 * C, C), dtype=jnp.float32) * 0.05,
        # nn.Linear(dim, dim): weight (C, C), bias (C,)
        "w_proj": jax.random.normal(kw2, (C, C), dtype=jnp.float32) * 0.05,
        "b_proj": jax.random.normal(kb, (C,), dtype=jnp.float32) * 0.05,
    }

    ref = attention_reference(x, params, num_heads)

    # 1) f32 path with small blocks to exercise Q-tiling and multi-step
    #    online-softmax accumulation; tight tolerance.
    fwd_f32 = jax.jit(functools.partial(
        attention_forward, num_heads=num_heads,
        q_block=128, kv_block=128, compute_dtype=jnp.float32))
    out_f32 = jax.block_until_ready(fwd_f32(x, params))
    assert out_f32.shape == (B, N, C)
    err32 = float(jnp.max(jnp.abs(out_f32 - ref)))
    assert jnp.allclose(out_f32, ref, atol=3e-3, rtol=3e-3), (
        f"f32 mismatch vs reference, max abs err = {err32}")

    # 2) default path: bf16 activations, larger blocks; looser tolerance.
    fwd_bf16 = jax.jit(functools.partial(attention_forward,
                                         num_heads=num_heads))
    out_bf16 = jax.block_until_ready(fwd_bf16(x, params))
    assert out_bf16.shape == (B, N, C)
    out_bf16_f32 = out_bf16.astype(jnp.float32)
    err16 = float(jnp.max(jnp.abs(out_bf16_f32 - ref)))
    assert jnp.allclose(out_bf16_f32, ref, atol=7.5e-2, rtol=7.5e-2), (
        f"bf16 mismatch vs reference, max abs err = {err16}")

    print("KERNEL_OK")
</pallas_src>

<mosaic_0001>
module attributes {stable_mosaic.version = 11 : i64} {
  func.func @_linear_1k_kernel(%arg0: i32, %arg1: i32, %arg2: memref<512x256xf32, #tpu.memory_space<vmem>>, %arg3: memref<384x256xf32, #tpu.memory_space<vmem>>, %arg4: memref<512x384xf32, #tpu.memory_space<vmem>>) attributes {dimension_semantics = [#tpu.dimension_semantics<parallel>, #tpu.dimension_semantics<parallel>], iteration_bounds = array<i64: 1, 2>, scalar_prefetch = 0 : i64, scratch_operands = 0 : i64, tpu.core_type = #tpu.core_type<tc>, window_params = [{transform_indices = @transform_0, window_bounds = array<i64: 512, 256>}, {transform_indices = @transform_1, window_bounds = array<i64: 384, 256>}, {transform_indices = @transform_2, window_bounds = array<i64: 512, 384>}]} {
    %c0 = arith.constant 0 : index
    %c0_0 = arith.constant 0 : index
    %0 = vector.load %arg2[%c0, %c0_0] : memref<512x256xf32, #tpu.memory_space<vmem>>, vector<512x256xf32>
    %c0_1 = arith.constant 0 : index
    %c0_2 = arith.constant 0 : index
    %1 = vector.load %arg3[%c0_1, %c0_2] : memref<384x256xf32, #tpu.memory_space<vmem>>, vector<384x256xf32>
    %cst = arith.constant dense<0.000000e+00> : vector<512x384xf32>
    %2 = tpu.matmul %0, %1, %cst {dimension_numbers = #tpu.dot_dimension_numbers<[1], [1], [0], [0], [0, 0, 1, 0], [], []>} : vector<512x256xf32>, vector<384x256xf32>, vector<512x384xf32> -> vector<512x384xf32>
    %c0_3 = arith.constant 0 : index
    %c0_4 = arith.constant 0 : index
    %3 = vector.load %arg4[%c0_3, %c0_4] : memref<512x384xf32, #tpu.memory_space<vmem>>, vector<512x384xf32>
    tpu.vector_store %arg4[%c0_3, %c0_4], %2 {strides = array<i32>} : memref<512x384xf32, #tpu.memory_space<vmem>>, vector<512x384xf32>,
    return
  }
  func.func @transform_0(%arg0: i32, %arg1: i32) -> (i32, i32) {
    %c0_i32 = arith.constant 0 : i32
    %c0_i32_0 = arith.constant 0 : i32
    return %arg0, %c0_i32 : i32, i32
  }
  func.func @transform_1(%arg0: i32, %arg1: i32) -> (i32, i32) {
    %c0_i32 = arith.constant 0 : i32
    %c0_i32_0 = arith.constant 0 : i32
    return %arg1, %c0_i32 : i32, i32
  }
  func.func @transform_2(%arg0: i32, %arg1: i32) -> (i32, i32) {
    %c0_i32 = arith.constant 0 : i32
    return %arg0, %arg1 : i32, i32
  }
}

module attributes {stable_mosaic.version = 11 : i64} {
  func.func @_linear_bias_1k_kernel(%arg0: i32, %arg1: i32, %arg2: memref<512x256xf32, #tpu.memory_space<vmem>>, %arg3: memref<256x256xf32, #tpu.memory_space<vmem>>, %arg4: memref<1x256xf32, #tpu.memory_space<vmem>>, %arg5: memref<512x256xf32, #tpu.memory_space<vmem>>) attributes {dimension_semantics = [#tpu.dimension_semantics<parallel>, #tpu.dimension_semantics<parallel>], iteration_bounds = array<i64: 1, 1>, scalar_prefetch = 0 : i64, scratch_operands = 0 : i64, tpu.core_type = #tpu.core_type<tc>, window_params = [{transform_indices = @transform_0, window_bounds = array<i64: 512, 256>}, {transform_indices = @transform_1, window_bounds = array<i64: 256, 256>}, {transform_indices = @transform_2, window_bounds = array<i64: 1, 256>}, {transform_indices = @transform_3, window_bounds = array<i64: 512, 256>}]} {
    %c0 = arith.constant 0 : index
    %c0_0 = arith.constant 0 : index
    %0 = vector.load %arg2[%c0, %c0_0] : memref<512x256xf32, #tpu.memory_space<vmem>>, vector<512x256xf32>
    %c0_1 = arith.constant 0 : index
    %c0_2 = arith.constant 0 : index
    %1 = vector.load %arg3[%c0_1, %c0_2] : memref<256x256xf32, #tpu.memory_space<vmem>>, vector<256x256xf32>
    %cst = arith.constant dense<0.000000e+00> : vector<512x256xf32>
    %2 = tpu.matmul %0, %1, %cst {dimension_numbers = #tpu.dot_dimension_numbers<[1], [1], [0], [0], [0, 0, 1, 0], [], []>} : vector<512x256xf32>, vector<256x256xf32>, vector<512x256xf32> -> vector<512x256xf32>
    %c0_3 = arith.constant 0 : index
    %c0_4 = arith.constant 0 : index
    %3 = vector.load %arg4[%c0_3, %c0_4] : memref<1x256xf32, #tpu.memory_space<vmem>>, vector<1x256xf32>
    %4 = vector.broadcast %3 : vector<1x256xf32> to vector<512x256xf32>
    %5 = arith.addf %2, %4 : vector<512x256xf32>
    %c0_5 = arith.constant 0 : index
    %c0_6 = arith.constant 0 : index
    %6 = vector.load %arg5[%c0_5, %c0_6] : memref<512x256xf32, #tpu.memory_space<vmem>>, vector<512x256xf32>
    tpu.vector_store %arg5[%c0_5, %c0_6], %5 {strides = array<i32>} : memref<512x256xf32, #tpu.memory_space<vmem>>, vector<512x256xf32>,
    return
  }
  func.func @transform_0(%arg0: i32, %arg1: i32) -> (i32, i32) {
    %c0_i32 = arith.constant 0 : i32
    %c0_i32_0 = arith.constant 0 : i32
    return %arg0, %c0_i32 : i32, i32
  }
  func.func @transform_1(%arg0: i32, %arg1: i32) -> (i32, i32) {
    %c0_i32 = arith.constant 0 : i32
    %c0_i32_0 = arith.constant 0 : i32
    return %arg1, %c0_i32 : i32, i32
  }
  func.func @transform_2(%arg0: i32, %arg1: i32) -> (i32, i32) {
    %c0_i32 = arith.constant 0 : i32
    %c0_i32_0 = arith.constant 0 : i32
    return %c0_i32, %arg1 : i32, i32
  }
  func.func @transform_3(%arg0: i32, %arg1: i32) -> (i32, i32) {
    %c0_i32 = arith.constant 0 : i32
    return %arg0, %arg1 : i32, i32
  }
}

module attributes {stable_mosaic.version = 11 : i64} {
  func.func @_flash_attn_kernel(%arg0: i32, %arg1: i32, %arg2: i32, %arg3: i32, %arg4: memref<1x128x128xf32, #tpu.memory_space<vmem>>, %arg5: memref<1x128x128xf32, #tpu.memory_space<vmem>>, %arg6: memref<1x128x128xf32, #tpu.memory_space<vmem>>, %arg7: memref<1x128x128xf32, #tpu.memory_space<vmem>>, %arg8: memref<128x1xf32, #tpu.memory_space<vmem>>, %arg9: memref<128x1xf32, #tpu.memory_space<vmem>>, %arg10: memref<128x128xf32, #tpu.memory_space<vmem>>) attributes {dimension_semantics = [#tpu.dimension_semantics<parallel>, #tpu.dimension_semantics<parallel>, #tpu.dimension_semantics<parallel>, #tpu.dimension_semantics<arbitrary>], iteration_bounds = array<i64: 2, 2, 2, 2>, scalar_prefetch = 0 : i64, scratch_operands = 3 : i64, tpu.core_type = #tpu.core_type<tc>, window_params = [{transform_indices = @transform_0, window_bounds = array<i64: 1, 128, 128>}, {transform_indices = @transform_1, window_bounds = array<i64: 1, 128, 128>}, {transform_indices = @transform_2, window_bounds = array<i64: 1, 128, 128>}, {transform_indices = @transform_3, window_bounds = array<i64: 1, 128, 128>}]} {
    %c0_i32 = arith.constant 0 : i32
    %0 = arith.cmpi eq, %arg3, %c0_i32 : i32
    %1 = arith.extui %0 : i1 to i32
    %c0_i32_0 = arith.constant 0 : i32
    %2 = arith.cmpi ne, %1, %c0_i32_0 : i32
    scf.if %2 {
      %cst_25 = arith.constant 0xFF800000 : f32
      %35 = vector.broadcast %cst_25 : f32 to vector<128x1xf32>
      %c0_26 = arith.constant 0 : index
      %c0_27 = arith.constant 0 : index
      %36 = vector.load %arg8[%c0_26, %c0_27] : memref<128x1xf32, #tpu.memory_space<vmem>>, vector<128x1xf32>
      tpu.vector_store %arg8[%c0_26, %c0_27], %35 {strides = array<i32>} : memref<128x1xf32, #tpu.memory_space<vmem>>, vector<128x1xf32>,
      %cst_28 = arith.constant 0.000000e+00 : f32
      %37 = vector.broadcast %cst_28 : f32 to vector<128x1xf32>
      %c0_29 = arith.constant 0 : index
      %c0_30 = arith.constant 0 : index
      %38 = vector.load %arg9[%c0_29, %c0_30] : memref<128x1xf32, #tpu.memory_space<vmem>>, vector<128x1xf32>
      tpu.vector_store %arg9[%c0_29, %c0_30], %37 {strides = array<i32>} : memref<128x1xf32, #tpu.memory_space<vmem>>, vector<128x1xf32>,
      %cst_31 = arith.constant 0.000000e+00 : f32
      %39 = vector.broadcast %cst_31 : f32 to vector<128x128xf32>
      %c0_32 = arith.constant 0 : index
      %c0_33 = arith.constant 0 : index
      %40 = vector.load %arg10[%c0_32, %c0_33] : memref<128x128xf32, #tpu.memory_space<vmem>>, vector<128x128xf32>
      tpu.vector_store %arg10[%c0_32, %c0_33], %39 {strides = array<i32>} : memref<128x128xf32, #tpu.memory_space<vmem>>, vector<128x128xf32>,
    } else {
    }
    %c0 = arith.constant 0 : index
    %c0_1 = arith.constant 0 : index
    %c0_2 = arith.constant 0 : index
    %3 = vector.load %arg4[%c0, %c0_1, %c0_2] : memref<1x128x128xf32, #tpu.memory_space<vmem>>, vector<1x128x128xf32>
    %4 = vector.shape_cast %3 : vector<1x128x128xf32> to vector<128x128xf32>
    %c0_3 = arith.constant 0 : index
    %c0_4 = arith.constant 0 : index
    %c0_5 = arith.constant 0 : index
    %5 = vector.load %arg5[%c0_3, %c0_4, %c0_5] : memref<1x128x128xf32, #tpu.memory_space<vmem>>, vector<1x128x128xf32>
    %6 = vector.shape_cast %5 : vector<1x128x128xf32> to vector<128x128xf32>
    %c0_6 = arith.constant 0 : index
    %c0_7 = arith.constant 0 : index
    %c0_8 = arith.constant 0 : index
    %7 = vector.load %arg6[%c0_6, %c0_7, %c0_8] : memref<1x128x128xf32, #tpu.memory_space<vmem>>, vector<1x128x128xf32>
    %8 = vector.shape_cast %7 : vector<1x128x128xf32> to vector<128x128xf32>
    %cst = arith.constant dense<0.000000e+00> : vector<128x128xf32>
    %9 = tpu.matmul %4, %6, %cst {dimension_numbers = #tpu.dot_dimension_numbers<[1], [1], [0], [0], [0, 0, 1, 0], [], []>} : vector<128x128xf32>, vector<128x128xf32>, vector<128x128xf32> -> vector<128x128xf32>
    %c0_9 = arith.constant 0 : index
    %c0_10 = arith.constant 0 : index
    %10 = vector.load %arg8[%c0_9, %c0_10] : memref<128x1xf32, #tpu.memory_space<vmem>>, vector<128x1xf32>
    %cst_11 = arith.constant dense<0xFF800000> : vector<128xf32>
    %11 = vector.multi_reduction <maximumf>, %9, %cst_11 [1] : vector<128x128xf32> to vector<128xf32>
    %12 = vector.shape_cast %11 : vector<128xf32> to vector<128x1xf32>
    %13 = arith.maximumf %10, %12 : vector<128x1xf32>
    %14 = arith.subf %10, %13 : vector<128x1xf32>
    %15 = math.exp %14 : vector<128x1xf32>
    %16 = vector.broadcast %13 : vector<128x1xf32> to vector<128x128xf32>
    %17 = arith.subf %9, %16 : vector<128x128xf32>
    %18 = math.exp %17 : vector<128x128xf32>
    %c0_12 = arith.constant 0 : index
    %c0_13 = arith.constant 0 : index
    %19 = vector.load %arg9[%c0_12, %c0_13] : memref<128x1xf32, #tpu.memory_space<vmem>>, vector<128x1xf32>
    %20 = arith.mulf %15, %19 : vector<128x1xf32>
    %cst_14 = arith.constant dense<0.000000e+00> : vector<128xf32>
    %21 = vector.multi_reduction <add>, %18, %cst_14 [1] : vector<128x128xf32> to vector<128xf32>
    %22 = vector.shape_cast %21 : vector<128xf32> to vector<128x1xf32>
    %23 = arith.addf %20, %22 : vector<128x1xf32>
    %c0_15 = arith.constant 0 : index
    %c0_16 = arith.constant 0 : index
    %24 = vector.load %arg9[%c0_15, %c0_16] : memref<128x1xf32, #tpu.memory_space<vmem>>, vector<128x1xf32>
    tpu.vector_store %arg9[%c0_15, %c0_16], %23 {strides = array<i32>} : memref<128x1xf32, #tpu.memory_space<vmem>>, vector<128x1xf32>,
    %c0_17 = arith.constant 0 : index
    %c0_18 = arith.constant 0 : index
    %25 = vector.load %arg10[%c0_17, %c0_18] : memref<128x128xf32, #tpu.memory_space<vmem>>, vector<128x128xf32>
    %26 = vector.broadcast %15 : vector<128x1xf32> to vector<128x128xf32>
    %27 = arith.mulf %26, %25 : vector<128x128xf32>
    %cst_19 = arith.constant dense<0.000000e+00> : vector<128x128xf32>
    %28 = tpu.matmul %18, %8, %cst_19 {dimension_numbers = #tpu.dot_dimension_numbers<[1], [0], [0], [1], [0, 0, 1, 1], [], []>} : vector<128x128xf32>, vector<128x128xf32>, vector<128x128xf32> -> vector<128x128xf32>
    %29 = arith.addf %27, %28 : vector<128x128xf32>
    %c0_20 = arith.constant 0 : index
    %c0_21 = arith.constant 0 : index
    %30 = vector.load %arg10[%c0_20, %c0_21] : memref<128x128xf32, #tpu.memory_space<vmem>>, vector<128x128xf32>
    tpu.vector_store %arg10[%c0_20, %c0_21], %29 {strides = array<i32>} : memref<128x128xf32, #tpu.memory_space<vmem>>, vector<128x128xf32>,
    %c0_22 = arith.constant 0 : index
    %c0_23 = arith.constant 0 : index
    %31 = vector.load %arg8[%c0_22, %c0_23] : memref<128x1xf32, #tpu.memory_space<vmem>>, vector<128x1xf32>
    tpu.vector_store %arg8[%c0_22, %c0_23], %13 {strides = array<i32>} : memref<128x1xf32, #tpu.memory_space<vmem>>, vector<128x1xf32>,
    %c1_i32 = arith.constant 1 : i32
    %32 = arith.cmpi eq, %arg3, %c1_i32 : i32
    %33 = arith.extui %32 : i1 to i32
    %c0_i32_24 = arith.constant 0 : i32
    %34 = arith.cmpi ne, %33, %c0_i32_24 : i32
    scf.if %34 {
      %c0_25 = arith.constant 0 : index
      %c0_26 = arith.constant 0 : index
      %35 = vector.load %arg9[%c0_25, %c0_26] : memref<128x1xf32, #tpu.memory_space<vmem>>, vector<128x1xf32>
      %36 = tpu.reciprocal %35 {approx = true} : vector<128x1xf32> -> vector<128x1xf32>
      %c0_27 = arith.constant 0 : index
      %c0_28 = arith.constant 0 : index
      %37 = vector.load %arg10[%c0_27, %c0_28] : memref<128x128xf32, #tpu.memory_space<vmem>>, vector<128x128xf32>
      %38 = vector.broadcast %36 : vector<128x1xf32> to vector<128x128xf32>
      %39 = arith.mulf %37, %38 : vector<128x128xf32>
      %c0_29 = arith.constant 0 : index
      %c0_30 = arith.constant 0 : index
      %c0_31 = arith.constant 0 : index
      %40 = vector.load %arg7[%c0_29, %c0_30, %c0_31] : memref<1x128x128xf32, #tpu.memory_space<vmem>>, vector<1x128x128xf32>
      %41 = vector.shape_cast %40 : vector<1x128x128xf32> to vector<128x128xf32>
      %42 = vector.shape_cast %39 : vector<128x128xf32> to vector<1x128x128xf32>
      tpu.vector_store %arg7[%c0_29, %c0_30, %c0_31], %42 {strides = array<i32>} : memref<1x128x128xf32, #tpu.memory_space<vmem>>, vector<1x128x128xf32>,
    } else {
    }
    return
  }
  func.func @transform_0(%arg0: i32, %arg1: i32, %arg2: i32, %arg3: i32) -> (i32, i32, i32) {
    %c0_i32 = arith.constant 0 : i32
    return %arg0, %arg2, %arg1 : i32, i32, i32
  }
  func.func @transform_1(%arg0: i32, %arg1: i32, %arg2: i32, %arg3: i32) -> (i32, i32, i32) {
    %c2_i32 = arith.constant 2 : i32
    %0 = arith.addi %c2_i32, %arg1 : i32
    %c0_i32 = arith.constant 0 : i32
    return %arg0, %arg3, %0 : i32, i32, i32
  }
  func.func @transform_2(%arg0: i32, %arg1: i32, %arg2: i32, %arg3: i32) -> (i32, i32, i32) {
    %c4_i32 = arith.constant 4 : i32
    %0 = arith.addi %c4_i32, %arg1 : i32
    %c0_i32 = arith.constant 0 : i32
    return %arg0, %arg3, %0 : i32, i32, i32
  }
  func.func @transform_3(%arg0: i32, %arg1: i32, %arg2: i32, %arg3: i32) -> (i32, i32, i32) {
    %c0_i32 = arith.constant 0 : i32
    return %arg0, %arg2, %arg1 : i32, i32, i32
  }
}

</mosaic_0001>

<llo_original>
// kernel: attention_forward.4
$region0: #{attention_forward.4}
  #allocation0 [shape = 'u32[]', space=smem, size = 0x4, offset = 0x4, fixed_abs, tag = 'smem constant byte address 0x4 - core index']
  #allocation1 [shape = 'u32[72,128]{1,0:T(1,128)}', space=vmem, size = 0x9000, scoped, tag = 'internal scratch']
  #allocation2 [shape = 'f32[128,1]{1,0:T(8,128)}', space=vmem, size = 0x10000, scoped, tag = 'scratch operand']
  #allocation3 [shape = 'f32[128,1]{1,0:T(8,128)}', space=vmem, size = 0x10000, scoped, tag = 'scratch operand']
  #allocation4 [shape = 'f32[128,128]{1,0:T(8,128)}', space=vmem, size = 0x10000, scoped, tag = 'scratch operand']
  %s0 = inlined_call_operand.vmem [shape: f32[2,256,768], index: 0, kind: input, shape index: {}, may-alias: {0,1,2}]
  %s1 = inlined_call_operand.vmem [shape: f32[2,256,768], index: 1, kind: input, shape index: {}, may-alias: {0,1,2}]
  %s2 = inlined_call_operand.vmem [shape: f32[2,256,768], index: 2, kind: input, shape index: {}, may-alias: {0,1,2}]
  %s3 = inlined_call_operand.vmem [shape: f32[2,256,256], index: 3, kind: output, shape index: {}]
  %s4 = sld [smem:[#allocation0]]
  $region201: #{attention_forward.4} parent=0
    _
  %s6 = ssub.s32 1, %s4
  %s7 = scalar_select 0, %s6, %s4
  $region1: #{attention_forward.4} parent=0
    #allocation5 [shape = 'u8[131072]{0}', space=vmem, size = 0x20000, scoped, tag = 'input window, operand 0']
    #allocation6 [shape = 'u8[131072]{0}', space=vmem, size = 0x20000, scoped, tag = 'input window, operand 1']
    #allocation7 [shape = 'u8[131072]{0}', space=vmem, size = 0x20000, scoped, tag = 'input window, operand 2']
    #allocation8 [shape = 'u8[131072]{0}', space=vmem, size = 0x20000, scoped, tag = 'output window, operand 0']
    loop: start=0, step=1, limit=18
    $region2: #{attention_forward.4} parent=1 // loop_pre_header
      _
    $region3: #{attention_forward.4} parent=1 // loop_header
      %s9 = sphi 0, %s13
      %p10 = scmp.ge.s32.totalorder %s9, 18
      %s16 = sphi 0, %s42
      %s17 = sphi 0, %s38
      %s18 = sphi 0, %s34
      %s19 = sphi 0, %s30
      %s20 = sphi 0, %s16
      %s21 = sphi 0, %s17
      %s22 = sphi 0, %s18
      %s23 = sphi 0, %s19
      %s24 = sphi 0, %s20
      %s25 = sphi 0, %s21
      %s26 = sphi 0, %s22
      %s27 = sphi 0, %s23
      %s49 = sphi 0, %s51
      %s52 = sphi 0, %s49
      %s53 = sphi 0, %s52
      %s69 = sphi 0, %s53
      %s81 = sphi 0, %s83
      %s84 = sphi 0, %s81
      %s85 = sphi 0, %s84
      %s101 = sphi 0, %s85
      %s113 = sphi 0, %s115
      %s116 = sphi 0, %s113
      %s117 = sphi 0, %s116
      %s133 = sphi 0, %s117
      %s143 = sphi 0, %s145
      %s146 = sphi 0, %s143
      %s147 = sphi 0, %s146
      %s163 = sphi 0, %s147
    $region4: #{attention_forward.4} parent=1 // loop_header_branch
      %12 = sbr.rel (%p10) target = $region8
    $region5: #{attention_forward.4} parent=1 // loop_body
      %s14 = ssub.s32 %s9, 1
      %s15 = ssub.s32 %s9, 2
      %s28 = sadd.s32 1, %s19
      %p29 = scmp.ge.s32.totalorder %s28, 2
      %s30 = scalar_select %p29, 0, %s28
      %s31 = sadd.s32 1, %s18
      %s32 = scalar_select %p29, %s31, %s18
      %p33 = scmp.ge.s32.totalorder %s32, 2
      %s34 = scalar_select %p33, 0, %s32
      %s35 = sadd.s32 1, %s17
      %s36 = scalar_select %p33, %s35, %s17
      %p37 = scmp.ge.s32.totalorder %s36, 2
      %s38 = scalar_select %p37, 0, %s36
      %s39 = sadd.s32 1, %s16
      %s40 = scalar_select %p37, %s39, %s16
      %p41 = scmp.ge.s32.totalorder %s40, 2
      %s42 = scalar_select %p41, 0, %s40
      %s43 = ssub.s32 %s16, %s42
      %s44 = ssub.s32 %s18, %s34
      %s45 = sor.u32 %s43, %s44
      %s46 = ssub.s32 %s17, %s38
      %s47 = sor.u32 %s45, %s46
      %p48 = scmp.eq.s32.totalorder %s47, 0
      %s50 = sadd.s32 %s49, 1
      %s51 = scalar_select %p48, %s49, %s50
      %p54 = pneg %p48
      %p55 = scmp.eq.s32.totalorder %s9, 15
      %p56 = por %p54, %p55
      %p57 = scmp.ne.s32.totalorder %s49, %s52
      %p58 = scmp.eq.s32.totalorder %s9, 0
      %p59 = por %p57, %p58
      %p60 = scmp.ne.s32.totalorder %s49, %s52
      %p61 = scmp.eq.s32.totalorder %s14, 15
      %p62 = por %p60, %p61
      %p63 = scmp.ne.s32.totalorder %s52, %s53
      %p64 = scmp.eq.s32.totalorder %s14, 0
      %p65 = por %p63, %p64
      %p66 = scmp.ne.s32.totalorder %s52, %s53
      %p67 = scmp.eq.s32.totalorder %s15, 15
      %p68 = por %p66, %p67
      %p70 = scmp.ne.s32.totalorder %s53, %s69
      %p71 = scmp.eq.s32.totalorder %s15, 0
      %p72 = por %p70, %p71
      %s73 = sadd.s32 %s17, 2
      %s74 = sadd.s32 %s38, 2
      %s75 = ssub.s32 %s16, %s42
      %s76 = ssub.s32 %s19, %s30
      %s77 = sor.u32 %s75, %s76
      %s78 = ssub.s32 %s73, %s74
      %s79 = sor.u32 %s77, %s78
      %p80 = scmp.eq.s32.totalorder %s79, 0
      %s82 = sadd.s32 %s81, 1
      %s83 = scalar_select %p80, %s81, %s82
      %p86 = pneg %p80
      %p87 = scmp.eq.s32.totalorder %s9, 15
      %p88 = por %p86, %p87
      %p89 = scmp.ne.s32.totalorder %s81, %s84
      %p90 = scmp.eq.s32.totalorder %s9, 0
      %p91 = por %p89, %p90
      %p92 = scmp.ne.s32.totalorder %s81, %s84
      %p93 = scmp.eq.s32.totalorder %s14, 15
      %p94 = por %p92, %p93
      %p95 = scmp.ne.s32.totalorder %s84, %s85
      %p96 = scmp.eq.s32.totalorder %s14, 0
      %p97 = por %p95, %p96
      %p98 = scmp.ne.s32.totalorder %s84, %s85
      %p99 = scmp.eq.s32.totalorder %s15, 15
      %p100 = por %p98, %p99
      %p102 = scmp.ne.s32.totalorder %s85, %s101
      %p103 = scmp.eq.s32.totalorder %s15, 0
      %p104 = por %p102, %p103
      %s105 = sadd.s32 %s17, 4
      %s106 = sadd.s32 %s38, 4
      %s107 = ssub.s32 %s16, %s42
      %s108 = ssub.s32 %s19, %s30
      %s109 = sor.u32 %s107, %s108
      %s110 = ssub.s32 %s105, %s106
      %s111 = sor.u32 %s109, %s110
      %p112 = scmp.eq.s32.totalorder %s111, 0
      %s114 = sadd.s32 %s113, 1
      %s115 = scalar_select %p112, %s113, %s114
      %p118 = pneg %p112
      %p119 = scmp.eq.s32.totalorder %s9, 15
      %p120 = por %p118, %p119
      %p121 = scmp.ne.s32.totalorder %s113, %s116
      %p122 = scmp.eq.s32.totalorder %s9, 0
      %p123 = por %p121, %p122
      %p124 = scmp.ne.s32.totalorder %s113, %s116
      %p125 = scmp.eq.s32.totalorder %s14, 15
      %p126 = por %p124, %p125
      %p127 = scmp.ne.s32.totalorder %s116, %s117
      %p128 = scmp.eq.s32.totalorder %s14, 0
      %p129 = por %p127, %p128
      %p130 = scmp.ne.s32.totalorder %s116, %s117
      %p131 = scmp.eq.s32.totalorder %s15, 15
      %p132 = por %p130, %p131
      %p134 = scmp.ne.s32.totalorder %s117, %s133
      %p135 = scmp.eq.s32.totalorder %s15, 0
      %p136 = por %p134, %p135
      %s137 = ssub.s32 %s16, %s42
      %s138 = ssub.s32 %s18, %s34
      %s139 = sor.u32 %s137, %s138
      %s140 = ssub.s32 %s17, %s38
      %s141 = sor.u32 %s139, %s140
      %p142 = scmp.eq.s32.totalorder %s141, 0
      %s144 = sadd.s32 %s143, 1
      %s145 = scalar_select %p142, %s143, %s144
      %p148 = pneg %p142
      %p149 = scmp.eq.s32.totalorder %s9, 15
      %p150 = por %p148, %p149
      %p151 = scmp.ne.s32.totalorder %s143, %s146
      %p152 = scmp.eq.s32.totalorder %s9, 0
      %p153 = por %p151, %p152
      %p154 = scmp.ne.s32.totalorder %s143, %s146
      %p155 = scmp.eq.s32.totalorder %s14, 15
      %p156 = por %p154, %p155
      %p157 = scmp.ne.s32.totalorder %s146, %s147
      %p158 = scmp.eq.s32.totalorder %s14, 0
      %p159 = por %p157, %p158
      %p160 = scmp.ne.s32.totalorder %s146, %s147
      %p161 = scmp.eq.s32.totalorder %s15, 15
      %p162 = por %p160, %p161
      %p164 = scmp.ne.s32.totalorder %s147, %s163
      %p165 = scmp.eq.s32.totalorder %s15, 0
      %p166 = por %p164, %p165
      %p167 = scmp.le.s32.totalorder 1, %s9
      %p168 = scmp.lt.s32.totalorder %s9, 17
      %p169 = pnand %p167, %p168
      %p170 = pneg %p169
      // Predicated region
      $region9: #{attention_forward.4} parent=5 // pred_check
        _
      $region10: #{attention_forward.4} parent=5 // pred_check_branch
        %172 = sbr.rel (%p169) target = $region12
      $region11: #{attention_forward.4} parent=5 // pred_region
        %s173 = ssub.s32 %s9, 1
      $region12: #{attention_forward.4} parent=5 // pred_fallthru
        _
      %p174 = scmp.lt.s32.totalorder %s9, 16
      // Predicated region
      $region13: #{attention_forward.4} parent=5 // pred_check
        %p175 = pneg %p174
      $region14: #{attention_forward.4} parent=5 // pred_check_branch
        %177 = sbr.rel (%p175) target = $region16
      $region15: #{attention_forward.4} parent=5 // pred_region
        // Predicated region
        $region17: #{attention_forward.4} parent=15 // pred_check
          %p178 = pneg %p59
        $region18: #{attention_forward.4} parent=15 // pred_check_branch
          %180 = sbr.rel (%p178) target = $region20
        $region19: #{attention_forward.4} parent=15 // pred_region
          %s181 = sand.u32 %s49, 1
          %s182 = sand.u32 %s49, 1
          %s183 = smul.addr %s182, 128
          %s184 = scalar_lea.vmem [#allocation5], %s183
          %s185 = smul.u32 16, %s18
          %s186 = smul.addr %s185, 6
          %s187 = sadd.s32 %s17, %s186
          %s188 = smul.addr %s16, 192
          %s189 = sadd.s32 %s187, %s188
          %s190 = smul.addr %s189, 8
          %s191 = scalar_lea.vmem %s0, %s190
          // Predicated region
          $region21: #{attention_forward.4} parent=19 // pred_check
            _
          $region22: #{attention_forward.4} parent=19 // pred_check_branch
            %193 = sbr.rel (0) target = $region24
          $region23: #{attention_forward.4} parent=19 // pred_region
            // Predicated region
            $region25: #{attention_forward.4} parent=23 // pred_check
              _
            $region26: #{attention_forward.4} parent=23 // pred_check_branch
              %195 = sbr.rel (0) target = $region28
            $region27: #{attention_forward.4} parent=23 // pred_region
              // Predicated region
              $region40: #{attention_forward.4} parent=27 // pred_check
                _
              $region41: #{attention_forward.4} parent=27 // pred_check_branch
                %241 = sbr.rel (0) target = $region43
              $region42: #{attention_forward.4} parent=27 // pred_region
                loop: start=0, step=1, limit=1
                $region44: #{attention_forward.4} parent=42 // loop_pre_header
                  _
                $region45: #{attention_forward.4} parent=42 // loop_header
                  %s243 = sphi 0, %s247
                  %p244 = scmp.ge.s32.totalorder %s243, 1
                  %s248 = sphi %s191, %s191
                  %s249 = sphi %s184, %s184
                $region46: #{attention_forward.4} parent=42 // loop_header_branch
                  %246 = sbr.rel (%p244) target = $region50
                $region47: #{attention_forward.4} parent=42 // loop_body
                  %v250 = vld [vmem:[%s248] sm:$0xff]
                  %251 = vst [vmem:[%s249] sm:$0xff] %v250
                  %v252 = vld [vmem:[%s248 + $0x30] sm:$0xff]
                  %253 = vst [vmem:[%s249 + $0x8] sm:$0xff] %v252
                  %v254 = vld [vmem:[%s248 + $0x60] sm:$0xff]
                  %255 = vst [vmem:[%s249 + $0x10] sm:$0xff] %v254
                  %v256 = vld [vmem:[%s248 + $0x90] sm:$0xff]
                  %257 = vst [vmem:[%s249 + $0x18] sm:$0xff] %v256
                  %v258 = vld [vmem:[%s248 + $0xc0] sm:$0xff]
                  %259 = vst [vmem:[%s249 + $0x20] sm:$0xff] %v258
                  %v260 = vld [vmem:[%s248 + $0xf0] sm:$0xff]
                  %261 = vst [vmem:[%s249 + $0x28] sm:$0xff] %v260
                  %v262 = vld [vmem:[%s248 + $0x120] sm:$0xff]
                  %263 = vst [vmem:[%s249 + $0x30] sm:$0xff] %v262
                  %v264 = vld [vmem:[%s248 + $0x150] sm:$0xff]
                  %265 = vst [vmem:[%s249 + $0x38] sm:$0xff] %v264
                  %v266 = vld [vmem:[%s248 + $0x180] sm:$0xff]
                  %267 = vst [vmem:[%s249 + $0x40] sm:$0xff] %v266
                  %v268 = vld [vmem:[%s248 + $0x1b0] sm:$0xff]
                  %269 = vst [vmem:[%s249 + $0x48] sm:$0xff] %v268
                  %v270 = vld [vmem:[%s248 + $0x1e0] sm:$0xff]
                  %271 = vst [vmem:[%s249 + $0x50] sm:$0xff] %v270
                  %v272 = vld [vmem:[%s248 + $0x210] sm:$0xff]
                  %273 = vst [vmem:[%s249 + $0x58] sm:$0xff] %v272
                  %v274 = vld [vmem:[%s248 + $0x240] sm:$0xff]
                  %275 = vst [vmem:[%s249 + $0x60] sm:$0xff] %v274
                  %v276 = vld [vmem:[%s248 + $0x270] sm:$0xff]
                  %277 = vst [vmem:[%s249 + $0x68] sm:$0xff] %v276
                  %v278 = vld [vmem:[%s248 + $0x2a0] sm:$0xff]
                  %279 = vst [vmem:[%s249 + $0x70] sm:$0xff] %v278
                  %v280 = vld [vmem:[%s248 + $0x2d0] sm:$0xff]
                  %281 = vst [vmem:[%s249 + $0x78] sm:$0xff] %v280
                $region48: #{attention_forward.4} parent=42 // loop_footer
                  %s247 = sadd.s32 1, %s243
                $region49: #{attention_forward.4} parent=42 // loop_footer_branch
                  %242 = sbr.rel target = $region45
                $region50: #{attention_forward.4} parent=42 // loop_exit
                  _
              $region43: #{attention_forward.4} parent=27 // pred_fallthru
                _
              // Predicated region
              $region51: #{attention_forward.4} parent=27 // pred_check
                _
              $region52: #{attention_forward.4} parent=27 // pred_check_branch
                %283 = sbr.rel target = $region54
              $region53: #{attention_forward.4} parent=27 // pred_region
                _
              $region54: #{attention_forward.4} parent=27 // pred_fallthru
                _
            $region28: #{attention_forward.4} parent=23 // pred_fallthru
              _
            // Predicated region
            $region29: #{attention_forward.4} parent=23 // pred_check
              _
            $region30: #{attention_forward.4} parent=23 // pred_check_branch
              %197 = sbr.rel target = $region32
            $region31: #{attention_forward.4} parent=23 // pred_region
              %s199 = ssub.s32 256, 1
              loop: start=0, step=1, limit=1
              $region33: #{attention_forward.4} parent=31 // loop_pre_header
                _
              $region34: #{attention_forward.4} parent=31 // loop_header
                %s201 = sphi 0, %s205
                %p202 = scmp.ge.s32.totalorder %s201, 1
                %s206 = sphi %s191, %s191
                %s207 = sphi %s184, %s184
              $region35: #{attention_forward.4} parent=31 // loop_header_branch
                %204 = sbr.rel (%p202) target = $region39
              $region36: #{attention_forward.4} parent=31 // loop_body
                %v208 = vld [vmem:[%s206] sm:%s199]
                %209 = vst [vmem:[%s207] sm:%s199] %v208
                %v210 = vld [vmem:[%s206 + $0x30] sm:%s199]
                %211 = vst [vmem:[%s207 + $0x8] sm:%s199] %v210
                %v212 = vld [vmem:[%s206 + $0x60] sm:%s199]
                %213 = vst [vmem:[%s207 + $0x10] sm:%s199] %v212
                %v214 = vld [vmem:[%s206 + $0x90] sm:%s199]
                %215 = vst [vmem:[%s207 + $0x18] sm:%s199] %v214
                %v216 = vld [vmem:[%s206 + $0xc0] sm:%s199]
                %217 = vst [vmem:[%s207 + $0x20] sm:%s199] %v216
                %v218 = vld [vmem:[%s206 + $0xf0] sm:%s199]
                %219 = vst [vmem:[%s207 + $0x28] sm:%s199] %v218
                %v220 = vld [vmem:[%s206 + $0x120] sm:%s199]
                %221 = vst [vmem:[%s207 + $0x30] sm:%s199] %v220
                %v222 = vld [vmem:[%s206 + $0x150] sm:%s199]
                %223 = vst [vmem:[%s207 + $0x38] sm:%s199] %v222
                %v224 = vld [vmem:[%s206 + $0x180] sm:%s199]
                %225 = vst [vmem:[%s207 + $0x40] sm:%s199] %v224
                %v226 = vld [vmem:[%s206 + $0x1b0] sm:%s199]
                %227 = vst [vmem:[%s207 + $0x48] sm:%s199] %v226
                %v228 = vld [vmem:[%s206 + $0x1e0] sm:%s199]
                %229 = vst [vmem:[%s207 + $0x50] sm:%s199] %v228
                %v230 = vld [vmem:[%s206 + $0x210] sm:%s199]
                %231 = vst [vmem:[%s207 + $0x58] sm:%s199] %v230
                %v232 = vld [vmem:[%s206 + $0x240] sm:%s199]
                %233 = vst [vmem:[%s207 + $0x60] sm:%s199] %v232
                %v234 = vld [vmem:[%s206 + $0x270] sm:%s199]
                %235 = vst [vmem:[%s207 + $0x68] sm:%s199] %v234
                %v236 = vld [vmem:[%s206 + $0x2a0] sm:%s199]
                %237 = vst [vmem:[%s207 + $0x70] sm:%s199] %v236
                %v238 = vld [vmem:[%s206 + $0x2d0] sm:%s199]
                %239 = vst [vmem:[%s207 + $0x78] sm:%s199] %v238
              $region37: #{attention_forward.4} parent=31 // loop_footer
                %s205 = sadd.s32 1, %s201
              $region38: #{attention_forward.4} parent=31 // loop_footer_branch
                %200 = sbr.rel target = $region34
              $region39: #{attention_forward.4} parent=31 // loop_exit
                _
            $region32: #{attention_forward.4} parent=23 // pred_fallthru
              _
          $region24: #{attention_forward.4} parent=19 // pred_fallthru
            _
          %284 = vnop
        $region20: #{attention_forward.4} parent=15 // pred_fallthru
          _
        // Predicated region
        $region55: #{attention_forward.4} parent=15 // pred_check
          %p285 = pneg %p91
        $region56: #{attention_forward.4} parent=15 // pred_check_branch
          %287 = sbr.rel (%p285) target = $region58
        $region57: #{attention_forward.4} parent=15 // pred_region
          %s288 = sand.u32 %s81, 1
          %s289 = sand.u32 %s81, 1
          %s290 = smul.addr %s289, 128
          %s291 = scalar_lea.vmem [#allocation6], %s290
          %s292 = sadd.s32 %s17, 2
          %s293 = smul.u32 16, %s19
          %s294 = smul.addr %s293, 6
          %s295 = sadd.s32 %s292, %s294
          %s296 = smul.addr %s16, 192
          %s297 = sadd.s32 %s295, %s296
          %s298 = smul.addr %s297, 8
          %s299 = scalar_lea.vmem %s1, %s298
          // Predicated region
          $region59: #{attention_forward.4} parent=57 // pred_check
            _
          $region60: #{attention_forward.4} parent=57 // pred_check_branch
            %301 = sbr.rel (0) target = $region62
          $region61: #{attention_forward.4} parent=57 // pred_region
            // Predicated region
            $region63: #{attention_forward.4} parent=61 // pred_check
              _
            $region64: #{attention_forward.4} parent=61 // pred_check_branch
              %303 = sbr.rel (0) target = $region66
            $region65: #{attention_forward.4} parent=61 // pred_region
              // Predicated region
              $region78: #{attention_forward.4} parent=65 // pred_check
                _
              $region79: #{attention_forward.4} parent=65 // pred_check_branch
                %349 = sbr.rel (0) target = $region81
              $region80: #{attention_forward.4} parent=65 // pred_region
                loop: start=0, step=1, limit=1
                $region82: #{attention_forward.4} parent=80 // loop_pre_header
                  _
                $region83: #{attention_forward.4} parent=80 // loop_header
                  %s351 = sphi 0, %s355
                  %p352 = scmp.ge.s32.totalorder %s351, 1
                  %s356 = sphi %s299, %s299
                  %s357 = sphi %s291, %s291
                $region84: #{attention_forward.4} parent=80 // loop_header_branch
                  %354 = sbr.rel (%p352) target = $region88
                $region85: #{attention_forward.4} parent=80 // loop_body
                  %v358 = vld [vmem:[%s356] sm:$0xff]
                  %359 = vst [vmem:[%s357] sm:$0xff] %v358
                  %v360 = vld [vmem:[%s356 + $0x30] sm:$0xff]
                  %361 = vst [vmem:[%s357 + $0x8] sm:$0xff] %v360
                  %v362 = vld [vmem:[%s356 + $0x60] sm:$0xff]
                  %363 = vst [vmem:[%s357 + $0x10] sm:$0xff] %v362
                  %v364 = vld [vmem:[%s356 + $0x90] sm:$0xff]
                  %365 = vst [vmem:[%s357 + $0x18] sm:$0xff] %v364
                  %v366 = vld [vmem:[%s356 + $0xc0] sm:$0xff]
                  %367 = vst [vmem:[%s357 + $0x20] sm:$0xff] %v366
                  %v368 = vld [vmem:[%s356 + $0xf0] sm:$0xff]
                  %369 = vst [vmem:[%s357 + $0x28] sm:$0xff] %v368
                  %v370 = vld [vmem:[%s356 + $0x120] sm:$0xff]
                  %371 = vst [vmem:[%s357 + $0x30] sm:$0xff] %v370
                  %v372 = vld [vmem:[%s356 + $0x150] sm:$0xff]
                  %373 = vst [vmem:[%s357 + $0x38] sm:$0xff] %v372
                  %v374 = vld [vmem:[%s356 + $0x180] sm:$0xff]
                  %375 = vst [vmem:[%s357 + $0x40] sm:$0xff] %v374
                  %v376 = vld [vmem:[%s356 + $0x1b0] sm:$0xff]
                  %377 = vst [vmem:[%s357 + $0x48] sm:$0xff] %v376
                  %v378 = vld [vmem:[%s356 + $0x1e0] sm:$0xff]
                  %379 = vst [vmem:[%s357 + $0x50] sm:$0xff] %v378
                  %v380 = vld [vmem:[%s356 + $0x210] sm:$0xff]
                  %381 = vst [vmem:[%s357 + $0x58] sm:$0xff] %v380
                  %v382 = vld [vmem:[%s356 + $0x240] sm:$0xff]
                  %383 = vst [vmem:[%s357 + $0x60] sm:$0xff] %v382
                  %v384 = vld [vmem:[%s356 + $0x270] sm:$0xff]
                  %385 = vst [vmem:[%s357 + $0x68] sm:$0xff] %v384
                  %v386 = vld [vmem:[%s356 + $0x2a0] sm:$0xff]
                  %387 = vst [vmem:[%s357 + $0x70] sm:$0xff] %v386
                  %v388 = vld [vmem:[%s356 + $0x2d0] sm:$0xff]
                  %389 = vst [vmem:[%s357 + $0x78] sm:$0xff] %v388
                $region86: #{attention_forward.4} parent=80 // loop_footer
                  %s355 = sadd.s32 1, %s351
                $region87: #{attention_forward.4} parent=80 // loop_footer_branch
                  %350 = sbr.rel target = $region83
                $region88: #{attention_forward.4} parent=80 // loop_exit
                  _
              $region81: #{attention_forward.4} parent=65 // pred_fallthru
                _
              // Predicated region
              $region89: #{attention_forward.4} parent=65 // pred_check
                _
              $region90: #{attention_forward.4} parent=65 // pred_check_branch
                %391 = sbr.rel target = $region92
              $region91: #{attention_forward.4} parent=65 // pred_region
                _
              $region92: #{attention_forward.4} parent=65 // pred_fallthru
                _
            $region66: #{attention_forward.4} parent=61 // pred_fallthru
              _
            // Predicated region
            $region67: #{attention_forward.4} parent=61 // pred_check
              _
            $region68: #{attention_forward.4} parent=61 // pred_check_branch
              %305 = sbr.rel target = $region70
            $region69: #{attention_forward.4} parent=61 // pred_region
              %s307 = ssub.s32 256, 1
              loop: start=0, step=1, limit=1
              $region71: #{attention_forward.4} parent=69 // loop_pre_header
                _
              $region72: #{attention_forward.4} parent=69 // loop_header
                %s309 = sphi 0, %s313
                %p310 = scmp.ge.s32.totalorder %s309, 1
                %s314 = sphi %s299, %s299
                %s315 = sphi %s291, %s291
              $region73: #{attention_forward.4} parent=69 // loop_header_branch
                %312 = sbr.rel (%p310) target = $region77
              $region74: #{attention_forward.4} parent=69 // loop_body
                %v316 = vld [vmem:[%s314] sm:%s307]
                %317 = vst [vmem:[%s315] sm:%s307] %v316
                %v318 = vld [vmem:[%s314 + $0x30] sm:%s307]
                %319 = vst [vmem:[%s315 + $0x8] sm:%s307] %v318
                %v320 = vld [vmem:[%s314 + $0x60] sm:%s307]
                %321 = vst [vmem:[%s315 + $0x10] sm:%s307] %v320
                %v322 = vld [vmem:[%s314 + $0x90] sm:%s307]
                %323 = vst [vmem:[%s315 + $0x18] sm:%s307] %v322
                %v324 = vld [vmem:[%s314 + $0xc0] sm:%s307]
                %325 = vst [vmem:[%s315 + $0x20] sm:%s307] %v324
                %v326 = vld [vmem:[%s314 + $0xf0] sm:%s307]
                %327 = vst [vmem:[%s315 + $0x28] sm:%s307] %v326
                %v328 = vld [vmem:[%s314 + $0x120] sm:%s307]
                %329 = vst [vmem:[%s315 + $0x30] sm:%s307] %v328
                %v330 = vld [vmem:[%s314 + $0x150] sm:%s307]
                %331 = vst [vmem:[%s315 + $0x38] sm:%s307] %v330
                %v332 = vld [vmem:[%s314 + $0x180] sm:%s307]
                %333 = vst [vmem:[%s315 + $0x40] sm:%s307] %v332
                %v334 = vld [vmem:[%s314 + $0x1b0] sm:%s307]
                %335 = vst [vmem:[%s315 + $0x48] sm:%s307] %v334
                %v336 = vld [vmem:[%s314 + $0x1e0] sm:%s307]
                %337 = vst [vmem:[%s315 + $0x50] sm:%s307] %v336
                %v338 = vld [vmem:[%s314 + $0x210] sm:%s307]
                %339 = vst [vmem:[%s315 + $0x58] sm:%s307] %v338
                %v340 = vld [vmem:[%s314 + $0x240] sm:%s307]
                %341 = vst [vmem:[%s315 + $0x60] sm:%s307] %v340
                %v342 = vld [vmem:[%s314 + $0x270] sm:%s307]
                %343 = vst [vmem:[%s315 + $0x68] sm:%s307] %v342
                %v344 = vld [vmem:[%s314 + $0x2a0] sm:%s307]
                %345 = vst [vmem:[%s315 + $0x70] sm:%s307] %v344
                %v346 = vld [vmem:[%s314 + $0x2d0] sm:%s307]
                %347 = vst [vmem:[%s315 + $0x78] sm:%s307] %v346
              $region75: #{attention_forward.4} parent=69 // loop_footer
                %s313 = sadd.s32 1, %s309
              $region76: #{attention_forward.4} parent=69 // loop_footer_branch
                %308 = sbr.rel target = $region72
              $region77: #{attention_forward.4} parent=69 // loop_exit
                _
            $region70: #{attention_forward.4} parent=61 // pred_fallthru
              _
          $region62: #{attention_forward.4} parent=57 // pred_fallthru
            _
          %392 = vnop
        $region58: #{attention_forward.4} parent=15 // pred_fallthru
          _
        // Predicated region
        $region93: #{attention_forward.4} parent=15 // pred_check
          %p393 = pneg %p123
        $region94: #{attention_forward.4} parent=15 // pred_check_branch
          %395 = sbr.rel (%p393) target = $region96
        $region95: #{attention_forward.4} parent=15 // pred_region
          %s396 = sand.u32 %s113, 1
          %s397 = sand.u32 %s113, 1
          %s398 = smul.addr %s397, 128
          %s399 = scalar_lea.vmem [#allocation7], %s398
          %s400 = sadd.s32 %s17, 4
          %s401 = smul.u32 16, %s19
          %s402 = smul.addr %s401, 6
          %s403 = sadd.s32 %s400, %s402
          %s404 = smul.addr %s16, 192
          %s405 = sadd.s32 %s403, %s404
          %s406 = smul.addr %s405, 8
          %s407 = scalar_lea.vmem %s2, %s406
          // Predicated region
          $region97: #{attention_forward.4} parent=95 // pred_check
            _
          $region98: #{attention_forward.4} parent=95 // pred_check_branch
            %409 = sbr.rel (0) target = $region100
          $region99: #{attention_forward.4} parent=95 // pred_region
            // Predicated region
            $region101: #{attention_forward.4} parent=99 // pred_check
              _
            $region102: #{attention_forward.4} parent=99 // pred_check_branch
              %411 = sbr.rel (0) target = $region104
            $region103: #{attention_forward.4} parent=99 // pred_region
              // Predicated region
              $region116: #{attention_forward.4} parent=103 // pred_check
                _
              $region117: #{attention_forward.4} parent=103 // pred_check_branch
                %457 = sbr.rel (0) target = $region119
              $region118: #{attention_forward.4} parent=103 // pred_region
                loop: start=0, step=1, limit=1
                $region120: #{attention_forward.4} parent=118 // loop_pre_header
                  _
                $region121: #{attention_forward.4} parent=118 // loop_header
                  %s459 = sphi 0, %s463
                  %p460 = scmp.ge.s32.totalorder %s459, 1
                  %s464 = sphi %s407, %s407
                  %s465 = sphi %s399, %s399
                $region122: #{attention_forward.4} parent=118 // loop_header_branch
                  %462 = sbr.rel (%p460) target = $region126
                $region123: #{attention_forward.4} parent=118 // loop_body
                  %v466 = vld [vmem:[%s464] sm:$0xff]
                  %467 = vst [vmem:[%s465] sm:$0xff] %v466
                  %v468 = vld [vmem:[%s464 + $0x30] sm:$0xff]
                  %469 = vst [vmem:[%s465 + $0x8] sm:$0xff] %v468
                  %v470 = vld [vmem:[%s464 + $0x60] sm:$0xff]
                  %471 = vst [vmem:[%s465 + $0x10] sm:$0xff] %v470
                  %v472 = vld [vmem:[%s464 + $0x90] sm:$0xff]
                  %473 = vst [vmem:[%s465 + $0x18] sm:$0xff] %v472
                  %v474 = vld [vmem:[%s464 + $0xc0] sm:$0xff]
                  %475 = vst [vmem:[%s465 + $0x20] sm:$0xff] %v474
                  %v476 = vld [vmem:[%s464 + $0xf0] sm:$0xff]
                  %477 = vst [vmem:[%s465 + $0x28] sm:$0xff] %v476
                  %v478 = vld [vmem:[%s464 + $0x120] sm:$0xff]
                  %479 = vst [vmem:[%s465 + $0x30] sm:$0xff] %v478
                  %v480 = vld [vmem:[%s464 + $0x150] sm:$0xff]
                  %481 = vst [vmem:[%s465 + $0x38] sm:$0xff] %v480
                  %v482 = vld [vmem:[%s464 + $0x180] sm:$0xff]
                  %483 = vst [vmem:[%s465 + $0x40] sm:$0xff] %v482
                  %v484 = vld [vmem:[%s464 + $0x1b0] sm:$0xff]
                  %485 = vst [vmem:[%s465 + $0x48] sm:$0xff] %v484
                  %v486 = vld [vmem:[%s464 + $0x1e0] sm:$0xff]
                  %487 = vst [vmem:[%s465 + $0x50] sm:$0xff] %v486
                  %v488 = vld [vmem:[%s464 + $0x210] sm:$0xff]
                  %489 = vst [vmem:[%s465 + $0x58] sm:$0xff] %v488
                  %v490 = vld [vmem:[%s464 + $0x240] sm:$0xff]
                  %491 = vst [vmem:[%s465 + $0x60] sm:$0xff] %v490
                  %v492 = vld [vmem:[%s464 + $0x270] sm:$0xff]
                  %493 = vst [vmem:[%s465 + $0x68] sm:$0xff] %v492
                  %v494 = vld [vmem:[%s464 + $0x2a0] sm:$0xff]
                  %495 = vst [vmem:[%s465 + $0x70] sm:$0xff] %v494
                  %v496 = vld [vmem:[%s464 + $0x2d0] sm:$0xff]
                  %497 = vst [vmem:[%s465 + $0x78] sm:$0xff] %v496
                $region124: #{attention_forward.4} parent=118 // loop_footer
                  %s463 = sadd.s32 1, %s459
                $region125: #{attention_forward.4} parent=118 // loop_footer_branch
                  %458 = sbr.rel target = $region121
                $region126: #{attention_forward.4} parent=118 // loop_exit
                  _
              $region119: #{attention_forward.4} parent=103 // pred_fallthru
                _
              // Predicated region
              $region127: #{attention_forward.4} parent=103 // pred_check
                _
              $region128: #{attention_forward.4} parent=103 // pred_check_branch
                %499 = sbr.rel target = $region130
              $region129: #{attention_forward.4} parent=103 // pred_region
                _
              $region130: #{attention_forward.4} parent=103 // pred_fallthru
                _
            $region104: #{attention_forward.4} parent=99 // pred_fallthru
              _
            // Predicated region
            $region105: #{attention_forward.4} parent=99 // pred_check
              _
            $region106: #{attention_forward.4} parent=99 // pred_check_branch
              %413 = sbr.rel target = $region108
            $region107: #{attention_forward.4} parent=99 // pred_region
              %s415 = ssub.s32 256, 1
              loop: start=0, step=1, limit=1
              $region109: #{attention_forward.4} parent=107 // loop_pre_header
                _
              $region110: #{attention_forward.4} parent=107 // loop_header
                %s417 = sphi 0, %s421
                %p418 = scmp.ge.s32.totalorder %s417, 1
                %s422 = sphi %s407, %s407
                %s423 = sphi %s399, %s399
              $region111: #{attention_forward.4} parent=107 // loop_header_branch
                %420 = sbr.rel (%p418) target = $region115
              $region112: #{attention_forward.4} parent=107 // loop_body
                %v424 = vld [vmem:[%s422] sm:%s415]
                %425 = vst [vmem:[%s423] sm:%s415] %v424
                %v426 = vld [vmem:[%s422 + $0x30] sm:%s415]
                %427 = vst [vmem:[%s423 + $0x8] sm:%s415] %v426
                %v428 = vld [vmem:[%s422 + $0x60] sm:%s415]
                %429 = vst [vmem:[%s423 + $0x10] sm:%s415] %v428
                %v430 = vld [vmem:[%s422 + $0x90] sm:%s415]
                %431 = vst [vmem:[%s423 + $0x18] sm:%s415] %v430
                %v432 = vld [vmem:[%s422 + $0xc0] sm:%s415]
                %433 = vst [vmem:[%s423 + $0x20] sm:%s415] %v432
                %v434 = vld [vmem:[%s422 + $0xf0] sm:%s415]
                %435 = vst [vmem:[%s423 + $0x28] sm:%s415] %v434
                %v436 = vld [vmem:[%s422 + $0x120] sm:%s415]
                %437 = vst [vmem:[%s423 + $0x30] sm:%s415] %v436
                %v438 = vld [vmem:[%s422 + $0x150] sm:%s415]
                %439 = vst [vmem:[%s423 + $0x38] sm:%s415] %v438
                %v440 = vld [vmem:[%s422 + $0x180] sm:%s415]
                %441 = vst [vmem:[%s423 + $0x40] sm:%s415] %v440
                %v442 = vld [vmem:[%s422 + $0x1b0] sm:%s415]
                %443 = vst [vmem:[%s423 + $0x48] sm:%s415] %v442
                %v444 = vld [vmem:[%s422 + $0x1e0] sm:%s415]
                %445 = vst [vmem:[%s423 + $0x50] sm:%s415] %v444
                %v446 = vld [vmem:[%s422 + $0x210] sm:%s415]
                %447 = vst [vmem:[%s423 + $0x58] sm:%s415] %v446
                %v448 = vld [vmem:[%s422 + $0x240] sm:%s415]
                %449 = vst [vmem:[%s423 + $0x60] sm:%s415] %v448
                %v450 = vld [vmem:[%s422 + $0x270] sm:%s415]
                %451 = vst [vmem:[%s423 + $0x68] sm:%s415] %v450
                %v452 = vld [vmem:[%s422 + $0x2a0] sm:%s415]
                %453 = vst [vmem:[%s423 + $0x70] sm:%s415] %v452
                %v454 = vld [vmem:[%s422 + $0x2d0] sm:%s415]
                %455 = vst [vmem:[%s423 + $0x78] sm:%s415] %v454
              $region113: #{attention_forward.4} parent=107 // loop_footer
                %s421 = sadd.s32 1, %s417
              $region114: #{attention_forward.4} parent=107 // loop_footer_branch
                %416 = sbr.rel target = $region110
              $region115: #{attention_forward.4} parent=107 // loop_exit
                _
            $region108: #{attention_forward.4} parent=99 // pred_fallthru
              _
          $region100: #{attention_forward.4} parent=95 // pred_fallthru
            _
          %500 = vnop
        $region96: #{attention_forward.4} parent=15 // pred_fallthru
          _
      $region16: #{attention_forward.4} parent=5 // pred_fallthru
        _
      %p501 = scmp.le.s32.totalorder 1, %s9
      %p502 = scmp.lt.s32.totalorder %s9, 17
      %p503 = pnand %p501, %p502
      %p504 = pneg %p503
      // Predicated region
      $region131: #{attention_forward.4} parent=5 // pred_check
        _
      $region132: #{attention_forward.4} parent=5 // pred_check_branch
        %506 = sbr.rel (%p503) target = $region134
      $region133: #{attention_forward.4} parent=5 // pred_region
        %s507 = ssub.s32 %s9, 1
        %s508 = sand.u32 %s52, 1
        %s509 = sand.u32 %s52, 1
        %s510 = smul.addr %s509, 128
        %s511 = scalar_lea.vmem [#allocation5], %s510
        // Predicated region
        $region135: #{attention_forward.4} parent=133 // pred_check
          %p512 = pneg %p65
        $region136: #{attention_forward.4} parent=133 // pred_check_branch
          %514 = sbr.rel (%p512) target = $region138
        $region137: #{attention_forward.4} parent=133 // pred_region
          _
        $region138: #{attention_forward.4} parent=133 // pred_fallthru
          _
        %s515 = sand.u32 %s84, 1
        %s516 = sand.u32 %s84, 1
        %s517 = smul.addr %s516, 128
        %s518 = scalar_lea.vmem [#allocation6], %s517
        // Predicated region
        $region139: #{attention_forward.4} parent=133 // pred_check
          %p519 = pneg %p97
        $region140: #{attention_forward.4} parent=133 // pred_check_branch
          %521 = sbr.rel (%p519) target = $region142
        $region141: #{attention_forward.4} parent=133 // pred_region
          _
        $region142: #{attention_forward.4} parent=133 // pred_fallthru
          _
        %s522 = sand.u32 %s116, 1
        %s523 = sand.u32 %s116, 1
        %s524 = smul.addr %s523, 128
        %s525 = scalar_lea.vmem [#allocation7], %s524
        // Predicated region
        $region143: #{attention_forward.4} parent=133 // pred_check
          %p526 = pneg %p129
        $region144: #{attention_forward.4} parent=133 // pred_check_branch
          %528 = sbr.rel (%p526) target = $region146
        $region145: #{attention_forward.4} parent=133 // pred_region
          _
        $region146: #{attention_forward.4} parent=133 // pred_fallthru
          _
        %s529 = sand.u32 %s52, 1
        %s530 = sand.u32 %s52, 1
        %s531 = smul.addr %s530, 128
        %s532 = scalar_lea.vmem [#allocation5], %s531
        %p533 = pneg %p65
        %p534 = pneg %p62
        %s535 = sand.u32 %s84, 1
        %s536 = sand.u32 %s84, 1
        %s537 = smul.addr %s536, 128
        %s538 = scalar_lea.vmem [#allocation6], %s537
        %p539 = pneg %p97
        %p540 = pneg %p94
        %s541 = sand.u32 %s116, 1
        %s542 = sand.u32 %s116, 1
        %s543 = smul.addr %s542, 128
        %s544 = scalar_lea.vmem [#allocation7], %s543
        %p545 = pneg %p129
        %p546 = pneg %p126
        %p547 = pneg %p159
        %p548 = pneg %p156
        %s549 = sand.u32 %s146, 1
        %s550 = sand.u32 %s146, 1
        %s551 = smul.addr %s550, 128
        %s552 = scalar_lea.vmem [#allocation8], %s551
        %s553 = smul.u32 16, %s22
        %s554 = sadd.s32 %s21, 2
        %s555 = smul.u32 16, %s23
        %s556 = sadd.s32 %s21, 4
        %s557 = smul.u32 16, %s23
        %s558 = smul.u32 16, %s22
        %p559 = scmp.eq.s32.totalorder %s23, 0
        // Predicated region
        $region147: #{attention_forward.4} parent=133 // pred_check
          %p560 = pneg %p559
        $region148: #{attention_forward.4} parent=133 // pred_check_branch
          %562 = sbr.rel (%p560) target = $region150
        $region149: #{attention_forward.4} parent=133 // pred_region
          %vm563 = vcmask 7168
          %564 = vst.msk [vmem:[#allocation2] sm:$0xff] %vm563, -inf
          %565 = vst.msk [vmem:[#allocation2 + $0x8] sm:$0xff] %vm563, -inf
          %566 = vst.msk [vmem:[#allocation2 + $0x10] sm:$0xff] %vm563, -inf
          %567 = vst.msk [vmem:[#allocation2 + $0x18] sm:$0xff] %vm563, -inf
          %568 = vst.msk [vmem:[#allocation2 + $0x20] sm:$0xff] %vm563, -inf
          %569 = vst.msk [vmem:[#allocation2 + $0x28] sm:$0xff] %vm563, -inf
          %570 = vst.msk [vmem:[#allocation2 + $0x30] sm:$0xff] %vm563, -inf
          %571 = vst.msk [vmem:[#allocation2 + $0x38] sm:$0xff] %vm563, -inf
          %572 = vst.msk [vmem:[#allocation2 + $0x40] sm:$0xff] %vm563, -inf
          %573 = vst.msk [vmem:[#allocation2 + $0x48] sm:$0xff] %vm563, -inf
          %574 = vst.msk [vmem:[#allocation2 + $0x50] sm:$0xff] %vm563, -inf
          %575 = vst.msk [vmem:[#allocation2 + $0x58] sm:$0xff] %vm563, -inf
          %576 = vst.msk [vmem:[#allocation2 + $0x60] sm:$0xff] %vm563, -inf
          %577 = vst.msk [vmem:[#allocation2 + $0x68] sm:$0xff] %vm563, -inf
          %578 = vst.msk [vmem:[#allocation2 + $0x70] sm:$0xff] %vm563, -inf
          %579 = vst.msk [vmem:[#allocation2 + $0x78] sm:$0xff] %vm563, -inf
          %580 = vst.msk [vmem:[#allocation3] sm:$0xff] %vm563, 0.0
          %581 = vst.msk [vmem:[#allocation3 + $0x8] sm:$0xff] %vm563, 0.0
          %582 = vst.msk [vmem:[#allocation3 + $0x10] sm:$0xff] %vm563, 0.0
          %583 = vst.msk [vmem:[#allocation3 + $0x18] sm:$0xff] %vm563, 0.0
          %584 = vst.msk [vmem:[#allocation3 + $0x20] sm:$0xff] %vm563, 0.0
          %585 = vst.msk [vmem:[#allocation3 + $0x28] sm:$0xff] %vm563, 0.0
          %586 = vst.msk [vmem:[#allocation3 + $0x30] sm:$0xff] %vm563, 0.0
          %587 = vst.msk [vmem:[#allocation3 + $0x38] sm:$0xff] %vm563, 0.0
          %588 = vst.msk [vmem:[#allocation3 + $0x40] sm:$0xff] %vm563, 0.0
          %589 = vst.msk [vmem:[#allocation3 + $0x48] sm:$0xff] %vm563, 0.0
          %590 = vst.msk [vmem:[#allocation3 + $0x50] sm:$0xff] %vm563, 0.0
          %591 = vst.msk [vmem:[#allocation3 + $0x58] sm:$0xff] %vm563, 0.0
          %592 = vst.msk [vmem:[#allocation3 + $0x60] sm:$0xff] %vm563, 0.0
          %593 = vst.msk [vmem:[#allocation3 + $0x68] sm:$0xff] %vm563, 0.0
          %594 = vst.msk [vmem:[#allocation3 + $0x70] sm:$0xff] %vm563, 0.0
          %595 = vst.msk [vmem:[#allocation3 + $0x78] sm:$0xff] %vm563, 0.0
          %596 = vst [vmem:[#allocation4] sm:$0xff] 0.0
          %597 = vst [vmem:[#allocation4 + $0x8] sm:$0xff] 0.0
          %598 = vst [vmem:[#allocation4 + $0x10] sm:$0xff] 0.0
          %599 = vst [vmem:[#allocation4 + $0x18] sm:$0xff] 0.0
          %600 = vst [vmem:[#allocation4 + $0x20] sm:$0xff] 0.0
          %601 = vst [vmem:[#allocation4 + $0x28] sm:$0xff] 0.0
          %602 = vst [vmem:[#allocation4 + $0x30] sm:$0xff] 0.0
          %603 = vst [vmem:[#allocation4 + $0x38] sm:$0xff] 0.0
          %604 = vst [vmem:[#allocation4 + $0x40] sm:$0xff] 0.0
          %605 = vst [vmem:[#allocation4 + $0x48] sm:$0xff] 0.0
          %606 = vst [vmem:[#allocation4 + $0x50] sm:$0xff] 0.0
          %607 = vst [vmem:[#allocation4 + $0x58] sm:$0xff] 0.0
          %608 = vst [vmem:[#allocation4 + $0x60] sm:$0xff] 0.0
          %609 = vst [vmem:[#allocation4 + $0x68] sm:$0xff] 0.0
          %610 = vst [vmem:[#allocation4 + $0x70] sm:$0xff] 0.0
          %611 = vst [vmem:[#allocation4 + $0x78] sm:$0xff] 0.0
        $region150: #{attention_forward.4} parent=133 // pred_fallthru
          _
        %v612 = vld [vmem:[%s511] sm:$0xff]
        %v613 = vld [vmem:[%s511 + $0x8] sm:$0xff]
        %v614 = vld [vmem:[%s511 + $0x10] sm:$0xff]
        %v615 = vld [vmem:[%s511 + $0x18] sm:$0xff]
        %v616 = vld [vmem:[%s511 + $0x20] sm:$0xff]
        %v617 = vld [vmem:[%s511 + $0x28] sm:$0xff]
        %v618 = vld [vmem:[%s511 + $0x30] sm:$0xff]
        %v619 = vld [vmem:[%s511 + $0x38] sm:$0xff]
        %v620 = vld [vmem:[%s511 + $0x40] sm:$0xff]
        %v621 = vld [vmem:[%s511 + $0x48] sm:$0xff]
        %v622 = vld [vmem:[%s511 + $0x50] sm:$0xff]
        %v623 = vld [vmem:[%s511 + $0x58] sm:$0xff]
        %v624 = vld [vmem:[%s511 + $0x60] sm:$0xff]
        %v625 = vld [vmem:[%s511 + $0x68] sm:$0xff]
        %v626 = vld [vmem:[%s511 + $0x70] sm:$0xff]
        %v627 = vld [vmem:[%s511 + $0x78] sm:$0xff]
        %v628 = vld [vmem:[%s518] sm:$0xff]
        %v629 = vld [vmem:[%s518 + $0x8] sm:$0xff]
        %v630 = vld [vmem:[%s518 + $0x10] sm:$0xff]
        %v631 = vld [vmem:[%s518 + $0x18] sm:$0xff]
        %v632 = vld [vmem:[%s518 + $0x20] sm:$0xff]
        %v633 = vld [vmem:[%s518 + $0x28] sm:$0xff]
        %v634 = vld [vmem:[%s518 + $0x30] sm:$0xff]
        %v635 = vld [vmem:[%s518 + $0x38] sm:$0xff]
        %v636 = vld [vmem:[%s518 + $0x40] sm:$0xff]
        %v637 = vld [vmem:[%s518 + $0x48] sm:$0xff]
        %v638 = vld [vmem:[%s518 + $0x50] sm:$0xff]
        %v639 = vld [vmem:[%s518 + $0x58] sm:$0xff]
        %v640 = vld [vmem:[%s518 + $0x60] sm:$0xff]
        %v641 = vld [vmem:[%s518 + $0x68] sm:$0xff]
        %v642 = vld [vmem:[%s518 + $0x70] sm:$0xff]
        %v643 = vld [vmem:[%s518 + $0x78] sm:$0xff]
        %v644 = vld [vmem:[%s525] sm:$0xff]
        %v645 = vld [vmem:[%s525 + $0x8] sm:$0xff]
        %v646 = vld [vmem:[%s525 + $0x10] sm:$0xff]
        %v647 = vld [vmem:[%s525 + $0x18] sm:$0xff]
        %v648 = vld [vmem:[%s525 + $0x20] sm:$0xff]
        %v649 = vld [vmem:[%s525 + $0x28] sm:$0xff]
        %v650 = vld [vmem:[%s525 + $0x30] sm:$0xff]
        %v651 = vld [vmem:[%s525 + $0x38] sm:$0xff]
        %v652 = vld [vmem:[%s525 + $0x40] sm:$0xff]
        %v653 = vld [vmem:[%s525 + $0x48] sm:$0xff]
        %v654 = vld [vmem:[%s525 + $0x50] sm:$0xff]
        %v655 = vld [vmem:[%s525 + $0x58] sm:$0xff]
        %v656 = vld [vmem:[%s525 + $0x60] sm:$0xff]
        %v657 = vld [vmem:[%s525 + $0x68] sm:$0xff]
        %v658 = vld [vmem:[%s525 + $0x70] sm:$0xff]
        %v659 = vld [vmem:[%s525 + $0x78] sm:$0xff]
        %660 = vmatpush.xpose.msra.mxu0 %v643
        %661 = vmatpush.xpose.msra.mxu0 %v642
        %662 = vmatpush.xpose.msra.mxu0 %v641
        %663 = vmatpush.xpose.msra.mxu0 %v640
        %664 = vmatpush.xpose.msra.mxu0 %v639
        %665 = vmatpush.xpose.msra.mxu0 %v638
        %666 = vmatpush.xpose.msra.mxu0 %v637
        %667 = vmatpush.xpose.msra.mxu0 %v636
        %668 = vmatpush.xpose.msra.mxu0 %v635
        %669 = vmatpush.xpose.msra.mxu0 %v634
        %670 = vmatpush.xpose.msra.mxu0 %v633
        %671 = vmatpush.xpose.msra.mxu0 %v632
        %672 = vmatpush.xpose.msra.mxu0 %v631
        %673 = vmatpush.xpose.msra.mxu0 %v630
        %674 = vmatpush.xpose.msra.mxu0 %v629
        %675 = vmatpush.xpose.msra.mxu0 %v628
        %676 = vmatmul.f32.gmra.mxu0 %v612
        %v677 = vpop.f32.mrf.mxu0
        %v678 = vadd.f32 0.0, %v677
        %679 = vmatmul.f32.gmra.mxu0 %v613
        %v680 = vpop.f32.mrf.mxu0
        %v681 = vadd.f32 0.0, %v680
        %682 = vmatmul.f32.gmra.mxu0 %v614
        %v683 = vpop.f32.mrf.mxu0
        %v684 = vadd.f32 0.0, %v683
        %685 = vmatmul.f32.gmra.mxu0 %v615
        %v686 = vpop.f32.mrf.mxu0
        %v687 = vadd.f32 0.0, %v686
        %688 = vmatmul.f32.gmra.mxu0 %v616
        %v689 = vpop.f32.mrf.mxu0
        %v690 = vadd.f32 0.0, %v689
        %691 = vmatmul.f32.gmra.mxu0 %v617
        %v692 = vpop.f32.mrf.mxu0
        %v693 = vadd.f32 0.0, %v692
        %694 = vmatmul.f32.gmra.mxu0 %v618
        %v695 = vpop.f32.mrf.mxu0
        %v696 = vadd.f32 0.0, %v695
        %697 = vmatmul.f32.gmra.mxu0 %v619
        %v698 = vpop.f32.mrf.mxu0
        %v699 = vadd.f32 0.0, %v698
        %700 = vmatmul.f32.gmra.mxu0 %v620
        %v701 = vpop.f32.mrf.mxu0
        %v702 = vadd.f32 0.0, %v701
        %703 = vmatmul.f32.gmra.mxu0 %v621
        %v704 = vpop.f32.mrf.mxu0
        %v705 = vadd.f32 0.0, %v704
        %706 = vmatmul.f32.gmra.mxu0 %v622
        %v707 = vpop.f32.mrf.mxu0
        %v708 = vadd.f32 0.0, %v707
        %709 = vmatmul.f32.gmra.mxu0 %v623
        %v710 = vpop.f32.mrf.mxu0
        %v711 = vadd.f32 0.0, %v710
        %712 = vmatmul.f32.gmra.mxu0 %v624
        %v713 = vpop.f32.mrf.mxu0
        %v714 = vadd.f32 0.0, %v713
        %715 = vmatmul.f32.gmra.mxu0 %v625
        %v716 = vpop.f32.mrf.mxu0
        %v717 = vadd.f32 0.0, %v716
        %718 = vmatmul.f32.gmra.mxu0 %v626
        %v719 = vpop.f32.mrf.mxu0
        %v720 = vadd.f32 0.0, %v719
        %721 = vmatmul.f32.gmra.mxu0 %v627
        %v722 = vpop.f32.mrf.mxu0
        %v723 = vadd.f32 0.0, %v722
        %724 = vdwg.mxu0
        %v725 = vld [vmem:[#allocation2] sm:$0xff]
        %v726 = vld [vmem:[#allocation2 + $0x8] sm:$0xff]
        %v727 = vld [vmem:[#allocation2 + $0x10] sm:$0xff]
        %v728 = vld [vmem:[#allocation2 + $0x18] sm:$0xff]
        %v729 = vld [vmem:[#allocation2 + $0x20] sm:$0xff]
        %v730 = vld [vmem:[#allocation2 + $0x28] sm:$0xff]
        %v731 = vld [vmem:[#allocation2 + $0x30] sm:$0xff]
        %v732 = vld [vmem:[#allocation2 + $0x38] sm:$0xff]
        %v733 = vld [vmem:[#allocation2 + $0x40] sm:$0xff]
        %v734 = vld [vmem:[#allocation2 + $0x48] sm:$0xff]
        %v735 = vld [vmem:[#allocation2 + $0x50] sm:$0xff]
        %v736 = vld [vmem:[#allocation2 + $0x58] sm:$0xff]
        %v737 = vld [vmem:[#allocation2 + $0x60] sm:$0xff]
        %v738 = vld [vmem:[#allocation2 + $0x68] sm:$0xff]
        %v739 = vld [vmem:[#allocation2 + $0x70] sm:$0xff]
        %v740 = vld [vmem:[#allocation2 + $0x78] sm:$0xff]
        %741 = vmax.xlane.f32.xlu0 %v678
        %v742 = vpop.xlane.xlu0 %741
        %743 = vmax.xlane.f32.xlu0 %v681
        %v744 = vpop.xlane.xlu0 %743
        %745 = vmax.xlane.f32.xlu0 %v684
        %v746 = vpop.xlane.xlu0 %745
        %747 = vmax.xlane.f32.xlu0 %v687
        %v748 = vpop.xlane.xlu0 %747
        %749 = vmax.xlane.f32.xlu0 %v690
        %v750 = vpop.xlane.xlu0 %749
        %751 = vmax.xlane.f32.xlu0 %v693
        %v752 = vpop.xlane.xlu0 %751
        %753 = vmax.xlane.f32.xlu0 %v696
        %v754 = vpop.xlane.xlu0 %753
        %755 = vmax.xlane.f32.xlu0 %v699
        %v756 = vpop.xlane.xlu0 %755
        %757 = vmax.xlane.f32.xlu0 %v702
        %v758 = vpop.xlane.xlu0 %757
        %759 = vmax.xlane.f32.xlu0 %v705
        %v760 = vpop.xlane.xlu0 %759
        %761 = vmax.xlane.f32.xlu0 %v708
        %v762 = vpop.xlane.xlu0 %761
        %763 = vmax.xlane.f32.xlu0 %v711
        %v764 = vpop.xlane.xlu0 %763
        %765 = vmax.xlane.f32.xlu0 %v714
        %v766 = vpop.xlane.xlu0 %765
        %767 = vmax.xlane.f32.xlu0 %v717
        %v768 = vpop.xlane.xlu0 %767
        %769 = vmax.xlane.f32.xlu0 %v720
        %v770 = vpop.xlane.xlu0 %769
        %771 = vmax.xlane.f32.xlu0 %v723
        %v772 = vpop.xlane.xlu0 %771
        %v773 = vmax.f32 %v725, %v742
        %v774 = vmax.f32 %v726, %v744
        %v775 = vmax.f32 %v727, %v746
        %v776 = vmax.f32 %v728, %v748
        %v777 = vmax.f32 %v729, %v750
        %v778 = vmax.f32 %v730, %v752
        %v779 = vmax.f32 %v731, %v754
        %v780 = vmax.f32 %v732, %v756
        %v781 = vmax.f32 %v733, %v758
        %v782 = vmax.f32 %v734, %v760
        %v783 = vmax.f32 %v735, %v762
        %v784 = vmax.f32 %v736, %v764
        %v785 = vmax.f32 %v737, %v766
        %v786 = vmax.f32 %v738, %v768
        %v787 = vmax.f32 %v739, %v770
        %v788 = vmax.f32 %v740, %v772
        %v789 = vsub.f32 %v725, %v773
        %v790 = vsub.f32 %v726, %v774
        %v791 = vsub.f32 %v727, %v775
        %v792 = vsub.f32 %v728, %v776
        %v793 = vsub.f32 %v729, %v777
        %v794 = vsub.f32 %v730, %v778
        %v795 = vsub.f32 %v731, %v779
        %v796 = vsub.f32 %v732, %v780
        %v797 = vsub.f32 %v733, %v781
        %v798 = vsub.f32 %v734, %v782
        %v799 = vsub.f32 %v735, %v783
        %v800 = vsub.f32 %v736, %v784
        %v801 = vsub.f32 %v737, %v785
        %v802 = vsub.f32 %v738, %v786
        %v803 = vsub.f32 %v739, %v787
        %v804 = vsub.f32 %v740, %v788
        %v805 = vmul.f32 %v789, 1.442695
        %v806 = vpow.pop %v805
        %v807 = vmul.f32 %v790, 1.442695
        %v808 = vpow.pop %v807
        %v809 = vmul.f32 %v791, 1.442695
        %v810 = vpow.pop %v809
        %v811 = vmul.f32 %v792, 1.442695
        %v812 = vpow.pop %v811
        %v813 = vmul.f32 %v793, 1.442695
        %v814 = vpow.pop %v813
        %v815 = vmul.f32 %v794, 1.442695
        %v816 = vpow.pop %v815
        %v817 = vmul.f32 %v795, 1.442695
        %v818 = vpow.pop %v817
        %v819 = vmul.f32 %v796, 1.442695
        %v820 = vpow.pop %v819
        %v821 = vmul.f32 %v797, 1.442695
        %v822 = vpow.pop %v821
        %v823 = vmul.f32 %v798, 1.442695
        %v824 = vpow.pop %v823
        %v825 = vmul.f32 %v799, 1.442695
        %v826 = vpow.pop %v825
        %v827 = vmul.f32 %v800, 1.442695
        %v828 = vpow.pop %v827
        %v829 = vmul.f32 %v801, 1.442695
        %v830 = vpow.pop %v829
        %v831 = vmul.f32 %v802, 1.442695
        %v832 = vpow.pop %v831
        %v833 = vmul.f32 %v803, 1.442695
        %v834 = vpow.pop %v833
        %v835 = vmul.f32 %v804, 1.442695
        %v836 = vpow.pop %v835
        %838 = vset.pattern.permute.xlu0 0
        %839 = vperm.xlu0 %838, %v773
        %v840 = vpop.permute.xlu0 %839
        %843 = vset.pattern.permute.xlu0 0
        %844 = vperm.xlu0 %843, %v774
        %v845 = vpop.permute.xlu0 %844
        %848 = vset.pattern.permute.xlu0 0
        %849 = vperm.xlu0 %848, %v775
        %v850 = vpop.permute.xlu0 %849
        %853 = vset.pattern.permute.xlu0 0
        %854 = vperm.xlu0 %853, %v776
        %v855 = vpop.permute.xlu0 %854
        %858 = vset.pattern.permute.xlu0 0
        %859 = vperm.xlu0 %858, %v777
        %v860 = vpop.permute.xlu0 %859
        %863 = vset.pattern.permute.xlu0 0
        %864 = vperm.xlu0 %863, %v778
        %v865 = vpop.permute.xlu0 %864
        %868 = vset.pattern.permute.xlu0 0
        %869 = vperm.xlu0 %868, %v779
        %v870 = vpop.permute.xlu0 %869
        %873 = vset.pattern.permute.xlu0 0
        %874 = vperm.xlu0 %873, %v780
        %v875 = vpop.permute.xlu0 %874
        %878 = vset.pattern.permute.xlu0 0
        %879 = vperm.xlu0 %878, %v781
        %v880 = vpop.permute.xlu0 %879
        %883 = vset.pattern.permute.xlu0 0
        %884 = vperm.xlu0 %883, %v782
        %v885 = vpop.permute.xlu0 %884
        %888 = vset.pattern.permute.xlu0 0
        %889 = vperm.xlu0 %888, %v783
        %v890 = vpop.permute.xlu0 %889
        %893 = vset.pattern.permute.xlu0 0
        %894 = vperm.xlu0 %893, %v784
        %v895 = vpop.permute.xlu0 %894
        %898 = vset.pattern.permute.xlu0 0
        %899 = vperm.xlu0 %898, %v785
        %v900 = vpop.permute.xlu0 %899
        %903 = vset.pattern.permute.xlu0 0
        %904 = vperm.xlu0 %903, %v786
        %v905 = vpop.permute.xlu0 %904
        %908 = vset.pattern.permute.xlu0 0
        %909 = vperm.xlu0 %908, %v787
        %v910 = vpop.permute.xlu0 %909
        %913 = vset.pattern.permute.xlu0 0
        %914 = vperm.xlu0 %913, %v788
        %v915 = vpop.permute.xlu0 %914
        %v917 = vsub.f32 %v678, %v840
        %v918 = vsub.f32 %v681, %v845
        %v919 = vsub.f32 %v684, %v850
        %v920 = vsub.f32 %v687, %v855
        %v921 = vsub.f32 %v690, %v860
        %v922 = vsub.f32 %v693, %v865
        %v923 = vsub.f32 %v696, %v870
        %v924 = vsub.f32 %v699, %v875
        %v925 = vsub.f32 %v702, %v880
        %v926 = vsub.f32 %v705, %v885
        %v927 = vsub.f32 %v708, %v890
        %v928 = vsub.f32 %v711, %v895
        %v929 = vsub.f32 %v714, %v900
        %v930 = vsub.f32 %v717, %v905
        %v931 = vsub.f32 %v720, %v910
        %v932 = vsub.f32 %v723, %v915
        %v933 = vmul.f32 %v917, 1.442695
        %v934 = vpow.pop %v933
        %v935 = vmul.f32 %v918, 1.442695
        %v936 = vpow.pop %v935
        %v937 = vmul.f32 %v919, 1.442695
        %v938 = vpow.pop %v937
        %v939 = vmul.f32 %v920, 1.442695
        %v940 = vpow.pop %v939
        %v941 = vmul.f32 %v921, 1.442695
        %v942 = vpow.pop %v941
        %v943 = vmul.f32 %v922, 1.442695
        %v944 = vpow.pop %v943
        %v945 = vmul.f32 %v923, 1.442695
        %v946 = vpow.pop %v945
        %v947 = vmul.f32 %v924, 1.442695
        %v948 = vpow.pop %v947
        %v949 = vmul.f32 %v925, 1.442695
        %v950 = vpow.pop %v949
        %v951 = vmul.f32 %v926, 1.442695
        %v952 = vpow.pop %v951
        %v953 = vmul.f32 %v927, 1.442695
        %v954 = vpow.pop %v953
        %v955 = vmul.f32 %v928, 1.442695
        %v956 = vpow.pop %v955
        %v957 = vmul.f32 %v929, 1.442695
        %v958 = vpow.pop %v957
        %v959 = vmul.f32 %v930, 1.442695
        %v960 = vpow.pop %v959
        %v961 = vmul.f32 %v931, 1.442695
        %v962 = vpow.pop %v961
        %v963 = vmul.f32 %v932, 1.442695
        %v964 = vpow.pop %v963
        %v965 = vld [vmem:[#allocation3] sm:$0xff]
        %v966 = vld [vmem:[#allocation3 + $0x8] sm:$0xff]
        %v967 = vld [vmem:[#allocation3 + $0x10] sm:$0xff]
        %v968 = vld [vmem:[#allocation3 + $0x18] sm:$0xff]
        %v969 = vld [vmem:[#allocation3 + $0x20] sm:$0xff]
        %v970 = vld [vmem:[#allocation3 + $0x28] sm:$0xff]
        %v971 = vld [vmem:[#allocation3 + $0x30] sm:$0xff]
        %v972 = vld [vmem:[#allocation3 + $0x38] sm:$0xff]
        %v973 = vld [vmem:[#allocation3 + $0x40] sm:$0xff]
        %v974 = vld [vmem:[#allocation3 + $0x48] sm:$0xff]
        %v975 = vld [vmem:[#allocation3 + $0x50] sm:$0xff]
        %v976 = vld [vmem:[#allocation3 + $0x58] sm:$0xff]
        %v977 = vld [vmem:[#allocation3 + $0x60] sm:$0xff]
        %v978 = vld [vmem:[#allocation3 + $0x68] sm:$0xff]
        %v979 = vld [vmem:[#allocation3 + $0x70] sm:$0xff]
        %v980 = vld [vmem:[#allocation3 + $0x78] sm:$0xff]
        %v981 = vmul.f32 %v806, %v965
        %v982 = vmul.f32 %v808, %v966
        %v983 = vmul.f32 %v810, %v967
        %v984 = vmul.f32 %v812, %v968
        %v985 = vmul.f32 %v814, %v969
        %v986 = vmul.f32 %v816, %v970
        %v987 = vmul.f32 %v818, %v971
        %v988 = vmul.f32 %v820, %v972
        %v989 = vmul.f32 %v822, %v973
        %v990 = vmul.f32 %v824, %v974
        %v991 = vmul.f32 %v826, %v975
        %v992 = vmul.f32 %v828, %v976
        %v993 = vmul.f32 %v830, %v977
        %v994 = vmul.f32 %v832, %v978
        %v995 = vmul.f32 %v834, %v979
        %v996 = vmul.f32 %v836, %v980
        %997 = vadd.xlane.f32.xlu0 %v934
        %v998 = vpop.xlane.xlu0 %997
        %999 = vadd.xlane.f32.xlu0 %v936
        %v1000 = vpop.xlane.xlu0 %999
        %1001 = vadd.xlane.f32.xlu0 %v938
        %v1002 = vpop.xlane.xlu0 %1001
        %1003 = vadd.xlane.f32.xlu0 %v940
        %v1004 = vpop.xlane.xlu0 %1003
        %1005 = vadd.xlane.f32.xlu0 %v942
        %v1006 = vpop.xlane.xlu0 %1005
        %1007 = vadd.xlane.f32.xlu0 %v944
        %v1008 = vpop.xlane.xlu0 %1007
        %1009 = vadd.xlane.f32.xlu0 %v946
        %v1010 = vpop.xlane.xlu0 %1009
        %1011 = vadd.xlane.f32.xlu0 %v948
        %v1012 = vpop.xlane.xlu0 %1011
        %1013 = vadd.xlane.f32.xlu0 %v950
        %v1014 = vpop.xlane.xlu0 %1013
        %1015 = vadd.xlane.f32.xlu0 %v952
        %v1016 = vpop.xlane.xlu0 %1015
        %1017 = vadd.xlane.f32.xlu0 %v954
        %v1018 = vpop.xlane.xlu0 %1017
        %1019 = vadd.xlane.f32.xlu0 %v956
        %v1020 = vpop.xlane.xlu0 %1019
        %1021 = vadd.xlane.f32.xlu0 %v958
        %v1022 = vpop.xlane.xlu0 %1021
        %1023 = vadd.xlane.f32.xlu0 %v960
        %v1024 = vpop.xlane.xlu0 %1023
        %1025 = vadd.xlane.f32.xlu0 %v962
        %v1026 = vpop.xlane.xlu0 %1025
        %1027 = vadd.xlane.f32.xlu0 %v964
        %v1028 = vpop.xlane.xlu0 %1027
        %v1029 = vadd.f32 %v981, %v998
        %v1030 = vadd.f32 %v982, %v1000
        %v1031 = vadd.f32 %v983, %v1002
        %v1032 = vadd.f32 %v984, %v1004
        %v1033 = vadd.f32 %v985, %v1006
        %v1034 = vadd.f32 %v986, %v1008
        %v1035 = vadd.f32 %v987, %v1010
        %v1036 = vadd.f32 %v988, %v1012
        %v1037 = vadd.f32 %v989, %v1014
        %v1038 = vadd.f32 %v990, %v1016
        %v1039 = vadd.f32 %v991, %v1018
        %v1040 = vadd.f32 %v992, %v1020
        %v1041 = vadd.f32 %v993, %v1022
        %v1042 = vadd.f32 %v994, %v1024
        %v1043 = vadd.f32 %v995, %v1026
        %v1044 = vadd.f32 %v996, %v1028
        %vm1045 = vcmask 7168
        %1046 = vst.msk [vmem:[#allocation3] sm:$0xff] %vm1045, %v1029
        %1047 = vst.msk [vmem:[#allocation3 + $0x8] sm:$0xff] %vm1045, %v1030
        %1048 = vst.msk [vmem:[#allocation3 + $0x10] sm:$0xff] %vm1045, %v1031
        %1049 = vst.msk [vmem:[#allocation3 + $0x18] sm:$0xff] %vm1045, %v1032
        %1050 = vst.msk [vmem:[#allocation3 + $0x20] sm:$0xff] %vm1045, %v1033
        %1051 = vst.msk [vmem:[#allocation3 + $0x28] sm:$0xff] %vm1045, %v1034
        %1052 = vst.msk [vmem:[#allocation3 + $0x30] sm:$0xff] %vm1045, %v1035
        %1053 = vst.msk [vmem:[#allocation3 + $0x38] sm:$0xff] %vm1045, %v1036
        %1054 = vst.msk [vmem:[#allocation3 + $0x40] sm:$0xff] %vm1045, %v1037
        %1055 = vst.msk [vmem:[#allocation3 + $0x48] sm:$0xff] %vm1045, %v1038
        %1056 = vst.msk [vmem:[#allocation3 + $0x50] sm:$0xff] %vm1045, %v1039
        %1057 = vst.msk [vmem:[#allocation3 + $0x58] sm:$0xff] %vm1045, %v1040
        %1058 = vst.msk [vmem:[#allocation3 + $0x60] sm:$0xff] %vm1045, %v1041
        %1059 = vst.msk [vmem:[#allocation3 + $0x68] sm:$0xff] %vm1045, %v1042
        %1060 = vst.msk [vmem:[#allocation3 + $0x70] sm:$0xff] %vm1045, %v1043
        %1061 = vst.msk [vmem:[#allocation3 + $0x78] sm:$0xff] %vm1045, %v1044
        %v1062 = vld [vmem:[#allocation4] sm:$0xff]
        %v1063 = vld [vmem:[#allocation4 + $0x8] sm:$0xff]
        %v1064 = vld [vmem:[#allocation4 + $0x10] sm:$0xff]
        %v1065 = vld [vmem:[#allocation4 + $0x18] sm:$0xff]
        %v1066 = vld [vmem:[#allocation4 + $0x20] sm:$0xff]
        %v1067 = vld [vmem:[#allocation4 + $0x28] sm:$0xff]
        %v1068 = vld [vmem:[#allocation4 + $0x30] sm:$0xff]
        %v1069 = vld [vmem:[#allocation4 + $0x38] sm:$0xff]
        %v1070 = vld [vmem:[#allocation4 + $0x40] sm:$0xff]
        %v1071 = vld [vmem:[#allocation4 + $0x48] sm:$0xff]
        %v1072 = vld [vmem:[#allocation4 + $0x50] sm:$0xff]
        %v1073 = vld [vmem:[#allocation4 + $0x58] sm:$0xff]
        %v1074 = vld [vmem:[#allocation4 + $0x60] sm:$0xff]
        %v1075 = vld [vmem:[#allocation4 + $0x68] sm:$0xff]
        %v1076 = vld [vmem:[#allocation4 + $0x70] sm:$0xff]
        %v1077 = vld [vmem:[#allocation4 + $0x78] sm:$0xff]
        %1079 = vset.pattern.permute.xlu0 0
        %1080 = vperm.xlu0 %1079, %v806
        %v1081 = vpop.permute.xlu0 %1080
        %1084 = vset.pattern.permute.xlu0 0
        %1085 = vperm.xlu0 %1084, %v808
        %v1086 = vpop.permute.xlu0 %1085
        %1089 = vset.pattern.permute.xlu0 0
        %1090 = vperm.xlu0 %1089, %v810
        %v1091 = vpop.permute.xlu0 %1090
        %1094 = vset.pattern.permute.xlu0 0
        %1095 = vperm.xlu0 %1094, %v812
        %v1096 = vpop.permute.xlu0 %1095
        %1099 = vset.pattern.permute.xlu0 0
        %1100 = vperm.xlu0 %1099, %v814
        %v1101 = vpop.permute.xlu0 %1100
        %1104 = vset.pattern.permute.xlu0 0
        %1105 = vperm.xlu0 %1104, %v816
        %v1106 = vpop.permute.xlu0 %1105
        %1109 = vset.pattern.permute.xlu0 0
        %1110 = vperm.xlu0 %1109, %v818
        %v1111 = vpop.permute.xlu0 %1110
        %1114 = vset.pattern.permute.xlu0 0
        %1115 = vperm.xlu0 %1114, %v820
        %v1116 = vpop.permute.xlu0 %1115
        %1119 = vset.pattern.permute.xlu0 0
        %1120 = vperm.xlu0 %1119, %v822
        %v1121 = vpop.permute.xlu0 %1120
        %1124 = vset.pattern.permute.xlu0 0
        %1125 = vperm.xlu0 %1124, %v824
        %v1126 = vpop.permute.xlu0 %1125
        %1129 = vset.pattern.permute.xlu0 0
        %1130 = vperm.xlu0 %1129, %v826
        %v1131 = vpop.permute.xlu0 %1130
        %1134 = vset.pattern.permute.xlu0 0
        %1135 = vperm.xlu0 %1134, %v828
        %v1136 = vpop.permute.xlu0 %1135
        %1139 = vset.pattern.permute.xlu0 0
        %1140 = vperm.xlu0 %1139, %v830
        %v1141 = vpop.permute.xlu0 %1140
        %1144 = vset.pattern.permute.xlu0 0
        %1145 = vperm.xlu0 %1144, %v832
        %v1146 = vpop.permute.xlu0 %1145
        %1149 = vset.pattern.permute.xlu0 0
        %1150 = vperm.xlu0 %1149, %v834
        %v1151 = vpop.permute.xlu0 %1150
        %1154 = vset.pattern.permute.xlu0 0
        %1155 = vperm.xlu0 %1154, %v836
        %v1156 = vpop.permute.xlu0 %1155
        %v1158 = vmul.f32 %v1081, %v1062
        %v1159 = vmul.f32 %v1086, %v1063
        %v1160 = vmul.f32 %v1091, %v1064
        %v1161 = vmul.f32 %v1096, %v1065
        %v1162 = vmul.f32 %v1101, %v1066
        %v1163 = vmul.f32 %v1106, %v1067
        %v1164 = vmul.f32 %v1111, %v1068
        %v1165 = vmul.f32 %v1116, %v1069
        %v1166 = vmul.f32 %v1121, %v1070
        %v1167 = vmul.f32 %v1126, %v1071
        %v1168 = vmul.f32 %v1131, %v1072
        %v1169 = vmul.f32 %v1136, %v1073
        %v1170 = vmul.f32 %v1141, %v1074
        %v1171 = vmul.f32 %v1146, %v1075
        %v1172 = vmul.f32 %v1151, %v1076
        %v1173 = vmul.f32 %v1156, %v1077
        %1174 = vmatpush.msra.mxu0 %v659
        %1175 = vmatpush.msra.mxu0 %v658
        %1176 = vmatpush.msra.mxu0 %v657
        %1177 = vmatpush.msra.mxu0 %v656
        %1178 = vmatpush.msra.mxu0 %v655
        %1179 = vmatpush.msra.mxu0 %v654
        %1180 = vmatpush.msra.mxu0 %v653
        %1181 = vmatpush.msra.mxu0 %v652
        %1182 = vmatpush.msra.mxu0 %v651
        %1183 = vmatpush.msra.mxu0 %v650
        %1184 = vmatpush.msra.mxu0 %v649
        %1185 = vmatpush.msra.mxu0 %v648
        %1186 = vmatpush.msra.mxu0 %v647
        %1187 = vmatpush.msra.mxu0 %v646
        %1188 = vmatpush.msra.mxu0 %v645
        %1189 = vmatpush.msra.mxu0 %v644
        %1190 = vmatmul.f32.gmra.mxu0 %v934
        %v1191 = vpop.f32.mrf.mxu0
        %v1192 = vadd.f32 0.0, %v1191
        %1193 = vmatmul.f32.gmra.mxu0 %v936
        %v1194 = vpop.f32.mrf.mxu0
        %v1195 = vadd.f32 0.0, %v1194
        %1196 = vmatmul.f32.gmra.mxu0 %v938
        %v1197 = vpop.f32.mrf.mxu0
        %v1198 = vadd.f32 0.0, %v1197
        %1199 = vmatmul.f32.gmra.mxu0 %v940
        %v1200 = vpop.f32.mrf.mxu0
        %v1201 = vadd.f32 0.0, %v1200
        %1202 = vmatmul.f32.gmra.mxu0 %v942
        %v1203 = vpop.f32.mrf.mxu0
        %v1204 = vadd.f32 0.0, %v1203
        %1205 = vmatmul.f32.gmra.mxu0 %v944
        %v1206 = vpop.f32.mrf.mxu0
        %v1207 = vadd.f32 0.0, %v1206
        %1208 = vmatmul.f32.gmra.mxu0 %v946
        %v1209 = vpop.f32.mrf.mxu0
        %v1210 = vadd.f32 0.0, %v1209
        %1211 = vmatmul.f32.gmra.mxu0 %v948
        %v1212 = vpop.f32.mrf.mxu0
        %v1213 = vadd.f32 0.0, %v1212
        %1214 = vmatmul.f32.gmra.mxu0 %v950
        %v1215 = vpop.f32.mrf.mxu0
        %v1216 = vadd.f32 0.0, %v1215
        %1217 = vmatmul.f32.gmra.mxu0 %v952
        %v1218 = vpop.f32.mrf.mxu0
        %v1219 = vadd.f32 0.0, %v1218
        %1220 = vmatmul.f32.gmra.mxu0 %v954
        %v1221 = vpop.f32.mrf.mxu0
        %v1222 = vadd.f32 0.0, %v1221
        %1223 = vmatmul.f32.gmra.mxu0 %v956
        %v1224 = vpop.f32.mrf.mxu0
        %v1225 = vadd.f32 0.0, %v1224
        %1226 = vmatmul.f32.gmra.mxu0 %v958
        %v1227 = vpop.f32.mrf.mxu0
        %v1228 = vadd.f32 0.0, %v1227
        %1229 = vmatmul.f32.gmra.mxu0 %v960
        %v1230 = vpop.f32.mrf.mxu0
        %v1231 = vadd.f32 0.0, %v1230
        %1232 = vmatmul.f32.gmra.mxu0 %v962
        %v1233 = vpop.f32.mrf.mxu0
        %v1234 = vadd.f32 0.0, %v1233
        %1235 = vmatmul.f32.gmra.mxu0 %v964
        %v1236 = vpop.f32.mrf.mxu0
        %v1237 = vadd.f32 0.0, %v1236
        %1238 = vdwg.mxu0
        %v1239 = vadd.f32 %v1158, %v1192
        %v1240 = vadd.f32 %v1159, %v1195
        %v1241 = vadd.f32 %v1160, %v1198
        %v1242 = vadd.f32 %v1161, %v1201
        %v1243 = vadd.f32 %v1162, %v1204
        %v1244 = vadd.f32 %v1163, %v1207
        %v1245 = vadd.f32 %v1164, %v1210
        %v1246 = vadd.f32 %v1165, %v1213
        %v1247 = vadd.f32 %v1166, %v1216
        %v1248 = vadd.f32 %v1167, %v1219
        %v1249 = vadd.f32 %v1168, %v1222
        %v1250 = vadd.f32 %v1169, %v1225
        %v1251 = vadd.f32 %v1170, %v1228
        %v1252 = vadd.f32 %v1171, %v1231
        %v1253 = vadd.f32 %v1172, %v1234
        %v1254 = vadd.f32 %v1173, %v1237
        %1255 = vst [vmem:[#allocation4] sm:$0xff] %v1239
        %1256 = vst [vmem:[#allocation4 + $0x8] sm:$0xff] %v1240
        %1257 = vst [vmem:[#allocation4 + $0x10] sm:$0xff] %v1241
        %1258 = vst [vmem:[#allocation4 + $0x18] sm:$0xff] %v1242
        %1259 = vst [vmem:[#allocation4 + $0x20] sm:$0xff] %v1243
        %1260 = vst [vmem:[#allocation4 + $0x28] sm:$0xff] %v1244
        %1261 = vst [vmem:[#allocation4 + $0x30] sm:$0xff] %v1245
        %1262 = vst [vmem:[#allocation4 + $0x38] sm:$0xff] %v1246
        %1263 = vst [vmem:[#allocation4 + $0x40] sm:$0xff] %v1247
        %1264 = vst [vmem:[#allocation4 + $0x48] sm:$0xff] %v1248
        %1265 = vst [vmem:[#allocation4 + $0x50] sm:$0xff] %v1249
        %1266 = vst [vmem:[#allocation4 + $0x58] sm:$0xff] %v1250
        %1267 = vst [vmem:[#allocation4 + $0x60] sm:$0xff] %v1251
        %1268 = vst [vmem:[#allocation4 + $0x68] sm:$0xff] %v1252
        %1269 = vst [vmem:[#allocation4 + $0x70] sm:$0xff] %v1253
        %1270 = vst [vmem:[#allocation4 + $0x78] sm:$0xff] %v1254
        %1271 = vst.msk [vmem:[#allocation2] sm:$0xff] %vm1045, %v773
        %1272 = vst.msk [vmem:[#allocation2 + $0x8] sm:$0xff] %vm1045, %v774
        %1273 = vst.msk [vmem:[#allocation2 + $0x10] sm:$0xff] %vm1045, %v775
        %1274 = vst.msk [vmem:[#allocation2 + $0x18] sm:$0xff] %vm1045, %v776
        %1275 = vst.msk [vmem:[#allocation2 + $0x20] sm:$0xff] %vm1045, %v777
        %1276 = vst.msk [vmem:[#allocation2 + $0x28] sm:$0xff] %vm1045, %v778
        %1277 = vst.msk [vmem:[#allocation2 + $0x30] sm:$0xff] %vm1045, %v779
        %1278 = vst.msk [vmem:[#allocation2 + $0x38] sm:$0xff] %vm1045, %v780
        %1279 = vst.msk [vmem:[#allocation2 + $0x40] sm:$0xff] %vm1045, %v781
        %1280 = vst.msk [vmem:[#allocation2 + $0x48] sm:$0xff] %vm1045, %v782
        %1281 = vst.msk [vmem:[#allocation2 + $0x50] sm:$0xff] %vm1045, %v783
        %1282 = vst.msk [vmem:[#allocation2 + $0x58] sm:$0xff] %vm1045, %v784
        %1283 = vst.msk [vmem:[#allocation2 + $0x60] sm:$0xff] %vm1045, %v785
        %1284 = vst.msk [vmem:[#allocation2 + $0x68] sm:$0xff] %vm1045, %v786
        %1285 = vst.msk [vmem:[#allocation2 + $0x70] sm:$0xff] %vm1045, %v787
        %1286 = vst.msk [vmem:[#allocation2 + $0x78] sm:$0xff] %vm1045, %v788
        %p1287 = scmp.eq.s32.totalorder %s23, 1
        // Predicated region
        $region151: #{attention_forward.4} parent=133 // pred_check
          %p1288 = pneg %p1287
        $region152: #{attention_forward.4} parent=133 // pred_check_branch
          %1290 = sbr.rel (%p1288) target = $region154
        $region153: #{attention_forward.4} parent=133 // pred_region
          %v1291 = vld [vmem:[#allocation3] sm:$0xff]
          %v1292 = vld [vmem:[#allocation3 + $0x8] sm:$0xff]
          %v1293 = vld [vmem:[#allocation3 + $0x10] sm:$0xff]
          %v1294 = vld [vmem:[#allocation3 + $0x18] sm:$0xff]
          %v1295 = vld [vmem:[#allocation3 + $0x20] sm:$0xff]
          %v1296 = vld [vmem:[#allocation3 + $0x28] sm:$0xff]
          %v1297 = vld [vmem:[#allocation3 + $0x30] sm:$0xff]
          %v1298 = vld [vmem:[#allocation3 + $0x38] sm:$0xff]
          %v1299 = vld [vmem:[#allocation3 + $0x40] sm:$0xff]
          %v1300 = vld [vmem:[#allocation3 + $0x48] sm:$0xff]
          %v1301 = vld [vmem:[#allocation3 + $0x50] sm:$0xff]
          %v1302 = vld [vmem:[#allocation3 + $0x58] sm:$0xff]
          %v1303 = vld [vmem:[#allocation3 + $0x60] sm:$0xff]
          %v1304 = vld [vmem:[#allocation3 + $0x68] sm:$0xff]
          %v1305 = vld [vmem:[#allocation3 + $0x70] sm:$0xff]
          %v1306 = vld [vmem:[#allocation3 + $0x78] sm:$0xff]
          %v1307 = vrcp.pop %v1291
          %v1308 = vrcp.pop %v1292
          %v1309 = vrcp.pop %v1293
          %v1310 = vrcp.pop %v1294
          %v1311 = vrcp.pop %v1295
          %v1312 = vrcp.pop %v1296
          %v1313 = vrcp.pop %v1297
          %v1314 = vrcp.pop %v1298
          %v1315 = vrcp.pop %v1299
          %v1316 = vrcp.pop %v1300
          %v1317 = vrcp.pop %v1301
          %v1318 = vrcp.pop %v1302
          %v1319 = vrcp.pop %v1303
          %v1320 = vrcp.pop %v1304
          %v1321 = vrcp.pop %v1305
          %v1322 = vrcp.pop %v1306
          %v1323 = vld [vmem:[#allocation4] sm:$0xff]
          %v1324 = vld [vmem:[#allocation4 + $0x8] sm:$0xff]
          %v1325 = vld [vmem:[#allocation4 + $0x10] sm:$0xff]
          %v1326 = vld [vmem:[#allocation4 + $0x18] sm:$0xff]
          %v1327 = vld [vmem:[#allocation4 + $0x20] sm:$0xff]
          %v1328 = vld [vmem:[#allocation4 + $0x28] sm:$0xff]
          %v1329 = vld [vmem:[#allocation4 + $0x30] sm:$0xff]
          %v1330 = vld [vmem:[#allocation4 + $0x38] sm:$0xff]
          %v1331 = vld [vmem:[#allocation4 + $0x40] sm:$0xff]
          %v1332 = vld [vmem:[#allocation4 + $0x48] sm:$0xff]
          %v1333 = vld [vmem:[#allocation4 + $0x50] sm:$0xff]
          %v1334 = vld [vmem:[#allocation4 + $0x58] sm:$0xff]
          %v1335 = vld [vmem:[#allocation4 + $0x60] sm:$0xff]
          %v1336 = vld [vmem:[#allocation4 + $0x68] sm:$0xff]
          %v1337 = vld [vmem:[#allocation4 + $0x70] sm:$0xff]
          %v1338 = vld [vmem:[#allocation4 + $0x78] sm:$0xff]
          %1340 = vset.pattern.permute.xlu0 0
          %1341 = vperm.xlu0 %1340, %v1307
          %v1342 = vpop.permute.xlu0 %1341
          %1345 = vset.pattern.permute.xlu0 0
          %1346 = vperm.xlu0 %1345, %v1308
          %v1347 = vpop.permute.xlu0 %1346
          %1350 = vset.pattern.permute.xlu0 0
          %1351 = vperm.xlu0 %1350, %v1309
          %v1352 = vpop.permute.xlu0 %1351
          %1355 = vset.pattern.permute.xlu0 0
          %1356 = vperm.xlu0 %1355, %v1310
          %v1357 = vpop.permute.xlu0 %1356
          %1360 = vset.pattern.permute.xlu0 0
          %1361 = vperm.xlu0 %1360, %v1311
          %v1362 = vpop.permute.xlu0 %1361
          %1365 = vset.pattern.permute.xlu0 0
          %1366 = vperm.xlu0 %1365, %v1312
          %v1367 = vpop.permute.xlu0 %1366
          %1370 = vset.pattern.permute.xlu0 0
          %1371 = vperm.xlu0 %1370, %v1313
          %v1372 = vpop.permute.xlu0 %1371
          %1375 = vset.pattern.permute.xlu0 0
          %1376 = vperm.xlu0 %1375, %v1314
          %v1377 = vpop.permute.xlu0 %1376
          %1380 = vset.pattern.permute.xlu0 0
          %1381 = vperm.xlu0 %1380, %v1315
          %v1382 = vpop.permute.xlu0 %1381
          %1385 = vset.pattern.permute.xlu0 0
          %1386 = vperm.xlu0 %1385, %v1316
          %v1387 = vpop.permute.xlu0 %1386
          %1390 = vset.pattern.permute.xlu0 0
          %1391 = vperm.xlu0 %1390, %v1317
          %v1392 = vpop.permute.xlu0 %1391
          %1395 = vset.pattern.permute.xlu0 0
          %1396 = vperm.xlu0 %1395, %v1318
          %v1397 = vpop.permute.xlu0 %1396
          %1400 = vset.pattern.permute.xlu0 0
          %1401 = vperm.xlu0 %1400, %v1319
          %v1402 = vpop.permute.xlu0 %1401
          %1405 = vset.pattern.permute.xlu0 0
          %1406 = vperm.xlu0 %1405, %v1320
          %v1407 = vpop.permute.xlu0 %1406
          %1410 = vset.pattern.permute.xlu0 0
          %1411 = vperm.xlu0 %1410, %v1321
          %v1412 = vpop.permute.xlu0 %1411
          %1415 = vset.pattern.permute.xlu0 0
          %1416 = vperm.xlu0 %1415, %v1322
          %v1417 = vpop.permute.xlu0 %1416
          %v1419 = vmul.f32 %v1323, %v1342
          %v1420 = vmul.f32 %v1324, %v1347
          %v1421 = vmul.f32 %v1325, %v1352
          %v1422 = vmul.f32 %v1326, %v1357
          %v1423 = vmul.f32 %v1327, %v1362
          %v1424 = vmul.f32 %v1328, %v1367
          %v1425 = vmul.f32 %v1329, %v1372
          %v1426 = vmul.f32 %v1330, %v1377
          %v1427 = vmul.f32 %v1331, %v1382
          %v1428 = vmul.f32 %v1332, %v1387
          %v1429 = vmul.f32 %v1333, %v1392
          %v1430 = vmul.f32 %v1334, %v1397
          %v1431 = vmul.f32 %v1335, %v1402
          %v1432 = vmul.f32 %v1336, %v1407
          %v1433 = vmul.f32 %v1337, %v1412
          %v1434 = vmul.f32 %v1338, %v1417
          %1435 = vst [vmem:[%s552] sm:$0xff] %v1419
          %1436 = vst [vmem:[%s552 + $0x8] sm:$0xff] %v1420
          %1437 = vst [vmem:[%s552 + $0x10] sm:$0xff] %v1421
          %1438 = vst [vmem:[%s552 + $0x18] sm:$0xff] %v1422
          %1439 = vst [vmem:[%s552 + $0x20] sm:$0xff] %v1423
          %1440 = vst [vmem:[%s552 + $0x28] sm:$0xff] %v1424
          %1441 = vst [vmem:[%s552 + $0x30] sm:$0xff] %v1425
          %1442 = vst [vmem:[%s552 + $0x38] sm:$0xff] %v1426
          %1443 = vst [vmem:[%s552 + $0x40] sm:$0xff] %v1427
          %1444 = vst [vmem:[%s552 + $0x48] sm:$0xff] %v1428
          %1445 = vst [vmem:[%s552 + $0x50] sm:$0xff] %v1429
          %1446 = vst [vmem:[%s552 + $0x58] sm:$0xff] %v1430
          %1447 = vst [vmem:[%s552 + $0x60] sm:$0xff] %v1431
          %1448 = vst [vmem:[%s552 + $0x68] sm:$0xff] %v1432
          %1449 = vst [vmem:[%s552 + $0x70] sm:$0xff] %v1433
          %1450 = vst [vmem:[%s552 + $0x78] sm:$0xff] %v1434
        $region154: #{attention_forward.4} parent=133 // pred_fallthru
          _
        %s1451 = sand.u32 %s146, 1
        %s1452 = sand.u32 %s146, 1
        %s1453 = smul.addr %s1452, 128
        %s1454 = scalar_lea.vmem [#allocation8], %s1453
        // Predicated region
        $region155: #{attention_forward.4} parent=133 // pred_check
          %p1455 = pneg %p156
        $region156: #{attention_forward.4} parent=133 // pred_check_branch
          %1457 = sbr.rel (%p1455) target = $region158
        $region157: #{attention_forward.4} parent=133 // pred_region
          %s1458 = smul.u32 16, %s22
          %s1459 = smul.addr %s1458, 2
          %s1460 = sadd.s32 %s21, %s1459
          %s1461 = smul.addr %s20, 64
          %s1462 = sadd.s32 %s1460, %s1461
          %s1463 = smul.addr %s1462, 8
          %s1464 = scalar_lea.vmem %s3, %s1463
          // Predicated region
          $region159: #{attention_forward.4} parent=157 // pred_check
            _
          $region160: #{attention_forward.4} parent=157 // pred_check_branch
            %1466 = sbr.rel (0) target = $region162
          $region161: #{attention_forward.4} parent=157 // pred_region
            // Predicated region
            $region163: #{attention_forward.4} parent=161 // pred_check
              _
            $region164: #{attention_forward.4} parent=161 // pred_check_branch
              %1468 = sbr.rel (0) target = $region166
            $region165: #{attention_forward.4} parent=161 // pred_region
              // Predicated region
              $region178: #{attention_forward.4} parent=165 // pred_check
                _
              $region179: #{attention_forward.4} parent=165 // pred_check_branch
                %1514 = sbr.rel (0) target = $region181
              $region180: #{attention_forward.4} parent=165 // pred_region
                loop: start=0, step=1, limit=1
                $region182: #{attention_forward.4} parent=180 // loop_pre_header
                  _
                $region183: #{attention_forward.4} parent=180 // loop_header
                  %s1516 = sphi 0, %s1520
                  %p1517 = scmp.ge.s32.totalorder %s1516, 1
                  %s1521 = sphi %s1454, %s1454
                  %s1522 = sphi %s1464, %s1464
                $region184: #{attention_forward.4} parent=180 // loop_header_branch
                  %1519 = sbr.rel (%p1517) target = $region188
                $region185: #{attention_forward.4} parent=180 // loop_body
                  %v1523 = vld [vmem:[%s1521] sm:$0xff]
                  %1524 = vst [vmem:[%s1522] sm:$0xff] %v1523
                  %v1525 = vld [vmem:[%s1521 + $0x8] sm:$0xff]
                  %1526 = vst [vmem:[%s1522 + $0x10] sm:$0xff] %v1525
                  %v1527 = vld [vmem:[%s1521 + $0x10] sm:$0xff]
                  %1528 = vst [vmem:[%s1522 + $0x20] sm:$0xff] %v1527
                  %v1529 = vld [vmem:[%s1521 + $0x18] sm:$0xff]
                  %1530 = vst [vmem:[%s1522 + $0x30] sm:$0xff] %v1529
                  %v1531 = vld [vmem:[%s1521 + $0x20] sm:$0xff]
                  %1532 = vst [vmem:[%s1522 + $0x40] sm:$0xff] %v1531
                  %v1533 = vld [vmem:[%s1521 + $0x28] sm:$0xff]
                  %1534 = vst [vmem:[%s1522 + $0x50] sm:$0xff] %v1533
                  %v1535 = vld [vmem:[%s1521 + $0x30] sm:$0xff]
                  %1536 = vst [vmem:[%s1522 + $0x60] sm:$0xff] %v1535
                  %v1537 = vld [vmem:[%s1521 + $0x38] sm:$0xff]
                  %1538 = vst [vmem:[%s1522 + $0x70] sm:$0xff] %v1537
                  %v1539 = vld [vmem:[%s1521 + $0x40] sm:$0xff]
                  %1540 = vst [vmem:[%s1522 + $0x80] sm:$0xff] %v1539
                  %v1541 = vld [vmem:[%s1521 + $0x48] sm:$0xff]
                  %1542 = vst [vmem:[%s1522 + $0x90] sm:$0xff] %v1541
                  %v1543 = vld [vmem:[%s1521 + $0x50] sm:$0xff]
                  %1544 = vst [vmem:[%s1522 + $0xa0] sm:$0xff] %v1543
                  %v1545 = vld [vmem:[%s1521 + $0x58] sm:$0xff]
                  %1546 = vst [vmem:[%s1522 + $0xb0] sm:$0xff] %v1545
                  %v1547 = vld [vmem:[%s1521 + $0x60] sm:$0xff]
                  %1548 = vst [vmem:[%s1522 + $0xc0] sm:$0xff] %v1547
                  %v1549 = vld [vmem:[%s1521 + $0x68] sm:$0xff]
                  %1550 = vst [vmem:[%s1522 + $0xd0] sm:$0xff] %v1549
                  %v1551 = vld [vmem:[%s1521 + $0x70] sm:$0xff]
                  %1552 = vst [vmem:[%s1522 + $0xe0] sm:$0xff] %v1551
                  %v1553 = vld [vmem:[%s1521 + $0x78] sm:$0xff]
                  %1554 = vst [vmem:[%s1522 + $0xf0] sm:$0xff] %v1553
                $region186: #{attention_forward.4} parent=180 // loop_footer
                  %s1520 = sadd.s32 1, %s1516
                $region187: #{attention_forward.4} parent=180 // loop_footer_branch
                  %1515 = sbr.rel target = $region183
                $region188: #{attention_forward.4} parent=180 // loop_exit
                  _
              $region181: #{attention_forward.4} parent=165 // pred_fallthru
                _
              // Predicated region
              $region189: #{attention_forward.4} parent=165 // pred_check
                _
              $region190: #{attention_forward.4} parent=165 // pred_check_branch
                %1556 = sbr.rel target = $region192
              $region191: #{attention_forward.4} parent=165 // pred_region
                _
              $region192: #{attention_forward.4} parent=165 // pred_fallthru
                _
            $region166: #{attention_forward.4} parent=161 // pred_fallthru
              _
            // Predicated region
            $region167: #{attention_forward.4} parent=161 // pred_check
              _
            $region168: #{attention_forward.4} parent=161 // pred_check_branch
              %1470 = sbr.rel target = $region170
            $region169: #{attention_forward.4} parent=161 // pred_region
              %s1472 = ssub.s32 256, 1
              loop: start=0, step=1, limit=1
              $region171: #{attention_forward.4} parent=169 // loop_pre_header
                _
              $region172: #{attention_forward.4} parent=169 // loop_header
                %s1474 = sphi 0, %s1478
                %p1475 = scmp.ge.s32.totalorder %s1474, 1
                %s1479 = sphi %s1454, %s1454
                %s1480 = sphi %s1464, %s1464
              $region173: #{attention_forward.4} parent=169 // loop_header_branch
                %1477 = sbr.rel (%p1475) target = $region177
              $region174: #{attention_forward.4} parent=169 // loop_body
                %v1481 = vld [vmem:[%s1479] sm:%s1472]
                %1482 = vst [vmem:[%s1480] sm:%s1472] %v1481
                %v1483 = vld [vmem:[%s1479 + $0x8] sm:%s1472]
                %1484 = vst [vmem:[%s1480 + $0x10] sm:%s1472] %v1483
                %v1485 = vld [vmem:[%s1479 + $0x10] sm:%s1472]
                %1486 = vst [vmem:[%s1480 + $0x20] sm:%s1472] %v1485
                %v1487 = vld [vmem:[%s1479 + $0x18] sm:%s1472]
                %1488 = vst [vmem:[%s1480 + $0x30] sm:%s1472] %v1487
                %v1489 = vld [vmem:[%s1479 + $0x20] sm:%s1472]
                %1490 = vst [vmem:[%s1480 + $0x40] sm:%s1472] %v1489
                %v1491 = vld [vmem:[%s1479 + $0x28] sm:%s1472]
                %1492 = vst [vmem:[%s1480 + $0x50] sm:%s1472] %v1491
                %v1493 = vld [vmem:[%s1479 + $0x30] sm:%s1472]
                %1494 = vst [vmem:[%s1480 + $0x60] sm:%s1472] %v1493
                %v1495 = vld [vmem:[%s1479 + $0x38] sm:%s1472]
                %1496 = vst [vmem:[%s1480 + $0x70] sm:%s1472] %v1495
                %v1497 = vld [vmem:[%s1479 + $0x40] sm:%s1472]
                %1498 = vst [vmem:[%s1480 + $0x80] sm:%s1472] %v1497
                %v1499 = vld [vmem:[%s1479 + $0x48] sm:%s1472]
                %1500 = vst [vmem:[%s1480 + $0x90] sm:%s1472] %v1499
                %v1501 = vld [vmem:[%s1479 + $0x50] sm:%s1472]
                %1502 = vst [vmem:[%s1480 + $0xa0] sm:%s1472] %v1501
                %v1503 = vld [vmem:[%s1479 + $0x58] sm:%s1472]
                %1504 = vst [vmem:[%s1480 + $0xb0] sm:%s1472] %v1503
                %v1505 = vld [vmem:[%s1479 + $0x60] sm:%s1472]
                %1506 = vst [vmem:[%s1480 + $0xc0] sm:%s1472] %v1505
                %v1507 = vld [vmem:[%s1479 + $0x68] sm:%s1472]
                %1508 = vst [vmem:[%s1480 + $0xd0] sm:%s1472] %v1507
                %v1509 = vld [vmem:[%s1479 + $0x70] sm:%s1472]
                %1510 = vst [vmem:[%s1480 + $0xe0] sm:%s1472] %v1509
                %v1511 = vld [vmem:[%s1479 + $0x78] sm:%s1472]
                %1512 = vst [vmem:[%s1480 + $0xf0] sm:%s1472] %v1511
              $region175: #{attention_forward.4} parent=169 // loop_footer
                %s1478 = sadd.s32 1, %s1474
              $region176: #{attention_forward.4} parent=169 // loop_footer_branch
                %1473 = sbr.rel target = $region172
              $region177: #{attention_forward.4} parent=169 // loop_exit
                _
            $region170: #{attention_forward.4} parent=161 // pred_fallthru
              _
          $region162: #{attention_forward.4} parent=157 // pred_fallthru
            _
          %1557 = vnop
        $region158: #{attention_forward.4} parent=133 // pred_fallthru
          _
      $region134: #{attention_forward.4} parent=5 // pred_fallthru
        _
      %p1558 = scmp.le.s32.totalorder 2, %s9
      // Predicated region
      $region193: #{attention_forward.4} parent=5 // pred_check
        %p1559 = pneg %p1558
      $region194: #{attention_forward.4} parent=5 // pred_check_branch
        %1561 = sbr.rel (%p1559) target = $region196
      $region195: #{attention_forward.4} parent=5 // pred_region
        %s1562 = ssub.s32 %s9, 2
        // Predicated region
        $region197: #{attention_forward.4} parent=195 // pred_check
          %p1563 = pneg %p162
        $region198: #{attention_forward.4} parent=195 // pred_check_branch
          %1565 = sbr.rel (%p1563) target = $region200
        $region199: #{attention_forward.4} parent=195 // pred_region
          %s1566 = sand.u32 %s147, 1
          %s1567 = sand.u32 %s147, 1
          %s1568 = smul.addr %s1567, 128
          %s1569 = scalar_lea.vmem [#allocation8], %s1568
        $region200: #{attention_forward.4} parent=195 // pred_fallthru
          _
      $region196: #{attention_forward.4} parent=5 // pred_fallthru
        _
    $region6: #{attention_forward.4} parent=1 // loop_footer
      %s13 = sadd.s32 1, %s9
    $region7: #{attention_forward.4} parent=1 // loop_footer_branch
      %8 = sbr.rel target = $region3
    $region8: #{attention_forward.4} parent=1 // loop_exit
      _

// kernel: attention_forward.5
$region0: #{attention_forward.5}
  #allocation0 [shape = 'u32[]', space=smem, size = 0x4, offset = 0x4, fixed_abs, tag = 'smem constant byte address 0x4 - core index']
  #allocation1 [shape = 'u32[72,128]{1,0:T(1,128)}', space=vmem, size = 0x9000, scoped, tag = 'internal scratch']
  %s0 = inlined_call_operand.vmem [shape: f32[512,256], index: 0, kind: input, shape index: {}]
  %s1 = inlined_call_operand.vmem [shape: f32[256,256], index: 1, kind: input, shape index: {}]
  %s2 = inlined_call_operand.vmem [shape: f32[1,256], index: 2, kind: input, shape index: {}]
  %s3 = inlined_call_operand.hbm [shape: f32[512,256], index: 3, kind: output, shape index: {}]
  %s4 = sld [smem:[#allocation0]]
  $region22: #{attention_forward.5} parent=0
    _
  %s6 = ssub.s32 1, %s4
  %s7 = scalar_select 0, %s6, %s4
  $region1: #{attention_forward.5} parent=0
    #allocation2 [shape = 'u8[524288]{0}', space=vmem, size = 0x80000, scoped, tag = 'output window, operand 0, single buffered']
    #allocation3 [shape = 's32[1]{0}', space=sflag, size = 0x4, scoped, tag = 'scoped memory for attention_forward.5']
    %8 = vsyncpa [#allocation3], 0
    // Predicated region
    $region2: #{attention_forward.5} parent=1 // pred_check
      _
    $region3: #{attention_forward.5} parent=1 // pred_check_branch
      %10 = sbr.rel (0) target = $region5
    $region4: #{attention_forward.5} parent=1 // pred_region
      _
    $region5: #{attention_forward.5} parent=1 // pred_fallthru
      _
    // Predicated region
    $region6: #{attention_forward.5} parent=1 // pred_check
      _
    $region7: #{attention_forward.5} parent=1 // pred_check_branch
      %12 = sbr.rel (0) target = $region9
    $region8: #{attention_forward.5} parent=1 // pred_region
      _
    $region9: #{attention_forward.5} parent=1 // pred_fallthru
      _
    // Predicated region
    $region10: #{attention_forward.5} parent=1 // pred_check
      _
    $region11: #{attention_forward.5} parent=1 // pred_check_branch
      %14 = sbr.rel (0) target = $region13
    $region12: #{attention_forward.5} parent=1 // pred_region
      _
    $region13: #{attention_forward.5} parent=1 // pred_fallthru
      _
    %v15 = vld [vmem:[%s0] sm:$0xff]
    %v16 = vld [vmem:[%s0 + $0x8] sm:$0xff]
    %v17 = vld [vmem:[%s0 + $0x10] sm:$0xff]
    %v18 = vld [vmem:[%s0 + $0x18] sm:$0xff]
    %v19 = vld [vmem:[%s0 + $0x20] sm:$0xff]
    %v20 = vld [vmem:[%s0 + $0x28] sm:$0xff]
    %v21 = vld [vmem:[%s0 + $0x30] sm:$0xff]
    %v22 = vld [vmem:[%s0 + $0x38] sm:$0xff]
    %v23 = vld [vmem:[%s0 + $0x40] sm:$0xff]
    %v24 = vld [vmem:[%s0 + $0x48] sm:$0xff]
    %v25 = vld [vmem:[%s0 + $0x50] sm:$0xff]
    %v26 = vld [vmem:[%s0 + $0x58] sm:$0xff]
    %v27 = vld [vmem:[%s0 + $0x60] sm:$0xff]
    %v28 = vld [vmem:[%s0 + $0x68] sm:$0xff]
    %v29 = vld [vmem:[%s0 + $0x70] sm:$0xff]
    %v30 = vld [vmem:[%s0 + $0x78] sm:$0xff]
    %v31 = vld [vmem:[%s0 + $0x80] sm:$0xff]
    %v32 = vld [vmem:[%s0 + $0x88] sm:$0xff]
    %v33 = vld [vmem:[%s0 + $0x90] sm:$0xff]
    %v34 = vld [vmem:[%s0 + $0x98] sm:$0xff]
    %v35 = vld [vmem:[%s0 + $0xa0] sm:$0xff]
    %v36 = vld [vmem:[%s0 + $0xa8] sm:$0xff]
    %v37 = vld [vmem:[%s0 + $0xb0] sm:$0xff]
    %v38 = vld [vmem:[%s0 + $0xb8] sm:$0xff]
    %v39 = vld [vmem:[%s0 + $0xc0] sm:$0xff]
    %v40 = vld [vmem:[%s0 + $0xc8] sm:$0xff]
    %v41 = vld [vmem:[%s0 + $0xd0] sm:$0xff]
    %v42 = vld [vmem:[%s0 + $0xd8] sm:$0xff]
    %v43 = vld [vmem:[%s0 + $0xe0] sm:$0xff]
    %v44 = vld [vmem:[%s0 + $0xe8] sm:$0xff]
    %v45 = vld [vmem:[%s0 + $0xf0] sm:$0xff]
    %v46 = vld [vmem:[%s0 + $0xf8] sm:$0xff]
    %v47 = vld [vmem:[%s0 + $0x100] sm:$0xff]
    %v48 = vld [vmem:[%s0 + $0x108] sm:$0xff]
    %v49 = vld [vmem:[%s0 + $0x110] sm:$0xff]
    %v50 = vld [vmem:[%s0 + $0x118] sm:$0xff]
    %v51 = vld [vmem:[%s0 + $0x120] sm:$0xff]
    %v52 = vld [vmem:[%s0 + $0x128] sm:$0xff]
    %v53 = vld [vmem:[%s0 + $0x130] sm:$0xff]
    %v54 = vld [vmem:[%s0 + $0x138] sm:$0xff]
    %v55 = vld [vmem:[%s0 + $0x140] sm:$0xff]
    %v56 = vld [vmem:[%s0 + $0x148] sm:$0xff]
    %v57 = vld [vmem:[%s0 + $0x150] sm:$0xff]
    %v58 = vld [vmem:[%s0 + $0x158] sm:$0xff]
    %v59 = vld [vmem:[%s0 + $0x160] sm:$0xff]
    %v60 = vld [vmem:[%s0 + $0x168] sm:$0xff]
    %v61 = vld [vmem:[%s0 + $0x170] sm:$0xff]
    %v62 = vld [vmem:[%s0 + $0x178] sm:$0xff]
    %v63 = vld [vmem:[%s0 + $0x180] sm:$0xff]
    %v64 = vld [vmem:[%s0 + $0x188] sm:$0xff]
    %v65 = vld [vmem:[%s0 + $0x190] sm:$0xff]
    %v66 = vld [vmem:[%s0 + $0x198] sm:$0xff]
    %v67 = vld [vmem:[%s0 + $0x1a0] sm:$0xff]
    %v68 = vld [vmem:[%s0 + $0x1a8] sm:$0xff]
    %v69 = vld [vmem:[%s0 + $0x1b0] sm:$0xff]
    %v70 = vld [vmem:[%s0 + $0x1b8] sm:$0xff]
    %v71 = vld [vmem:[%s0 + $0x1c0] sm:$0xff]
    %v72 = vld [vmem:[%s0 + $0x1c8] sm:$0xff]
    %v73 = vld [vmem:[%s0 + $0x1d0] sm:$0xff]
    %v74 = vld [vmem:[%s0 + $0x1d8] sm:$0xff]
    %v75 = vld [vmem:[%s0 + $0x1e0] sm:$0xff]
    %v76 = vld [vmem:[%s0 + $0x1e8] sm:$0xff]
    %v77 = vld [vmem:[%s0 + $0x1f0] sm:$0xff]
    %v78 = vld [vmem:[%s0 + $0x1f8] sm:$0xff]
    %v79 = vld [vmem:[%s0 + $0x200] sm:$0xff]
    %v80 = vld [vmem:[%s0 + $0x208] sm:$0xff]
    %v81 = vld [vmem:[%s0 + $0x210] sm:$0xff]
    %v82 = vld [vmem:[%s0 + $0x218] sm:$0xff]
    %v83 = vld [vmem:[%s0 + $0x220] sm:$0xff]
    %v84 = vld [vmem:[%s0 + $0x228] sm:$0xff]
    %v85 = vld [vmem:[%s0 + $0x230] sm:$0xff]
    %v86 = vld [vmem:[%s0 + $0x238] sm:$0xff]
    %v87 = vld [vmem:[%s0 + $0x240] sm:$0xff]
    %v88 = vld [vmem:[%s0 + $0x248] sm:$0xff]
    %v89 = vld [vmem:[%s0 + $0x250] sm:$0xff]
    %v90 = vld [vmem:[%s0 + $0x258] sm:$0xff]
    %v91 = vld [vmem:[%s0 + $0x260] sm:$0xff]
    %v92 = vld [vmem:[%s0 + $0x268] sm:$0xff]
    %v93 = vld [vmem:[%s0 + $0x270] sm:$0xff]
    %v94 = vld [vmem:[%s0 + $0x278] sm:$0xff]
    %v95 = vld [vmem:[%s0 + $0x280] sm:$0xff]
    %v96 = vld [vmem:[%s0 + $0x288] sm:$0xff]
    %v97 = vld [vmem:[%s0 + $0x290] sm:$0xff]
    %v98 = vld [vmem:[%s0 + $0x298] sm:$0xff]
    %v99 = vld [vmem:[%s0 + $0x2a0] sm:$0xff]
    %v100 = vld [vmem:[%s0 + $0x2a8] sm:$0xff]
    %v101 = vld [vmem:[%s0 + $0x2b0] sm:$0xff]
    %v102 = vld [vmem:[%s0 + $0x2b8] sm:$0xff]
    %v103 = vld [vmem:[%s0 + $0x2c0] sm:$0xff]
    %v104 = vld [vmem:[%s0 + $0x2c8] sm:$0xff]
    %v105 = vld [vmem:[%s0 + $0x2d0] sm:$0xff]
    %v106 = vld [vmem:[%s0 + $0x2d8] sm:$0xff]
    %v107 = vld [vmem:[%s0 + $0x2e0] sm:$0xff]
    %v108 = vld [vmem:[%s0 + $0x2e8] sm:$0xff]
    %v109 = vld [vmem:[%s0 + $0x2f0] sm:$0xff]
    %v110 = vld [vmem:[%s0 + $0x2f8] sm:$0xff]
    %v111 = vld [vmem:[%s0 + $0x300] sm:$0xff]
    %v112 = vld [vmem:[%s0 + $0x308] sm:$0xff]
    %v113 = vld [vmem:[%s0 + $0x310] sm:$0xff]
    %v114 = vld [vmem:[%s0 + $0x318] sm:$0xff]
    %v115 = vld [vmem:[%s0 + $0x320] sm:$0xff]
    %v116 = vld [vmem:[%s0 + $0x328] sm:$0xff]
    %v117 = vld [vmem:[%s0 + $0x330] sm:$0xff]
    %v118 = vld [vmem:[%s0 + $0x338] sm:$0xff]
    %v119 = vld [vmem:[%s0 + $0x340] sm:$0xff]
    %v120 = vld [vmem:[%s0 + $0x348] sm:$0xff]
    %v121 = vld [vmem:[%s0 + $0x350] sm:$0xff]
    %v122 = vld [vmem:[%s0 + $0x358] sm:$0xff]
    %v123 = vld [vmem:[%s0 + $0x360] sm:$0xff]
    %v124 = vld [vmem:[%s0 + $0x368] sm:$0xff]
    %v125 = vld [vmem:[%s0 + $0x370] sm:$0xff]
    %v126 = vld [vmem:[%s0 + $0x378] sm:$0xff]
    %v127 = vld [vmem:[%s0 + $0x380] sm:$0xff]
    %v128 = vld [vmem:[%s0 + $0x388] sm:$0xff]
    %v129 = vld [vmem:[%s0 + $0x390] sm:$0xff]
    %v130 = vld [vmem:[%s0 + $0x398] sm:$0xff]
    %v131 = vld [vmem:[%s0 + $0x3a0] sm:$0xff]
    %v132 = vld [vmem:[%s0 + $0x3a8] sm:$0xff]
    %v133 = vld [vmem:[%s0 + $0x3b0] sm:$0xff]
    %v134 = vld [vmem:[%s0 + $0x3b8] sm:$0xff]
    %v135 = vld [vmem:[%s0 + $0x3c0] sm:$0xff]
    %v136 = vld [vmem:[%s0 + $0x3c8] sm:$0xff]
    %v137 = vld [vmem:[%s0 + $0x3d0] sm:$0xff]
    %v138 = vld [vmem:[%s0 + $0x3d8] sm:$0xff]
    %v139 = vld [vmem:[%s0 + $0x3e0] sm:$0xff]
    %v140 = vld [vmem:[%s0 + $0x3e8] sm:$0xff]
    %v141 = vld [vmem:[%s0 + $0x3f0] sm:$0xff]
    %v142 = vld [vmem:[%s0 + $0x3f8] sm:$0xff]
    %v143 = vld [vmem:[%s1] sm:$0xff]
    %v144 = vld [vmem:[%s1 + $0x8] sm:$0xff]
    %v145 = vld [vmem:[%s1 + $0x10] sm:$0xff]
    %v146 = vld [vmem:[%s1 + $0x18] sm:$0xff]
    %v147 = vld [vmem:[%s1 + $0x20] sm:$0xff]
    %v148 = vld [vmem:[%s1 + $0x28] sm:$0xff]
    %v149 = vld [vmem:[%s1 + $0x30] sm:$0xff]
    %v150 = vld [vmem:[%s1 + $0x38] sm:$0xff]
    %v151 = vld [vmem:[%s1 + $0x40] sm:$0xff]
    %v152 = vld [vmem:[%s1 + $0x48] sm:$0xff]
    %v153 = vld [vmem:[%s1 + $0x50] sm:$0xff]
    %v154 = vld [vmem:[%s1 + $0x58] sm:$0xff]
    %v155 = vld [vmem:[%s1 + $0x60] sm:$0xff]
    %v156 = vld [vmem:[%s1 + $0x68] sm:$0xff]
    %v157 = vld [vmem:[%s1 + $0x70] sm:$0xff]
    %v158 = vld [vmem:[%s1 + $0x78] sm:$0xff]
    %v159 = vld [vmem:[%s1 + $0x80] sm:$0xff]
    %v160 = vld [vmem:[%s1 + $0x88] sm:$0xff]
    %v161 = vld [vmem:[%s1 + $0x90] sm:$0xff]
    %v162 = vld [vmem:[%s1 + $0x98] sm:$0xff]
    %v163 = vld [vmem:[%s1 + $0xa0] sm:$0xff]
    %v164 = vld [vmem:[%s1 + $0xa8] sm:$0xff]
    %v165 = vld [vmem:[%s1 + $0xb0] sm:$0xff]
    %v166 = vld [vmem:[%s1 + $0xb8] sm:$0xff]
    %v167 = vld [vmem:[%s1 + $0xc0] sm:$0xff]
    %v168 = vld [vmem:[%s1 + $0xc8] sm:$0xff]
    %v169 = vld [vmem:[%s1 + $0xd0] sm:$0xff]
    %v170 = vld [vmem:[%s1 + $0xd8] sm:$0xff]
    %v171 = vld [vmem:[%s1 + $0xe0] sm:$0xff]
    %v172 = vld [vmem:[%s1 + $0xe8] sm:$0xff]
    %v173 = vld [vmem:[%s1 + $0xf0] sm:$0xff]
    %v174 = vld [vmem:[%s1 + $0xf8] sm:$0xff]
    %v175 = vld [vmem:[%s1 + $0x100] sm:$0xff]
    %v176 = vld [vmem:[%s1 + $0x108] sm:$0xff]
    %v177 = vld [vmem:[%s1 + $0x110] sm:$0xff]
    %v178 = vld [vmem:[%s1 + $0x118] sm:$0xff]
    %v179 = vld [vmem:[%s1 + $0x120] sm:$0xff]
    %v180 = vld [vmem:[%s1 + $0x128] sm:$0xff]
    %v181 = vld [vmem:[%s1 + $0x130] sm:$0xff]
    %v182 = vld [vmem:[%s1 + $0x138] sm:$0xff]
    %v183 = vld [vmem:[%s1 + $0x140] sm:$0xff]
    %v184 = vld [vmem:[%s1 + $0x148] sm:$0xff]
    %v185 = vld [vmem:[%s1 + $0x150] sm:$0xff]
    %v186 = vld [vmem:[%s1 + $0x158] sm:$0xff]
    %v187 = vld [vmem:[%s1 + $0x160] sm:$0xff]
    %v188 = vld [vmem:[%s1 + $0x168] sm:$0xff]
    %v189 = vld [vmem:[%s1 + $0x170] sm:$0xff]
    %v190 = vld [vmem:[%s1 + $0x178] sm:$0xff]
    %v191 = vld [vmem:[%s1 + $0x180] sm:$0xff]
    %v192 = vld [vmem:[%s1 + $0x188] sm:$0xff]
    %v193 = vld [vmem:[%s1 + $0x190] sm:$0xff]
    %v194 = vld [vmem:[%s1 + $0x198] sm:$0xff]
    %v195 = vld [vmem:[%s1 + $0x1a0] sm:$0xff]
    %v196 = vld [vmem:[%s1 + $0x1a8] sm:$0xff]
    %v197 = vld [vmem:[%s1 + $0x1b0] sm:$0xff]
    %v198 = vld [vmem:[%s1 + $0x1b8] sm:$0xff]
    %v199 = vld [vmem:[%s1 + $0x1c0] sm:$0xff]
    %v200 = vld [vmem:[%s1 + $0x1c8] sm:$0xff]
    %v201 = vld [vmem:[%s1 + $0x1d0] sm:$0xff]
    %v202 = vld [vmem:[%s1 + $0x1d8] sm:$0xff]
    %v203 = vld [vmem:[%s1 + $0x1e0] sm:$0xff]
    %v204 = vld [vmem:[%s1 + $0x1e8] sm:$0xff]
    %v205 = vld [vmem:[%s1 + $0x1f0] sm:$0xff]
    %v206 = vld [vmem:[%s1 + $0x1f8] sm:$0xff]
    %v207 = vld [vmem:[%s2] sm:$0x3]
    %v209 = vperm.slane %v207, 0
    %v210 = vperm.slane %v207, 1
    %213 = vmatpush.xpose.msra.mxu0 %v173
    %214 = vmatpush.xpose.msra.mxu0 %v171
    %215 = vmatpush.xpose.msra.mxu0 %v169
    %216 = vmatpush.xpose.msra.mxu0 %v167
    %217 = vmatpush.xpose.msra.mxu0 %v165
    %218 = vmatpush.xpose.msra.mxu0 %v163
    %219 = vmatpush.xpose.msra.mxu0 %v161
    %220 = vmatpush.xpose.msra.mxu0 %v159
    %221 = vmatpush.xpose.msra.mxu0 %v157
    %222 = vmatpush.xpose.msra.mxu0 %v155
    %223 = vmatpush.xpose.msra.mxu0 %v153
    %224 = vmatpush.xpose.msra.mxu0 %v151
    %225 = vmatpush.xpose.msra.mxu0 %v149
    %226 = vmatpush.xpose.msra.mxu0 %v147
    %227 = vmatpush.xpose.msra.mxu0 %v145
    %228 = vmatpush.xpose.msra.mxu0 %v143
    %229 = vmatmul.f32.gmra.mxu0 %v15
    %v230 = vpop.f32.mrf.mxu0
    %v231 = vadd.f32 %v209, %v230
    %232 = vmatmul.f32.gmra.mxu0 %v17
    %v233 = vpop.f32.mrf.mxu0
    %v234 = vadd.f32 %v209, %v233
    %235 = vmatmul.f32.gmra.mxu0 %v19
    %v236 = vpop.f32.mrf.mxu0
    %v237 = vadd.f32 %v209, %v236
    %238 = vmatmul.f32.gmra.mxu0 %v21
    %v239 = vpop.f32.mrf.mxu0
    %v240 = vadd.f32 %v209, %v239
    %241 = vmatmul.f32.gmra.mxu0 %v23
    %v242 = vpop.f32.mrf.mxu0
    %v243 = vadd.f32 %v209, %v242
    %244 = vmatmul.f32.gmra.mxu0 %v25
    %v245 = vpop.f32.mrf.mxu0
    %v246 = vadd.f32 %v209, %v245
    %247 = vmatmul.f32.gmra.mxu0 %v27
    %v248 = vpop.f32.mrf.mxu0
    %v249 = vadd.f32 %v209, %v248
    %250 = vmatmul.f32.gmra.mxu0 %v29
    %v251 = vpop.f32.mrf.mxu0
    %v252 = vadd.f32 %v209, %v251
    %253 = vmatmul.f32.gmra.mxu0 %v31
    %v254 = vpop.f32.mrf.mxu0
    %v255 = vadd.f32 %v209, %v254
    %256 = vmatmul.f32.gmra.mxu0 %v33
    %v257 = vpop.f32.mrf.mxu0
    %v258 = vadd.f32 %v209, %v257
    %259 = vmatmul.f32.gmra.mxu0 %v35
    %v260 = vpop.f32.mrf.mxu0
    %v261 = vadd.f32 %v209, %v260
    %262 = vmatmul.f32.gmra.mxu0 %v37
    %v263 = vpop.f32.mrf.mxu0
    %v264 = vadd.f32 %v209, %v263
    %265 = vmatmul.f32.gmra.mxu0 %v39
    %v266 = vpop.f32.mrf.mxu0
    %v267 = vadd.f32 %v209, %v266
    %268 = vmatmul.f32.gmra.mxu0 %v41
    %v269 = vpop.f32.mrf.mxu0
    %v270 = vadd.f32 %v209, %v269
    %271 = vmatmul.f32.gmra.mxu0 %v43
    %v272 = vpop.f32.mrf.mxu0
    %v273 = vadd.f32 %v209, %v272
    %274 = vmatmul.f32.gmra.mxu0 %v45
    %v275 = vpop.f32.mrf.mxu0
    %v276 = vadd.f32 %v209, %v275
    %277 = vmatmul.f32.gmra.mxu0 %v47
    %v278 = vpop.f32.mrf.mxu0
    %v279 = vadd.f32 %v209, %v278
    %280 = vmatmul.f32.gmra.mxu0 %v49
    %v281 = vpop.f32.mrf.mxu0
    %v282 = vadd.f32 %v209, %v281
    %283 = vmatmul.f32.gmra.mxu0 %v51
    %v284 = vpop.f32.mrf.mxu0
    %v285 = vadd.f32 %v209, %v284
    %286 = vmatmul.f32.gmra.mxu0 %v53
    %v287 = vpop.f32.mrf.mxu0
    %v288 = vadd.f32 %v209, %v287
    %289 = vmatmul.f32.gmra.mxu0 %v55
    %v290 = vpop.f32.mrf.mxu0
    %v291 = vadd.f32 %v209, %v290
    %292 = vmatmul.f32.gmra.mxu0 %v57
    %v293 = vpop.f32.mrf.mxu0
    %v294 = vadd.f32 %v209, %v293
    %295 = vmatmul.f32.gmra.mxu0 %v59
    %v296 = vpop.f32.mrf.mxu0
    %v297 = vadd.f32 %v209, %v296
    %298 = vmatmul.f32.gmra.mxu0 %v61
    %v299 = vpop.f32.mrf.mxu0
    %v300 = vadd.f32 %v209, %v299
    %301 = vmatmul.f32.gmra.mxu0 %v63
    %v302 = vpop.f32.mrf.mxu0
    %v303 = vadd.f32 %v209, %v302
    %304 = vmatmul.f32.gmra.mxu0 %v65
    %v305 = vpop.f32.mrf.mxu0
    %v306 = vadd.f32 %v209, %v305
    %307 = vmatmul.f32.gmra.mxu0 %v67
    %v308 = vpop.f32.mrf.mxu0
    %v309 = vadd.f32 %v209, %v308
    %310 = vmatmul.f32.gmra.mxu0 %v69
    %v311 = vpop.f32.mrf.mxu0
    %v312 = vadd.f32 %v209, %v311
    %313 = vmatmul.f32.gmra.mxu0 %v71
    %v314 = vpop.f32.mrf.mxu0
    %v315 = vadd.f32 %v209, %v314
    %316 = vmatmul.f32.gmra.mxu0 %v73
    %v317 = vpop.f32.mrf.mxu0
    %v318 = vadd.f32 %v209, %v317
    %319 = vmatmul.f32.gmra.mxu0 %v75
    %v320 = vpop.f32.mrf.mxu0
    %v321 = vadd.f32 %v209, %v320
    %322 = vmatmul.f32.gmra.mxu0 %v77
    %v323 = vpop.f32.mrf.mxu0
    %v324 = vadd.f32 %v209, %v323
    %325 = vmatmul.f32.gmra.mxu0 %v79
    %v326 = vpop.f32.mrf.mxu0
    %v327 = vadd.f32 %v209, %v326
    %328 = vmatmul.f32.gmra.mxu0 %v81
    %v329 = vpop.f32.mrf.mxu0
    %v330 = vadd.f32 %v209, %v329
    %331 = vmatmul.f32.gmra.mxu0 %v83
    %v332 = vpop.f32.mrf.mxu0
    %v333 = vadd.f32 %v209, %v332
    %334 = vmatmul.f32.gmra.mxu0 %v85
    %v335 = vpop.f32.mrf.mxu0
    %v336 = vadd.f32 %v209, %v335
    %337 = vmatmul.f32.gmra.mxu0 %v87
    %v338 = vpop.f32.mrf.mxu0
    %v339 = vadd.f32 %v209, %v338
    %340 = vmatmul.f32.gmra.mxu0 %v89
    %v341 = vpop.f32.mrf.mxu0
    %v342 = vadd.f32 %v209, %v341
    %343 = vmatmul.f32.gmra.mxu0 %v91
    %v344 = vpop.f32.mrf.mxu0
    %v345 = vadd.f32 %v209, %v344
    %346 = vmatmul.f32.gmra.mxu0 %v93
    %v347 = vpop.f32.mrf.mxu0
    %v348 = vadd.f32 %v209, %v347
    %349 = vmatmul.f32.gmra.mxu0 %v95
    %v350 = vpop.f32.mrf.mxu0
    %v351 = vadd.f32 %v209, %v350
    %352 = vmatmul.f32.gmra.mxu0 %v97
    %v353 = vpop.f32.mrf.mxu0
    %v354 = vadd.f32 %v209, %v353
    %355 = vmatmul.f32.gmra.mxu0 %v99
    %v356 = vpop.f32.mrf.mxu0
    %v357 = vadd.f32 %v209, %v356
    %358 = vmatmul.f32.gmra.mxu0 %v101
    %v359 = vpop.f32.mrf.mxu0
    %v360 = vadd.f32 %v209, %v359
    %361 = vmatmul.f32.gmra.mxu0 %v103
    %v362 = vpop.f32.mrf.mxu0
    %v363 = vadd.f32 %v209, %v362
    %364 = vmatmul.f32.gmra.mxu0 %v105
    %v365 = vpop.f32.mrf.mxu0
    %v366 = vadd.f32 %v209, %v365
    %367 = vmatmul.f32.gmra.mxu0 %v107
    %v368 = vpop.f32.mrf.mxu0
    %v369 = vadd.f32 %v209, %v368
    %370 = vmatmul.f32.gmra.mxu0 %v109
    %v371 = vpop.f32.mrf.mxu0
    %v372 = vadd.f32 %v209, %v371
    %373 = vmatmul.f32.gmra.mxu0 %v111
    %v374 = vpop.f32.mrf.mxu0
    %v375 = vadd.f32 %v209, %v374
    %376 = vmatmul.f32.gmra.mxu0 %v113
    %v377 = vpop.f32.mrf.mxu0
    %v378 = vadd.f32 %v209, %v377
    %379 = vmatmul.f32.gmra.mxu0 %v115
    %v380 = vpop.f32.mrf.mxu0
    %v381 = vadd.f32 %v209, %v380
    %382 = vmatmul.f32.gmra.mxu0 %v117
    %v383 = vpop.f32.mrf.mxu0
    %v384 = vadd.f32 %v209, %v383
    %385 = vmatmul.f32.gmra.mxu0 %v119
    %v386 = vpop.f32.mrf.mxu0
    %v387 = vadd.f32 %v209, %v386
    %388 = vmatmul.f32.gmra.mxu0 %v121
    %v389 = vpop.f32.mrf.mxu0
    %v390 = vadd.f32 %v209, %v389
    %391 = vmatmul.f32.gmra.mxu0 %v123
    %v392 = vpop.f32.mrf.mxu0
    %v393 = vadd.f32 %v209, %v392
    %394 = vmatmul.f32.gmra.mxu0 %v125
    %v395 = vpop.f32.mrf.mxu0
    %v396 = vadd.f32 %v209, %v395
    %397 = vmatmul.f32.gmra.mxu0 %v127
    %v398 = vpop.f32.mrf.mxu0
    %v399 = vadd.f32 %v209, %v398
    %400 = vmatmul.f32.gmra.mxu0 %v129
    %v401 = vpop.f32.mrf.mxu0
    %v402 = vadd.f32 %v209, %v401
    %403 = vmatmul.f32.gmra.mxu0 %v131
    %v404 = vpop.f32.mrf.mxu0
    %v405 = vadd.f32 %v209, %v404
    %406 = vmatmul.f32.gmra.mxu0 %v133
    %v407 = vpop.f32.mrf.mxu0
    %v408 = vadd.f32 %v209, %v407
    %409 = vmatmul.f32.gmra.mxu0 %v135
    %v410 = vpop.f32.mrf.mxu0
    %v411 = vadd.f32 %v209, %v410
    %412 = vmatmul.f32.gmra.mxu0 %v137
    %v413 = vpop.f32.mrf.mxu0
    %v414 = vadd.f32 %v209, %v413
    %415 = vmatmul.f32.gmra.mxu0 %v139
    %v416 = vpop.f32.mrf.mxu0
    %v417 = vadd.f32 %v209, %v416
    %418 = vmatmul.f32.gmra.mxu0 %v141
    %v419 = vpop.f32.mrf.mxu0
    %v420 = vadd.f32 %v209, %v419
    %421 = vdwg.mxu0
    %422 = vmatpush.xpose.msra.mxu0 %v174
    %423 = vmatpush.xpose.msra.mxu0 %v172
    %424 = vmatpush.xpose.msra.mxu0 %v170
    %425 = vmatpush.xpose.msra.mxu0 %v168
    %426 = vmatpush.xpose.msra.mxu0 %v166
    %427 = vmatpush.xpose.msra.mxu0 %v164
    %428 = vmatpush.xpose.msra.mxu0 %v162
    %429 = vmatpush.xpose.msra.mxu0 %v160
    %430 = vmatpush.xpose.msra.mxu0 %v158
    %431 = vmatpush.xpose.msra.mxu0 %v156
    %432 = vmatpush.xpose.msra.mxu0 %v154
    %433 = vmatpush.xpose.msra.mxu0 %v152
    %434 = vmatpush.xpose.msra.mxu0 %v150
    %435 = vmatpush.xpose.msra.mxu0 %v148
    %436 = vmatpush.xpose.msra.mxu0 %v146
    %437 = vmatpush.xpose.msra.mxu0 %v144
    %438 = vmatmul.f32.gmra.mxu0 %v16
    %v439 = vpop.f32.mrf.mxu0
    %v440 = vadd.f32 %v231, %v439
    %441 = vmatmul.f32.gmra.mxu0 %v18
    %v442 = vpop.f32.mrf.mxu0
    %v443 = vadd.f32 %v234, %v442
    %444 = vmatmul.f32.gmra.mxu0 %v20
    %v445 = vpop.f32.mrf.mxu0
    %v446 = vadd.f32 %v237, %v445
    %447 = vmatmul.f32.gmra.mxu0 %v22
    %v448 = vpop.f32.mrf.mxu0
    %v449 = vadd.f32 %v240, %v448
    %450 = vmatmul.f32.gmra.mxu0 %v24
    %v451 = vpop.f32.mrf.mxu0
    %v452 = vadd.f32 %v243, %v451
    %453 = vmatmul.f32.gmra.mxu0 %v26
    %v454 = vpop.f32.mrf.mxu0
    %v455 = vadd.f32 %v246, %v454
    %456 = vmatmul.f32.gmra.mxu0 %v28
    %v457 = vpop.f32.mrf.mxu0
    %v458 = vadd.f32 %v249, %v457
    %459 = vmatmul.f32.gmra.mxu0 %v30
    %v460 = vpop.f32.mrf.mxu0
    %v461 = vadd.f32 %v252, %v460
    %462 = vmatmul.f32.gmra.mxu0 %v32
    %v463 = vpop.f32.mrf.mxu0
    %v464 = vadd.f32 %v255, %v463
    %465 = vmatmul.f32.gmra.mxu0 %v34
    %v466 = vpop.f32.mrf.mxu0
    %v467 = vadd.f32 %v258, %v466
    %468 = vmatmul.f32.gmra.mxu0 %v36
    %v469 = vpop.f32.mrf.mxu0
    %v470 = vadd.f32 %v261, %v469
    %471 = vmatmul.f32.gmra.mxu0 %v38
    %v472 = vpop.f32.mrf.mxu0
    %v473 = vadd.f32 %v264, %v472
    %474 = vmatmul.f32.gmra.mxu0 %v40
    %v475 = vpop.f32.mrf.mxu0
    %v476 = vadd.f32 %v267, %v475
    %477 = vmatmul.f32.gmra.mxu0 %v42
    %v478 = vpop.f32.mrf.mxu0
    %v479 = vadd.f32 %v270, %v478
    %480 = vmatmul.f32.gmra.mxu0 %v44
    %v481 = vpop.f32.mrf.mxu0
    %v482 = vadd.f32 %v273, %v481
    %483 = vmatmul.f32.gmra.mxu0 %v46
    %v484 = vpop.f32.mrf.mxu0
    %v485 = vadd.f32 %v276, %v484
    %486 = vmatmul.f32.gmra.mxu0 %v48
    %v487 = vpop.f32.mrf.mxu0
    %v488 = vadd.f32 %v279, %v487
    %489 = vmatmul.f32.gmra.mxu0 %v50
    %v490 = vpop.f32.mrf.mxu0
    %v491 = vadd.f32 %v282, %v490
    %492 = vmatmul.f32.gmra.mxu0 %v52
    %v493 = vpop.f32.mrf.mxu0
    %v494 = vadd.f32 %v285, %v493
    %495 = vmatmul.f32.gmra.mxu0 %v54
    %v496 = vpop.f32.mrf.mxu0
    %v497 = vadd.f32 %v288, %v496
    %498 = vmatmul.f32.gmra.mxu0 %v56
    %v499 = vpop.f32.mrf.mxu0
    %v500 = vadd.f32 %v291, %v499
    %501 = vmatmul.f32.gmra.mxu0 %v58
    %v502 = vpop.f32.mrf.mxu0
    %v503 = vadd.f32 %v294, %v502
    %504 = vmatmul.f32.gmra.mxu0 %v60
    %v505 = vpop.f32.mrf.mxu0
    %v506 = vadd.f32 %v297, %v505
    %507 = vmatmul.f32.gmra.mxu0 %v62
    %v508 = vpop.f32.mrf.mxu0
    %v509 = vadd.f32 %v300, %v508
    %510 = vmatmul.f32.gmra.mxu0 %v64
    %v511 = vpop.f32.mrf.mxu0
    %v512 = vadd.f32 %v303, %v511
    %513 = vmatmul.f32.gmra.mxu0 %v66
    %v514 = vpop.f32.mrf.mxu0
    %v515 = vadd.f32 %v306, %v514
    %516 = vmatmul.f32.gmra.mxu0 %v68
    %v517 = vpop.f32.mrf.mxu0
    %v518 = vadd.f32 %v309, %v517
    %519 = vmatmul.f32.gmra.mxu0 %v70
    %v520 = vpop.f32.mrf.mxu0
    %v521 = vadd.f32 %v312, %v520
    %522 = vmatmul.f32.gmra.mxu0 %v72
    %v523 = vpop.f32.mrf.mxu0
    %v524 = vadd.f32 %v315, %v523
    %525 = vmatmul.f32.gmra.mxu0 %v74
    %v526 = vpop.f32.mrf.mxu0
    %v527 = vadd.f32 %v318, %v526
    %528 = vmatmul.f32.gmra.mxu0 %v76
    %v529 = vpop.f32.mrf.mxu0
    %v530 = vadd.f32 %v321, %v529
    %531 = vmatmul.f32.gmra.mxu0 %v78
    %v532 = vpop.f32.mrf.mxu0
    %v533 = vadd.f32 %v324, %v532
    %534 = vmatmul.f32.gmra.mxu0 %v80
    %v535 = vpop.f32.mrf.mxu0
    %v536 = vadd.f32 %v327, %v535
    %537 = vmatmul.f32.gmra.mxu0 %v82
    %v538 = vpop.f32.mrf.mxu0
    %v539 = vadd.f32 %v330, %v538
    %540 = vmatmul.f32.gmra.mxu0 %v84
    %v541 = vpop.f32.mrf.mxu0
    %v542 = vadd.f32 %v333, %v541
    %543 = vmatmul.f32.gmra.mxu0 %v86
    %v544 = vpop.f32.mrf.mxu0
    %v545 = vadd.f32 %v336, %v544
    %546 = vmatmul.f32.gmra.mxu0 %v88
    %v547 = vpop.f32.mrf.mxu0
    %v548 = vadd.f32 %v339, %v547
    %549 = vmatmul.f32.gmra.mxu0 %v90
    %v550 = vpop.f32.mrf.mxu0
    %v551 = vadd.f32 %v342, %v550
    %552 = vmatmul.f32.gmra.mxu0 %v92
    %v553 = vpop.f32.mrf.mxu0
    %v554 = vadd.f32 %v345, %v553
    %555 = vmatmul.f32.gmra.mxu0 %v94
    %v556 = vpop.f32.mrf.mxu0
    %v557 = vadd.f32 %v348, %v556
    %558 = vmatmul.f32.gmra.mxu0 %v96
    %v559 = vpop.f32.mrf.mxu0
    %v560 = vadd.f32 %v351, %v559
    %561 = vmatmul.f32.gmra.mxu0 %v98
    %v562 = vpop.f32.mrf.mxu0
    %v563 = vadd.f32 %v354, %v562
    %564 = vmatmul.f32.gmra.mxu0 %v100
    %v565 = vpop.f32.mrf.mxu0
    %v566 = vadd.f32 %v357, %v565
    %567 = vmatmul.f32.gmra.mxu0 %v102
    %v568 = vpop.f32.mrf.mxu0
    %v569 = vadd.f32 %v360, %v568
    %570 = vmatmul.f32.gmra.mxu0 %v104
    %v571 = vpop.f32.mrf.mxu0
    %v572 = vadd.f32 %v363, %v571
    %573 = vmatmul.f32.gmra.mxu0 %v106
    %v574 = vpop.f32.mrf.mxu0
    %v575 = vadd.f32 %v366, %v574
    %576 = vmatmul.f32.gmra.mxu0 %v108
    %v577 = vpop.f32.mrf.mxu0
    %v578 = vadd.f32 %v369, %v577
    %579 = vmatmul.f32.gmra.mxu0 %v110
    %v580 = vpop.f32.mrf.mxu0
    %v581 = vadd.f32 %v372, %v580
    %582 = vmatmul.f32.gmra.mxu0 %v112
    %v583 = vpop.f32.mrf.mxu0
    %v584 = vadd.f32 %v375, %v583
    %585 = vmatmul.f32.gmra.mxu0 %v114
    %v586 = vpop.f32.mrf.mxu0
    %v587 = vadd.f32 %v378, %v586
    %588 = vmatmul.f32.gmra.mxu0 %v116
    %v589 = vpop.f32.mrf.mxu0
    %v590 = vadd.f32 %v381, %v589
    %591 = vmatmul.f32.gmra.mxu0 %v118
    %v592 = vpop.f32.mrf.mxu0
    %v593 = vadd.f32 %v384, %v592
    %594 = vmatmul.f32.gmra.mxu0 %v120
    %v595 = vpop.f32.mrf.mxu0
    %v596 = vadd.f32 %v387, %v595
    %597 = vmatmul.f32.gmra.mxu0 %v122
    %v598 = vpop.f32.mrf.mxu0
    %v599 = vadd.f32 %v390, %v598
    %600 = vmatmul.f32.gmra.mxu0 %v124
    %v601 = vpop.f32.mrf.mxu0
    %v602 = vadd.f32 %v393, %v601
    %603 = vmatmul.f32.gmra.mxu0 %v126
    %v604 = vpop.f32.mrf.mxu0
    %v605 = vadd.f32 %v396, %v604
    %606 = vmatmul.f32.gmra.mxu0 %v128
    %v607 = vpop.f32.mrf.mxu0
    %v608 = vadd.f32 %v399, %v607
    %609 = vmatmul.f32.gmra.mxu0 %v130
    %v610 = vpop.f32.mrf.mxu0
    %v611 = vadd.f32 %v402, %v610
    %612 = vmatmul.f32.gmra.mxu0 %v132
    %v613 = vpop.f32.mrf.mxu0
    %v614 = vadd.f32 %v405, %v613
    %615 = vmatmul.f32.gmra.mxu0 %v134
    %v616 = vpop.f32.mrf.mxu0
    %v617 = vadd.f32 %v408, %v616
    %618 = vmatmul.f32.gmra.mxu0 %v136
    %v619 = vpop.f32.mrf.mxu0
    %v620 = vadd.f32 %v411, %v619
    %621 = vmatmul.f32.gmra.mxu0 %v138
    %v622 = vpop.f32.mrf.mxu0
    %v623 = vadd.f32 %v414, %v622
    %624 = vmatmul.f32.gmra.mxu0 %v140
    %v625 = vpop.f32.mrf.mxu0
    %v626 = vadd.f32 %v417, %v625
    %627 = vmatmul.f32.gmra.mxu0 %v142
    %v628 = vpop.f32.mrf.mxu0
    %v629 = vadd.f32 %v420, %v628
    %630 = vdwg.mxu0
    %631 = vmatpush.xpose.msra.mxu0 %v205
    %632 = vmatpush.xpose.msra.mxu0 %v203
    %633 = vmatpush.xpose.msra.mxu0 %v201
    %634 = vmatpush.xpose.msra.mxu0 %v199
    %635 = vmatpush.xpose.msra.mxu0 %v197
    %636 = vmatpush.xpose.msra.mxu0 %v195
    %637 = vmatpush.xpose.msra.mxu0 %v193
    %638 = vmatpush.xpose.msra.mxu0 %v191
    %639 = vmatpush.xpose.msra.mxu0 %v189
    %640 = vmatpush.xpose.msra.mxu0 %v187
    %641 = vmatpush.xpose.msra.mxu0 %v185
    %642 = vmatpush.xpose.msra.mxu0 %v183
    %643 = vmatpush.xpose.msra.mxu0 %v181
    %644 = vmatpush.xpose.msra.mxu0 %v179
    %645 = vmatpush.xpose.msra.mxu0 %v177
    %646 = vmatpush.xpose.msra.mxu0 %v175
    %647 = vmatmul.f32.gmra.mxu0 %v15
    %v648 = vpop.f32.mrf.mxu0
    %v649 = vadd.f32 %v210, %v648
    %650 = vmatmul.f32.gmra.mxu0 %v17
    %v651 = vpop.f32.mrf.mxu0
    %v652 = vadd.f32 %v210, %v651
    %653 = vmatmul.f32.gmra.mxu0 %v19
    %v654 = vpop.f32.mrf.mxu0
    %v655 = vadd.f32 %v210, %v654
    %656 = vmatmul.f32.gmra.mxu0 %v21
    %v657 = vpop.f32.mrf.mxu0
    %v658 = vadd.f32 %v210, %v657
    %659 = vmatmul.f32.gmra.mxu0 %v23
    %v660 = vpop.f32.mrf.mxu0
    %v661 = vadd.f32 %v210, %v660
    %662 = vmatmul.f32.gmra.mxu0 %v25
    %v663 = vpop.f32.mrf.mxu0
    %v664 = vadd.f32 %v210, %v663
    %665 = vmatmul.f32.gmra.mxu0 %v27
    %v666 = vpop.f32.mrf.mxu0
    %v667 = vadd.f32 %v210, %v666
    %668 = vmatmul.f32.gmra.mxu0 %v29
    %v669 = vpop.f32.mrf.mxu0
    %v670 = vadd.f32 %v210, %v669
    %671 = vmatmul.f32.gmra.mxu0 %v31
    %v672 = vpop.f32.mrf.mxu0
    %v673 = vadd.f32 %v210, %v672
    %674 = vmatmul.f32.gmra.mxu0 %v33
    %v675 = vpop.f32.mrf.mxu0
    %v676 = vadd.f32 %v210, %v675
    %677 = vmatmul.f32.gmra.mxu0 %v35
    %v678 = vpop.f32.mrf.mxu0
    %v679 = vadd.f32 %v210, %v678
    %680 = vmatmul.f32.gmra.mxu0 %v37
    %v681 = vpop.f32.mrf.mxu0
    %v682 = vadd.f32 %v210, %v681
    %683 = vmatmul.f32.gmra.mxu0 %v39
    %v684 = vpop.f32.mrf.mxu0
    %v685 = vadd.f32 %v210, %v684
    %686 = vmatmul.f32.gmra.mxu0 %v41
    %v687 = vpop.f32.mrf.mxu0
    %v688 = vadd.f32 %v210, %v687
    %689 = vmatmul.f32.gmra.mxu0 %v43
    %v690 = vpop.f32.mrf.mxu0
    %v691 = vadd.f32 %v210, %v690
    %692 = vmatmul.f32.gmra.mxu0 %v45
    %v693 = vpop.f32.mrf.mxu0
    %v694 = vadd.f32 %v210, %v693
    %695 = vmatmul.f32.gmra.mxu0 %v47
    %v696 = vpop.f32.mrf.mxu0
    %v697 = vadd.f32 %v210, %v696
    %698 = vmatmul.f32.gmra.mxu0 %v49
    %v699 = vpop.f32.mrf.mxu0
    %v700 = vadd.f32 %v210, %v699
    %701 = vmatmul.f32.gmra.mxu0 %v51
    %v702 = vpop.f32.mrf.mxu0
    %v703 = vadd.f32 %v210, %v702
    %704 = vmatmul.f32.gmra.mxu0 %v53
    %v705 = vpop.f32.mrf.mxu0
    %v706 = vadd.f32 %v210, %v705
    %707 = vmatmul.f32.gmra.mxu0 %v55
    %v708 = vpop.f32.mrf.mxu0
    %v709 = vadd.f32 %v210, %v708
    %710 = vmatmul.f32.gmra.mxu0 %v57
    %v711 = vpop.f32.mrf.mxu0
    %v712 = vadd.f32 %v210, %v711
    %713 = vmatmul.f32.gmra.mxu0 %v59
    %v714 = vpop.f32.mrf.mxu0
    %v715 = vadd.f32 %v210, %v714
    %716 = vmatmul.f32.gmra.mxu0 %v61
    %v717 = vpop.f32.mrf.mxu0
    %v718 = vadd.f32 %v210, %v717
    %719 = vmatmul.f32.gmra.mxu0 %v63
    %v720 = vpop.f32.mrf.mxu0
    %v721 = vadd.f32 %v210, %v720
    %722 = vmatmul.f32.gmra.mxu0 %v65
    %v723 = vpop.f32.mrf.mxu0
    %v724 = vadd.f32 %v210, %v723
    %725 = vmatmul.f32.gmra.mxu0 %v67
    %v726 = vpop.f32.mrf.mxu0
    %v727 = vadd.f32 %v210, %v726
    %728 = vmatmul.f32.gmra.mxu0 %v69
    %v729 = vpop.f32.mrf.mxu0
    %v730 = vadd.f32 %v210, %v729
    %731 = vmatmul.f32.gmra.mxu0 %v71
    %v732 = vpop.f32.mrf.mxu0
    %v733 = vadd.f32 %v210, %v732
    %734 = vmatmul.f32.gmra.mxu0 %v73
    %v735 = vpop.f32.mrf.mxu0
    %v736 = vadd.f32 %v210, %v735
    %737 = vmatmul.f32.gmra.mxu0 %v75
    %v738 = vpop.f32.mrf.mxu0
    %v739 = vadd.f32 %v210, %v738
    %740 = vmatmul.f32.gmra.mxu0 %v77
    %v741 = vpop.f32.mrf.mxu0
    %v742 = vadd.f32 %v210, %v741
    %743 = vmatmul.f32.gmra.mxu0 %v79
    %v744 = vpop.f32.mrf.mxu0
    %v745 = vadd.f32 %v210, %v744
    %746 = vmatmul.f32.gmra.mxu0 %v81
    %v747 = vpop.f32.mrf.mxu0
    %v748 = vadd.f32 %v210, %v747
    %749 = vmatmul.f32.gmra.mxu0 %v83
    %v750 = vpop.f32.mrf.mxu0
    %v751 = vadd.f32 %v210, %v750
    %752 = vmatmul.f32.gmra.mxu0 %v85
    %v753 = vpop.f32.mrf.mxu0
    %v754 = vadd.f32 %v210, %v753
    %755 = vmatmul.f32.gmra.mxu0 %v87
    %v756 = vpop.f32.mrf.mxu0
    %v757 = vadd.f32 %v210, %v756
    %758 = vmatmul.f32.gmra.mxu0 %v89
    %v759 = vpop.f32.mrf.mxu0
    %v760 = vadd.f32 %v210, %v759
    %761 = vmatmul.f32.gmra.mxu0 %v91
    %v762 = vpop.f32.mrf.mxu0
    %v763 = vadd.f32 %v210, %v762
    %764 = vmatmul.f32.gmra.mxu0 %v93
    %v765 = vpop.f32.mrf.mxu0
    %v766 = vadd.f32 %v210, %v765
    %767 = vmatmul.f32.gmra.mxu0 %v95
    %v768 = vpop.f32.mrf.mxu0
    %v769 = vadd.f32 %v210, %v768
    %770 = vmatmul.f32.gmra.mxu0 %v97
    %v771 = vpop.f32.mrf.mxu0
    %v772 = vadd.f32 %v210, %v771
    %773 = vmatmul.f32.gmra.mxu0 %v99
    %v774 = vpop.f32.mrf.mxu0
    %v775 = vadd.f32 %v210, %v774
    %776 = vmatmul.f32.gmra.mxu0 %v101
    %v777 = vpop.f32.mrf.mxu0
    %v778 = vadd.f32 %v210, %v777
    %779 = vmatmul.f32.gmra.mxu0 %v103
    %v780 = vpop.f32.mrf.mxu0
    %v781 = vadd.f32 %v210, %v780
    %782 = vmatmul.f32.gmra.mxu0 %v105
    %v783 = vpop.f32.mrf.mxu0
    %v784 = vadd.f32 %v210, %v783
    %785 = vmatmul.f32.gmra.mxu0 %v107
    %v786 = vpop.f32.mrf.mxu0
    %v787 = vadd.f32 %v210, %v786
    %788 = vmatmul.f32.gmra.mxu0 %v109
    %v789 = vpop.f32.mrf.mxu0
    %v790 = vadd.f32 %v210, %v789
    %791 = vmatmul.f32.gmra.mxu0 %v111
    %v792 = vpop.f32.mrf.mxu0
    %v793 = vadd.f32 %v210, %v792
    %794 = vmatmul.f32.gmra.mxu0 %v113
    %v795 = vpop.f32.mrf.mxu0
    %v796 = vadd.f32 %v210, %v795
    %797 = vmatmul.f32.gmra.mxu0 %v115
    %v798 = vpop.f32.mrf.mxu0
    %v799 = vadd.f32 %v210, %v798
    %800 = vmatmul.f32.gmra.mxu0 %v117
    %v801 = vpop.f32.mrf.mxu0
    %v802 = vadd.f32 %v210, %v801
    %803 = vmatmul.f32.gmra.mxu0 %v119
    %v804 = vpop.f32.mrf.mxu0
    %v805 = vadd.f32 %v210, %v804
    %806 = vmatmul.f32.gmra.mxu0 %v121
    %v807 = vpop.f32.mrf.mxu0
    %v808 = vadd.f32 %v210, %v807
    %809 = vmatmul.f32.gmra.mxu0 %v123
    %v810 = vpop.f32.mrf.mxu0
    %v811 = vadd.f32 %v210, %v810
    %812 = vmatmul.f32.gmra.mxu0 %v125
    %v813 = vpop.f32.mrf.mxu0
    %v814 = vadd.f32 %v210, %v813
    %815 = vmatmul.f32.gmra.mxu0 %v127
    %v816 = vpop.f32.mrf.mxu0
    %v817 = vadd.f32 %v210, %v816
    %818 = vmatmul.f32.gmra.mxu0 %v129
    %v819 = vpop.f32.mrf.mxu0
    %v820 = vadd.f32 %v210, %v819
    %821 = vmatmul.f32.gmra.mxu0 %v131
    %v822 = vpop.f32.mrf.mxu0
    %v823 = vadd.f32 %v210, %v822
    %824 = vmatmul.f32.gmra.mxu0 %v133
    %v825 = vpop.f32.mrf.mxu0
    %v826 = vadd.f32 %v210, %v825
    %827 = vmatmul.f32.gmra.mxu0 %v135
    %v828 = vpop.f32.mrf.mxu0
    %v829 = vadd.f32 %v210, %v828
    %830 = vmatmul.f32.gmra.mxu0 %v137
    %v831 = vpop.f32.mrf.mxu0
    %v832 = vadd.f32 %v210, %v831
    %833 = vmatmul.f32.gmra.mxu0 %v139
    %v834 = vpop.f32.mrf.mxu0
    %v835 = vadd.f32 %v210, %v834
    %836 = vmatmul.f32.gmra.mxu0 %v141
    %v837 = vpop.f32.mrf.mxu0
    %v838 = vadd.f32 %v210, %v837
    %839 = vdwg.mxu0
    %840 = vmatpush.xpose.msra.mxu0 %v206
    %841 = vmatpush.xpose.msra.mxu0 %v204
    %842 = vmatpush.xpose.msra.mxu0 %v202
    %843 = vmatpush.xpose.msra.mxu0 %v200
    %844 = vmatpush.xpose.msra.mxu0 %v198
    %845 = vmatpush.xpose.msra.mxu0 %v196
    %846 = vmatpush.xpose.msra.mxu0 %v194
    %847 = vmatpush.xpose.msra.mxu0 %v192
    %848 = vmatpush.xpose.msra.mxu0 %v190
    %849 = vmatpush.xpose.msra.mxu0 %v188
    %850 = vmatpush.xpose.msra.mxu0 %v186
    %851 = vmatpush.xpose.msra.mxu0 %v184
    %852 = vmatpush.xpose.msra.mxu0 %v182
    %853 = vmatpush.xpose.msra.mxu0 %v180
    %854 = vmatpush.xpose.msra.mxu0 %v178
    %855 = vmatpush.xpose.msra.mxu0 %v176
    %856 = vmatmul.f32.gmra.mxu0 %v16
    %v857 = vpop.f32.mrf.mxu0
    %v858 = vadd.f32 %v649, %v857
    %859 = vmatmul.f32.gmra.mxu0 %v18
    %v860 = vpop.f32.mrf.mxu0
    %v861 = vadd.f32 %v652, %v860
    %862 = vmatmul.f32.gmra.mxu0 %v20
    %v863 = vpop.f32.mrf.mxu0
    %v864 = vadd.f32 %v655, %v863
    %865 = vmatmul.f32.gmra.mxu0 %v22
    %v866 = vpop.f32.mrf.mxu0
    %v867 = vadd.f32 %v658, %v866
    %868 = vmatmul.f32.gmra.mxu0 %v24
    %v869 = vpop.f32.mrf.mxu0
    %v870 = vadd.f32 %v661, %v869
    %871 = vmatmul.f32.gmra.mxu0 %v26
    %v872 = vpop.f32.mrf.mxu0
    %v873 = vadd.f32 %v664, %v872
    %874 = vmatmul.f32.gmra.mxu0 %v28
    %v875 = vpop.f32.mrf.mxu0
    %v876 = vadd.f32 %v667, %v875
    %877 = vmatmul.f32.gmra.mxu0 %v30
    %v878 = vpop.f32.mrf.mxu0
    %v879 = vadd.f32 %v670, %v878
    %880 = vmatmul.f32.gmra.mxu0 %v32
    %v881 = vpop.f32.mrf.mxu0
    %v882 = vadd.f32 %v673, %v881
    %883 = vmatmul.f32.gmra.mxu0 %v34
    %v884 = vpop.f32.mrf.mxu0
    %v885 = vadd.f32 %v676, %v884
    %886 = vmatmul.f32.gmra.mxu0 %v36
    %v887 = vpop.f32.mrf.mxu0
    %v888 = vadd.f32 %v679, %v887
    %889 = vmatmul.f32.gmra.mxu0 %v38
    %v890 = vpop.f32.mrf.mxu0
    %v891 = vadd.f32 %v682, %v890
    %892 = vmatmul.f32.gmra.mxu0 %v40
    %v893 = vpop.f32.mrf.mxu0
    %v894 = vadd.f32 %v685, %v893
    %895 = vmatmul.f32.gmra.mxu0 %v42
    %v896 = vpop.f32.mrf.mxu0
    %v897 = vadd.f32 %v688, %v896
    %898 = vmatmul.f32.gmra.mxu0 %v44
    %v899 = vpop.f32.mrf.mxu0
    %v900 = vadd.f32 %v691, %v899
    %901 = vmatmul.f32.gmra.mxu0 %v46
    %v902 = vpop.f32.mrf.mxu0
    %v903 = vadd.f32 %v694, %v902
    %904 = vmatmul.f32.gmra.mxu0 %v48
    %v905 = vpop.f32.mrf.mxu0
    %v906 = vadd.f32 %v697, %v905
    %907 = vmatmul.f32.gmra.mxu0 %v50
    %v908 = vpop.f32.mrf.mxu0
    %v909 = vadd.f32 %v700, %v908
    %910 = vmatmul.f32.gmra.mxu0 %v52
    %v911 = vpop.f32.mrf.mxu0
    %v912 = vadd.f32 %v703, %v911
    %913 = vmatmul.f32.gmra.mxu0 %v54
    %v914 = vpop.f32.mrf.mxu0
    %v915 = vadd.f32 %v706, %v914
    %916 = vmatmul.f32.gmra.mxu0 %v56
    %v917 = vpop.f32.mrf.mxu0
    %v918 = vadd.f32 %v709, %v917
    %919 = vmatmul.f32.gmra.mxu0 %v58
    %v920 = vpop.f32.mrf.mxu0
    %v921 = vadd.f32 %v712, %v920
    %922 = vmatmul.f32.gmra.mxu0 %v60
    %v923 = vpop.f32.mrf.mxu0
    %v924 = vadd.f32 %v715, %v923
    %925 = vmatmul.f32.gmra.mxu0 %v62
    %v926 = vpop.f32.mrf.mxu0
    %v927 = vadd.f32 %v718, %v926
    %928 = vmatmul.f32.gmra.mxu0 %v64
    %v929 = vpop.f32.mrf.mxu0
    %v930 = vadd.f32 %v721, %v929
    %931 = vmatmul.f32.gmra.mxu0 %v66
    %v932 = vpop.f32.mrf.mxu0
    %v933 = vadd.f32 %v724, %v932
    %934 = vmatmul.f32.gmra.mxu0 %v68
    %v935 = vpop.f32.mrf.mxu0
    %v936 = vadd.f32 %v727, %v935
    %937 = vmatmul.f32.gmra.mxu0 %v70
    %v938 = vpop.f32.mrf.mxu0
    %v939 = vadd.f32 %v730, %v938
    %940 = vmatmul.f32.gmra.mxu0 %v72
    %v941 = vpop.f32.mrf.mxu0
    %v942 = vadd.f32 %v733, %v941
    %943 = vmatmul.f32.gmra.mxu0 %v74
    %v944 = vpop.f32.mrf.mxu0
    %v945 = vadd.f32 %v736, %v944
    %946 = vmatmul.f32.gmra.mxu0 %v76
    %v947 = vpop.f32.mrf.mxu0
    %v948 = vadd.f32 %v739, %v947
    %949 = vmatmul.f32.gmra.mxu0 %v78
    %v950 = vpop.f32.mrf.mxu0
    %v951 = vadd.f32 %v742, %v950
    %952 = vmatmul.f32.gmra.mxu0 %v80
    %v953 = vpop.f32.mrf.mxu0
    %v954 = vadd.f32 %v745, %v953
    %955 = vmatmul.f32.gmra.mxu0 %v82
    %v956 = vpop.f32.mrf.mxu0
    %v957 = vadd.f32 %v748, %v956
    %958 = vmatmul.f32.gmra.mxu0 %v84
    %v959 = vpop.f32.mrf.mxu0
    %v960 = vadd.f32 %v751, %v959
    %961 = vmatmul.f32.gmra.mxu0 %v86
    %v962 = vpop.f32.mrf.mxu0
    %v963 = vadd.f32 %v754, %v962
    %964 = vmatmul.f32.gmra.mxu0 %v88
    %v965 = vpop.f32.mrf.mxu0
    %v966 = vadd.f32 %v757, %v965
    %967 = vmatmul.f32.gmra.mxu0 %v90
    %v968 = vpop.f32.mrf.mxu0
    %v969 = vadd.f32 %v760, %v968
    %970 = vmatmul.f32.gmra.mxu0 %v92
    %v971 = vpop.f32.mrf.mxu0
    %v972 = vadd.f32 %v763, %v971
    %973 = vmatmul.f32.gmra.mxu0 %v94
    %v974 = vpop.f32.mrf.mxu0
    %v975 = vadd.f32 %v766, %v974
    %976 = vmatmul.f32.gmra.mxu0 %v96
    %v977 = vpop.f32.mrf.mxu0
    %v978 = vadd.f32 %v769, %v977
    %979 = vmatmul.f32.gmra.mxu0 %v98
    %v980 = vpop.f32.mrf.mxu0
    %v981 = vadd.f32 %v772, %v980
    %982 = vmatmul.f32.gmra.mxu0 %v100
    %v983 = vpop.f32.mrf.mxu0
    %v984 = vadd.f32 %v775, %v983
    %985 = vmatmul.f32.gmra.mxu0 %v102
    %v986 = vpop.f32.mrf.mxu0
    %v987 = vadd.f32 %v778, %v986
    %988 = vmatmul.f32.gmra.mxu0 %v104
    %v989 = vpop.f32.mrf.mxu0
    %v990 = vadd.f32 %v781, %v989
    %991 = vmatmul.f32.gmra.mxu0 %v106
    %v992 = vpop.f32.mrf.mxu0
    %v993 = vadd.f32 %v784, %v992
    %994 = vmatmul.f32.gmra.mxu0 %v108
    %v995 = vpop.f32.mrf.mxu0
    %v996 = vadd.f32 %v787, %v995
    %997 = vmatmul.f32.gmra.mxu0 %v110
    %v998 = vpop.f32.mrf.mxu0
    %v999 = vadd.f32 %v790, %v998
    %1000 = vmatmul.f32.gmra.mxu0 %v112
    %v1001 = vpop.f32.mrf.mxu0
    %v1002 = vadd.f32 %v793, %v1001
    %1003 = vmatmul.f32.gmra.mxu0 %v114
    %v1004 = vpop.f32.mrf.mxu0
    %v1005 = vadd.f32 %v796, %v1004
    %1006 = vmatmul.f32.gmra.mxu0 %v116
    %v1007 = vpop.f32.mrf.mxu0
    %v1008 = vadd.f32 %v799, %v1007
    %1009 = vmatmul.f32.gmra.mxu0 %v118
    %v1010 = vpop.f32.mrf.mxu0
    %v1011 = vadd.f32 %v802, %v1010
    %1012 = vmatmul.f32.gmra.mxu0 %v120
    %v1013 = vpop.f32.mrf.mxu0
    %v1014 = vadd.f32 %v805, %v1013
    %1015 = vmatmul.f32.gmra.mxu0 %v122
    %v1016 = vpop.f32.mrf.mxu0
    %v1017 = vadd.f32 %v808, %v1016
    %1018 = vmatmul.f32.gmra.mxu0 %v124
    %v1019 = vpop.f32.mrf.mxu0
    %v1020 = vadd.f32 %v811, %v1019
    %1021 = vmatmul.f32.gmra.mxu0 %v126
    %v1022 = vpop.f32.mrf.mxu0
    %v1023 = vadd.f32 %v814, %v1022
    %1024 = vmatmul.f32.gmra.mxu0 %v128
    %v1025 = vpop.f32.mrf.mxu0
    %v1026 = vadd.f32 %v817, %v1025
    %1027 = vmatmul.f32.gmra.mxu0 %v130
    %v1028 = vpop.f32.mrf.mxu0
    %v1029 = vadd.f32 %v820, %v1028
    %1030 = vmatmul.f32.gmra.mxu0 %v132
    %v1031 = vpop.f32.mrf.mxu0
    %v1032 = vadd.f32 %v823, %v1031
    %1033 = vmatmul.f32.gmra.mxu0 %v134
    %v1034 = vpop.f32.mrf.mxu0
    %v1035 = vadd.f32 %v826, %v1034
    %1036 = vmatmul.f32.gmra.mxu0 %v136
    %v1037 = vpop.f32.mrf.mxu0
    %v1038 = vadd.f32 %v829, %v1037
    %1039 = vmatmul.f32.gmra.mxu0 %v138
    %v1040 = vpop.f32.mrf.mxu0
    %v1041 = vadd.f32 %v832, %v1040
    %1042 = vmatmul.f32.gmra.mxu0 %v140
    %v1043 = vpop.f32.mrf.mxu0
    %v1044 = vadd.f32 %v835, %v1043
    %1045 = vmatmul.f32.gmra.mxu0 %v142
    %v1046 = vpop.f32.mrf.mxu0
    %v1047 = vadd.f32 %v838, %v1046
    %1048 = vdwg.mxu0
    %1049 = vst [vmem:[#allocation2] sm:$0xff] %v440
    %1050 = vst [vmem:[#allocation2 + $0x8] sm:$0xff] %v858
    %1051 = vst [vmem:[#allocation2 + $0x10] sm:$0xff] %v443
    %1052 = vst [vmem:[#allocation2 + $0x18] sm:$0xff] %v861
    %1053 = vst [vmem:[#allocation2 + $0x20] sm:$0xff] %v446
    %1054 = vst [vmem:[#allocation2 + $0x28] sm:$0xff] %v864
    %1055 = vst [vmem:[#allocation2 + $0x30] sm:$0xff] %v449
    %1056 = vst [vmem:[#allocation2 + $0x38] sm:$0xff] %v867
    %1057 = vst [vmem:[#allocation2 + $0x40] sm:$0xff] %v452
    %1058 = vst [vmem:[#allocation2 + $0x48] sm:$0xff] %v870
    %1059 = vst [vmem:[#allocation2 + $0x50] sm:$0xff] %v455
    %1060 = vst [vmem:[#allocation2 + $0x58] sm:$0xff] %v873
    %1061 = vst [vmem:[#allocation2 + $0x60] sm:$0xff] %v458
    %1062 = vst [vmem:[#allocation2 + $0x68] sm:$0xff] %v876
    %1063 = vst [vmem:[#allocation2 + $0x70] sm:$0xff] %v461
    %1064 = vst [vmem:[#allocation2 + $0x78] sm:$0xff] %v879
    %1065 = vst [vmem:[#allocation2 + $0x80] sm:$0xff] %v464
    %1066 = vst [vmem:[#allocation2 + $0x88] sm:$0xff] %v882
    %1067 = vst [vmem:[#allocation2 + $0x90] sm:$0xff] %v467
    %1068 = vst [vmem:[#allocation2 + $0x98] sm:$0xff] %v885
    %1069 = vst [vmem:[#allocation2 + $0xa0] sm:$0xff] %v470
    %1070 = vst [vmem:[#allocation2 + $0xa8] sm:$0xff] %v888
    %1071 = vst [vmem:[#allocation2 + $0xb0] sm:$0xff] %v473
    %1072 = vst [vmem:[#allocation2 + $0xb8] sm:$0xff] %v891
    %1073 = vst [vmem:[#allocation2 + $0xc0] sm:$0xff] %v476
    %1074 = vst [vmem:[#allocation2 + $0xc8] sm:$0xff] %v894
    %1075 = vst [vmem:[#allocation2 + $0xd0] sm:$0xff] %v479
    %1076 = vst [vmem:[#allocation2 + $0xd8] sm:$0xff] %v897
    %1077 = vst [vmem:[#allocation2 + $0xe0] sm:$0xff] %v482
    %1078 = vst [vmem:[#allocation2 + $0xe8] sm:$0xff] %v900
    %1079 = vst [vmem:[#allocation2 + $0xf0] sm:$0xff] %v485
    %1080 = vst [vmem:[#allocation2 + $0xf8] sm:$0xff] %v903
    %1081 = vst [vmem:[#allocation2 + $0x100] sm:$0xff] %v488
    %1082 = vst [vmem:[#allocation2 + $0x108] sm:$0xff] %v906
    %1083 = vst [vmem:[#allocation2 + $0x110] sm:$0xff] %v491
    %1084 = vst [vmem:[#allocation2 + $0x118] sm:$0xff] %v909
    %1085 = vst [vmem:[#allocation2 + $0x120] sm:$0xff] %v494
    %1086 = vst [vmem:[#allocation2 + $0x128] sm:$0xff] %v912
    %1087 = vst [vmem:[#allocation2 + $0x130] sm:$0xff] %v497
    %1088 = vst [vmem:[#allocation2 + $0x138] sm:$0xff] %v915
    %1089 = vst [vmem:[#allocation2 + $0x140] sm:$0xff] %v500
    %1090 = vst [vmem:[#allocation2 + $0x148] sm:$0xff] %v918
    %1091 = vst [vmem:[#allocation2 + $0x150] sm:$0xff] %v503
    %1092 = vst [vmem:[#allocation2 + $0x158] sm:$0xff] %v921
    %1093 = vst [vmem:[#allocation2 + $0x160] sm:$0xff] %v506
    %1094 = vst [vmem:[#allocation2 + $0x168] sm:$0xff] %v924
    %1095 = vst [vmem:[#allocation2 + $0x170] sm:$0xff] %v509
    %1096 = vst [vmem:[#allocation2 + $0x178] sm:$0xff] %v927
    %1097 = vst [vmem:[#allocation2 + $0x180] sm:$0xff] %v512
    %1098 = vst [vmem:[#allocation2 + $0x188] sm:$0xff] %v930
    %1099 = vst [vmem:[#allocation2 + $0x190] sm:$0xff] %v515
    %1100 = vst [vmem:[#allocation2 + $0x198] sm:$0xff] %v933
    %1101 = vst [vmem:[#allocation2 + $0x1a0] sm:$0xff] %v518
    %1102 = vst [vmem:[#allocation2 + $0x1a8] sm:$0xff] %v936
    %1103 = vst [vmem:[#allocation2 + $0x1b0] sm:$0xff] %v521
    %1104 = vst [vmem:[#allocation2 + $0x1b8] sm:$0xff] %v939
    %1105 = vst [vmem:[#allocation2 + $0x1c0] sm:$0xff] %v524
    %1106 = vst [vmem:[#allocation2 + $0x1c8] sm:$0xff] %v942
    %1107 = vst [vmem:[#allocation2 + $0x1d0] sm:$0xff] %v527
    %1108 = vst [vmem:[#allocation2 + $0x1d8] sm:$0xff] %v945
    %1109 = vst [vmem:[#allocation2 + $0x1e0] sm:$0xff] %v530
    %1110 = vst [vmem:[#allocation2 + $0x1e8] sm:$0xff] %v948
    %1111 = vst [vmem:[#allocation2 + $0x1f0] sm:$0xff] %v533
    %1112 = vst [vmem:[#allocation2 + $0x1f8] sm:$0xff] %v951
    %1113 = vst [vmem:[#allocation2 + $0x200] sm:$0xff] %v536
    %1114 = vst [vmem:[#allocation2 + $0x208] sm:$0xff] %v954
    %1115 = vst [vmem:[#allocation2 + $0x210] sm:$0xff] %v539
    %1116 = vst [vmem:[#allocation2 + $0x218] sm:$0xff] %v957
    %1117 = vst [vmem:[#allocation2 + $0x220] sm:$0xff] %v542
    %1118 = vst [vmem:[#allocation2 + $0x228] sm:$0xff] %v960
    %1119 = vst [vmem:[#allocation2 + $0x230] sm:$0xff] %v545
    %1120 = vst [vmem:[#allocation2 + $0x238] sm:$0xff] %v963
    %1121 = vst [vmem:[#allocation2 + $0x240] sm:$0xff] %v548
    %1122 = vst [vmem:[#allocation2 + $0x248] sm:$0xff] %v966
    %1123 = vst [vmem:[#allocation2 + $0x250] sm:$0xff] %v551
    %1124 = vst [vmem:[#allocation2 + $0x258] sm:$0xff] %v969
    %1125 = vst [vmem:[#allocation2 + $0x260] sm:$0xff] %v554
    %1126 = vst [vmem:[#allocation2 + $0x268] sm:$0xff] %v972
    %1127 = vst [vmem:[#allocation2 + $0x270] sm:$0xff] %v557
    %1128 = vst [vmem:[#allocation2 + $0x278] sm:$0xff] %v975
    %1129 = vst [vmem:[#allocation2 + $0x280] sm:$0xff] %v560
    %1130 = vst [vmem:[#allocation2 + $0x288] sm:$0xff] %v978
    %1131 = vst [vmem:[#allocation2 + $0x290] sm:$0xff] %v563
    %1132 = vst [vmem:[#allocation2 + $0x298] sm:$0xff] %v981
    %1133 = vst [vmem:[#allocation2 + $0x2a0] sm:$0xff] %v566
    %1134 = vst [vmem:[#allocation2 + $0x2a8] sm:$0xff] %v984
    %1135 = vst [vmem:[#allocation2 + $0x2b0] sm:$0xff] %v569
    %1136 = vst [vmem:[#allocation2 + $0x2b8] sm:$0xff] %v987
    %1137 = vst [vmem:[#allocation2 + $0x2c0] sm:$0xff] %v572
    %1138 = vst [vmem:[#allocation2 + $0x2c8] sm:$0xff] %v990
    %1139 = vst [vmem:[#allocation2 + $0x2d0] sm:$0xff] %v575
    %1140 = vst [vmem:[#allocation2 + $0x2d8] sm:$0xff] %v993
    %1141 = vst [vmem:[#allocation2 + $0x2e0] sm:$0xff] %v578
    %1142 = vst [vmem:[#allocation2 + $0x2e8] sm:$0xff] %v996
    %1143 = vst [vmem:[#allocation2 + $0x2f0] sm:$0xff] %v581
    %1144 = vst [vmem:[#allocation2 + $0x2f8] sm:$0xff] %v999
    %1145 = vst [vmem:[#allocation2 + $0x300] sm:$0xff] %v584
    %1146 = vst [vmem:[#allocation2 + $0x308] sm:$0xff] %v1002
    %1147 = vst [vmem:[#allocation2 + $0x310] sm:$0xff] %v587
    %1148 = vst [vmem:[#allocation2 + $0x318] sm:$0xff] %v1005
    %1149 = vst [vmem:[#allocation2 + $0x320] sm:$0xff] %v590
    %1150 = vst [vmem:[#allocation2 + $0x328] sm:$0xff] %v1008
    %1151 = vst [vmem:[#allocation2 + $0x330] sm:$0xff] %v593
    %1152 = vst [vmem:[#allocation2 + $0x338] sm:$0xff] %v1011
    %1153 = vst [vmem:[#allocation2 + $0x340] sm:$0xff] %v596
    %1154 = vst [vmem:[#allocation2 + $0x348] sm:$0xff] %v1014
    %1155 = vst [vmem:[#allocation2 + $0x350] sm:$0xff] %v599
    %1156 = vst [vmem:[#allocation2 + $0x358] sm:$0xff] %v1017
    %1157 = vst [vmem:[#allocation2 + $0x360] sm:$0xff] %v602
    %1158 = vst [vmem:[#allocation2 + $0x368] sm:$0xff] %v1020
    %1159 = vst [vmem:[#allocation2 + $0x370] sm:$0xff] %v605
    %1160 = vst [vmem:[#allocation2 + $0x378] sm:$0xff] %v1023
    %1161 = vst [vmem:[#allocation2 + $0x380] sm:$0xff] %v608
    %1162 = vst [vmem:[#allocation2 + $0x388] sm:$0xff] %v1026
    %1163 = vst [vmem:[#allocation2 + $0x390] sm:$0xff] %v611
    %1164 = vst [vmem:[#allocation2 + $0x398] sm:$0xff] %v1029
    %1165 = vst [vmem:[#allocation2 + $0x3a0] sm:$0xff] %v614
    %1166 = vst [vmem:[#allocation2 + $0x3a8] sm:$0xff] %v1032
    %1167 = vst [vmem:[#allocation2 + $0x3b0] sm:$0xff] %v617
    %1168 = vst [vmem:[#allocation2 + $0x3b8] sm:$0xff] %v1035
    %1169 = vst [vmem:[#allocation2 + $0x3c0] sm:$0xff] %v620
    %1170 = vst [vmem:[#allocation2 + $0x3c8] sm:$0xff] %v1038
    %1171 = vst [vmem:[#allocation2 + $0x3d0] sm:$0xff] %v623
    %1172 = vst [vmem:[#allocation2 + $0x3d8] sm:$0xff] %v1041
    %1173 = vst [vmem:[#allocation2 + $0x3e0] sm:$0xff] %v626
    %1174 = vst [vmem:[#allocation2 + $0x3e8] sm:$0xff] %v1044
    %1175 = vst [vmem:[#allocation2 + $0x3f0] sm:$0xff] %v629
    %1176 = vst [vmem:[#allocation2 + $0x3f8] sm:$0xff] %v1047
    // Predicated region
    $region14: #{attention_forward.5} parent=1 // pred_check
      _
    $region15: #{attention_forward.5} parent=1 // pred_check_branch
      %1178 = sbr.rel (0) target = $region17
    $region16: #{attention_forward.5} parent=1 // pred_region
      %1180 = vsyncadd [#allocation3], 0
      %s1181 = sshll.u32 [#allocation2], 4
      %s1182 = int_to_ptr.vmem [resolvable:$true] %s1181
      %s1183 = sshll.u32 %s3, 4
      %s1184 = int_to_ptr.hbm [resolvable:$true] %s1183
      %1189 = dma.vmem_to_hbm [thread:$0]  %s1182, 16384, %s1184, [#allocation3], 256, 256, 16
    $region17: #{attention_forward.5} parent=1 // pred_fallthru
      _
    // Predicated region
    $region18: #{attention_forward.5} parent=1 // pred_check
      _
    $region19: #{attention_forward.5} parent=1 // pred_check_branch
      %1191 = sbr.rel (0) target = $region21
    $region20: #{attention_forward.5} parent=1 // pred_region
      %1193 = dma.done [#allocation3], 16384
    $region21: #{attention_forward.5} parent=1 // pred_fallthru
      _
    %1194 = vsyncpa [#allocation3], 1

// kernel: attention_forward.3
$region0: #{attention_forward.3}
  #allocation0 [shape = 'u32[]', space=smem, size = 0x4, offset = 0x4, fixed_abs, tag = 'smem constant byte address 0x4 - core index']
  #allocation1 [shape = 'u32[72,128]{1,0:T(1,128)}', space=vmem, size = 0x9000, scoped, tag = 'internal scratch']
  %s0 = inlined_call_operand.vmem [shape: f32[512,256], index: 0, kind: input, shape index: {}]
  %s1 = inlined_call_operand.vmem [shape: f32[768,256], index: 1, kind: input, shape index: {}]
  %s2 = inlined_call_operand.vmem [shape: f32[512,768], index: 2, kind: output, shape index: {}]
  %s3 = sld [smem:[#allocation0]]
  $region60: #{attention_forward.3} parent=0
    _
  %s5 = ssub.s32 1, %s3
  %s6 = scalar_select 0, %s5, %s3
  $region1: #{attention_forward.3} parent=0
    #allocation2 [shape = 'u8[1572864]{0}', space=vmem, size = 0x180000, scoped, tag = 'output window, operand 0']
    loop: start=0, step=1, limit=4
    $region2: #{attention_forward.3} parent=1 // loop_pre_header
      _
    $region3: #{attention_forward.3} parent=1 // loop_header
      %s8 = sphi 0, %s12
      %p9 = scmp.ge.s32.totalorder %s8, 4
      %s15 = sphi 0, %s27
      %s16 = sphi 0, %s23
      %s17 = sphi 0, %s15
      %s18 = sphi 0, %s16
      %s19 = sphi 0, %s17
      %s20 = sphi 0, %s18
      %s30 = sphi 0, %s32
      %s33 = sphi 0, %s30
      %s34 = sphi 0, %s33
      %s50 = sphi 0, %s34
      %s56 = sphi 0, %s58
      %s59 = sphi 0, %s56
      %s60 = sphi 0, %s59
      %s76 = sphi 0, %s60
      %s84 = sphi 0, %s86
      %s87 = sphi 0, %s84
      %s88 = sphi 0, %s87
      %s104 = sphi 0, %s88
    $region4: #{attention_forward.3} parent=1 // loop_header_branch
      %11 = sbr.rel (%p9) target = $region8
    $region5: #{attention_forward.3} parent=1 // loop_body
      %s13 = ssub.s32 %s8, 1
      %s14 = ssub.s32 %s8, 2
      %s21 = sadd.s32 1, %s16
      %p22 = scmp.ge.s32.totalorder %s21, 2
      %s23 = scalar_select %p22, 0, %s21
      %s24 = sadd.s32 1, %s15
      %s25 = scalar_select %p22, %s24, %s15
      %p26 = scmp.ge.s32.totalorder %s25, 1
      %s27 = scalar_select %p26, 0, %s25
      %s28 = ssub.s32 %s15, %s27
      %p29 = scmp.eq.s32.totalorder %s28, 0
      %s31 = sadd.s32 %s30, 1
      %s32 = scalar_select %p29, %s30, %s31
      %p35 = pneg %p29
      %p36 = scmp.eq.s32.totalorder %s8, 1
      %p37 = por %p35, %p36
      %p38 = scmp.ne.s32.totalorder %s30, %s33
      %p39 = scmp.eq.s32.totalorder %s8, 0
      %p40 = por %p38, %p39
      %p41 = scmp.ne.s32.totalorder %s30, %s33
      %p42 = scmp.eq.s32.totalorder %s13, 1
      %p43 = por %p41, %p42
      %p44 = scmp.ne.s32.totalorder %s33, %s34
      %p45 = scmp.eq.s32.totalorder %s13, 0
      %p46 = por %p44, %p45
      %p47 = scmp.ne.s32.totalorder %s33, %s34
      %p48 = scmp.eq.s32.totalorder %s14, 1
      %p49 = por %p47, %p48
      %p51 = scmp.ne.s32.totalorder %s34, %s50
      %p52 = scmp.eq.s32.totalorder %s14, 0
      %p53 = por %p51, %p52
      %s54 = ssub.s32 %s16, %s23
      %p55 = scmp.eq.s32.totalorder %s54, 0
      %s57 = sadd.s32 %s56, 1
      %s58 = scalar_select %p55, %s56, %s57
      %p61 = pneg %p55
      %p62 = scmp.eq.s32.totalorder %s8, 1
      %p63 = por %p61, %p62
      %p64 = scmp.ne.s32.totalorder %s56, %s59
      %p65 = scmp.eq.s32.totalorder %s8, 0
      %p66 = por %p64, %p65
      %p67 = scmp.ne.s32.totalorder %s56, %s59
      %p68 = scmp.eq.s32.totalorder %s13, 1
      %p69 = por %p67, %p68
      %p70 = scmp.ne.s32.totalorder %s59, %s60
      %p71 = scmp.eq.s32.totalorder %s13, 0
      %p72 = por %p70, %p71
      %p73 = scmp.ne.s32.totalorder %s59, %s60
      %p74 = scmp.eq.s32.totalorder %s14, 1
      %p75 = por %p73, %p74
      %p77 = scmp.ne.s32.totalorder %s60, %s76
      %p78 = scmp.eq.s32.totalorder %s14, 0
      %p79 = por %p77, %p78
      %s80 = ssub.s32 %s15, %s27
      %s81 = ssub.s32 %s16, %s23
      %s82 = sor.u32 %s80, %s81
      %p83 = scmp.eq.s32.totalorder %s82, 0
      %s85 = sadd.s32 %s84, 1
      %s86 = scalar_select %p83, %s84, %s85
      %p89 = pneg %p83
      %p90 = scmp.eq.s32.totalorder %s8, 1
      %p91 = por %p89, %p90
      %p92 = scmp.ne.s32.totalorder %s84, %s87
      %p93 = scmp.eq.s32.totalorder %s8, 0
      %p94 = por %p92, %p93
      %p95 = scmp.ne.s32.totalorder %s84, %s87
      %p96 = scmp.eq.s32.totalorder %s13, 1
      %p97 = por %p95, %p96
      %p98 = scmp.ne.s32.totalorder %s87, %s88
      %p99 = scmp.eq.s32.totalorder %s13, 0
      %p100 = por %p98, %p99
      %p101 = scmp.ne.s32.totalorder %s87, %s88
      %p102 = scmp.eq.s32.totalorder %s14, 1
      %p103 = por %p101, %p102
      %p105 = scmp.ne.s32.totalorder %s88, %s104
      %p106 = scmp.eq.s32.totalorder %s14, 0
      %p107 = por %p105, %p106
      %p108 = scmp.le.s32.totalorder 1, %s8
      %p109 = scmp.lt.s32.totalorder %s8, 3
      %p110 = pnand %p108, %p109
      %p111 = pneg %p110
      // Predicated region
      $region9: #{attention_forward.3} parent=5 // pred_check
        _
      $region10: #{attention_forward.3} parent=5 // pred_check_branch
        %113 = sbr.rel (%p110) target = $region12
      $region11: #{attention_forward.3} parent=5 // pred_region
        %s114 = ssub.s32 %s8, 1
        // Predicated region
        $region13: #{attention_forward.3} parent=11 // pred_check
          %p115 = pneg %p46
        $region14: #{attention_forward.3} parent=11 // pred_check_branch
          %117 = sbr.rel (%p115) target = $region16
        $region15: #{attention_forward.3} parent=11 // pred_region
          %s118 = smul.u32 64, %s17
          %p119 = scmp.lt.s32.totalorder %s118, 63
          %s120 = scalar_select %p119, %s118, 63
          %s121 = smul.addr %s120, 2
          %s122 = smul.addr %s121, 8
          %s123 = scalar_lea.vmem %s0, %s122
          %s124 = smul.u32 64, %s17
        $region16: #{attention_forward.3} parent=11 // pred_fallthru
          _
      $region12: #{attention_forward.3} parent=5 // pred_fallthru
        _
      %p125 = scmp.lt.s32.totalorder %s8, 2
      // Predicated region
      $region17: #{attention_forward.3} parent=5 // pred_check
        %p126 = pneg %p125
      $region18: #{attention_forward.3} parent=5 // pred_check_branch
        %128 = sbr.rel (%p126) target = $region20
      $region19: #{attention_forward.3} parent=5 // pred_region
        // Predicated region
        $region21: #{attention_forward.3} parent=19 // pred_check
          %p129 = pneg %p66
        $region22: #{attention_forward.3} parent=19 // pred_check_branch
          %131 = sbr.rel (%p129) target = $region24
        $region23: #{attention_forward.3} parent=19 // pred_region
          %s132 = smul.u32 48, %s16
          %p133 = scmp.lt.s32.totalorder %s132, 95
          %s134 = scalar_select %p133, %s132, 95
          %s135 = smul.addr %s134, 2
          %s136 = smul.addr %s135, 8
          %s137 = scalar_lea.vmem %s1, %s136
          %s138 = smul.u32 48, %s16
        $region24: #{attention_forward.3} parent=19 // pred_fallthru
          _
      $region20: #{attention_forward.3} parent=5 // pred_fallthru
        _
      %p139 = scmp.le.s32.totalorder 1, %s8
      %p140 = scmp.lt.s32.totalorder %s8, 3
      %p141 = pnand %p139, %p140
      %p142 = pneg %p141
      // Predicated region
      $region25: #{attention_forward.3} parent=5 // pred_check
        _
      $region26: #{attention_forward.3} parent=5 // pred_check_branch
        %144 = sbr.rel (%p141) target = $region28
      $region27: #{attention_forward.3} parent=5 // pred_region
        %s145 = ssub.s32 %s8, 1
        %s146 = smul.u32 64, %s17
        %p147 = scmp.lt.s32.totalorder %s146, 63
        %s148 = scalar_select %p147, %s146, 63
        %s149 = smul.addr %s148, 2
        %s150 = smul.addr %s149, 8
        %s151 = scalar_lea.vmem %s0, %s150
        %p152 = pneg %p46
        %p153 = pneg %p43
        %s154 = smul.u32 48, %s18
        %p155 = scmp.lt.s32.totalorder %s154, 95
        %s156 = scalar_select %p155, %s154, 95
        %s157 = smul.addr %s156, 2
        %s158 = smul.addr %s157, 8
        %s159 = scalar_lea.vmem %s1, %s158
        %p160 = pneg %p72
        %p161 = pneg %p69
        %p162 = pneg %p100
        %p163 = pneg %p97
        %s164 = sand.u32 %s87, 1
        %s165 = sand.u32 %s87, 1
        %s166 = smul.addr %s165, 1536
        %s167 = scalar_lea.vmem [#allocation2], %s166
        %s168 = smul.u32 64, %s17
        %p169 = scmp.lt.s32.totalorder %s168, 63
        %s170 = scalar_select %p169, %s168, 63
        %s171 = smul.addr %s170, 2
        %s172 = smul.addr %s171, 8
        %s173 = scalar_lea.vmem %s0, %s172
        %s174 = smul.u32 64, %s17
        %s175 = smul.u32 48, %s18
        %p176 = scmp.lt.s32.totalorder %s175, 95
        %s177 = scalar_select %p176, %s175, 95
        %s178 = smul.addr %s177, 2
        %s179 = smul.addr %s178, 8
        %s180 = scalar_lea.vmem %s1, %s179
        %s181 = smul.u32 48, %s18
        %s182 = smul.u32 64, %s17
        %s183 = smul.u32 3, %s18
        %v184 = vld [vmem:[%s173] sm:$0xff]
        %v185 = vld [vmem:[%s173 + $0x8] sm:$0xff]
        %v186 = vld [vmem:[%s173 + $0x10] sm:$0xff]
        %v187 = vld [vmem:[%s173 + $0x18] sm:$0xff]
        %v188 = vld [vmem:[%s173 + $0x20] sm:$0xff]
        %v189 = vld [vmem:[%s173 + $0x28] sm:$0xff]
        %v190 = vld [vmem:[%s173 + $0x30] sm:$0xff]
        %v191 = vld [vmem:[%s173 + $0x38] sm:$0xff]
        %v192 = vld [vmem:[%s173 + $0x40] sm:$0xff]
        %v193 = vld [vmem:[%s173 + $0x48] sm:$0xff]
        %v194 = vld [vmem:[%s173 + $0x50] sm:$0xff]
        %v195 = vld [vmem:[%s173 + $0x58] sm:$0xff]
        %v196 = vld [vmem:[%s173 + $0x60] sm:$0xff]
        %v197 = vld [vmem:[%s173 + $0x68] sm:$0xff]
        %v198 = vld [vmem:[%s173 + $0x70] sm:$0xff]
        %v199 = vld [vmem:[%s173 + $0x78] sm:$0xff]
        %v200 = vld [vmem:[%s173 + $0x80] sm:$0xff]
        %v201 = vld [vmem:[%s173 + $0x88] sm:$0xff]
        %v202 = vld [vmem:[%s173 + $0x90] sm:$0xff]
        %v203 = vld [vmem:[%s173 + $0x98] sm:$0xff]
        %v204 = vld [vmem:[%s173 + $0xa0] sm:$0xff]
        %v205 = vld [vmem:[%s173 + $0xa8] sm:$0xff]
        %v206 = vld [vmem:[%s173 + $0xb0] sm:$0xff]
        %v207 = vld [vmem:[%s173 + $0xb8] sm:$0xff]
        %v208 = vld [vmem:[%s173 + $0xc0] sm:$0xff]
        %v209 = vld [vmem:[%s173 + $0xc8] sm:$0xff]
        %v210 = vld [vmem:[%s173 + $0xd0] sm:$0xff]
        %v211 = vld [vmem:[%s173 + $0xd8] sm:$0xff]
        %v212 = vld [vmem:[%s173 + $0xe0] sm:$0xff]
        %v213 = vld [vmem:[%s173 + $0xe8] sm:$0xff]
        %v214 = vld [vmem:[%s173 + $0xf0] sm:$0xff]
        %v215 = vld [vmem:[%s173 + $0xf8] sm:$0xff]
        %v216 = vld [vmem:[%s173 + $0x100] sm:$0xff]
        %v217 = vld [vmem:[%s173 + $0x108] sm:$0xff]
        %v218 = vld [vmem:[%s173 + $0x110] sm:$0xff]
        %v219 = vld [vmem:[%s173 + $0x118] sm:$0xff]
        %v220 = vld [vmem:[%s173 + $0x120] sm:$0xff]
        %v221 = vld [vmem:[%s173 + $0x128] sm:$0xff]
        %v222 = vld [vmem:[%s173 + $0x130] sm:$0xff]
        %v223 = vld [vmem:[%s173 + $0x138] sm:$0xff]
        %v224 = vld [vmem:[%s173 + $0x140] sm:$0xff]
        %v225 = vld [vmem:[%s173 + $0x148] sm:$0xff]
        %v226 = vld [vmem:[%s173 + $0x150] sm:$0xff]
        %v227 = vld [vmem:[%s173 + $0x158] sm:$0xff]
        %v228 = vld [vmem:[%s173 + $0x160] sm:$0xff]
        %v229 = vld [vmem:[%s173 + $0x168] sm:$0xff]
        %v230 = vld [vmem:[%s173 + $0x170] sm:$0xff]
        %v231 = vld [vmem:[%s173 + $0x178] sm:$0xff]
        %v232 = vld [vmem:[%s173 + $0x180] sm:$0xff]
        %v233 = vld [vmem:[%s173 + $0x188] sm:$0xff]
        %v234 = vld [vmem:[%s173 + $0x190] sm:$0xff]
        %v235 = vld [vmem:[%s173 + $0x198] sm:$0xff]
        %v236 = vld [vmem:[%s173 + $0x1a0] sm:$0xff]
        %v237 = vld [vmem:[%s173 + $0x1a8] sm:$0xff]
        %v238 = vld [vmem:[%s173 + $0x1b0] sm:$0xff]
        %v239 = vld [vmem:[%s173 + $0x1b8] sm:$0xff]
        %v240 = vld [vmem:[%s173 + $0x1c0] sm:$0xff]
        %v241 = vld [vmem:[%s173 + $0x1c8] sm:$0xff]
        %v242 = vld [vmem:[%s173 + $0x1d0] sm:$0xff]
        %v243 = vld [vmem:[%s173 + $0x1d8] sm:$0xff]
        %v244 = vld [vmem:[%s173 + $0x1e0] sm:$0xff]
        %v245 = vld [vmem:[%s173 + $0x1e8] sm:$0xff]
        %v246 = vld [vmem:[%s173 + $0x1f0] sm:$0xff]
        %v247 = vld [vmem:[%s173 + $0x1f8] sm:$0xff]
        %v248 = vld [vmem:[%s173 + $0x200] sm:$0xff]
        %v249 = vld [vmem:[%s173 + $0x208] sm:$0xff]
        %v250 = vld [vmem:[%s173 + $0x210] sm:$0xff]
        %v251 = vld [vmem:[%s173 + $0x218] sm:$0xff]
        %v252 = vld [vmem:[%s173 + $0x220] sm:$0xff]
        %v253 = vld [vmem:[%s173 + $0x228] sm:$0xff]
        %v254 = vld [vmem:[%s173 + $0x230] sm:$0xff]
        %v255 = vld [vmem:[%s173 + $0x238] sm:$0xff]
        %v256 = vld [vmem:[%s173 + $0x240] sm:$0xff]
        %v257 = vld [vmem:[%s173 + $0x248] sm:$0xff]
        %v258 = vld [vmem:[%s173 + $0x250] sm:$0xff]
        %v259 = vld [vmem:[%s173 + $0x258] sm:$0xff]
        %v260 = vld [vmem:[%s173 + $0x260] sm:$0xff]
        %v261 = vld [vmem:[%s173 + $0x268] sm:$0xff]
        %v262 = vld [vmem:[%s173 + $0x270] sm:$0xff]
        %v263 = vld [vmem:[%s173 + $0x278] sm:$0xff]
        %v264 = vld [vmem:[%s173 + $0x280] sm:$0xff]
        %v265 = vld [vmem:[%s173 + $0x288] sm:$0xff]
        %v266 = vld [vmem:[%s173 + $0x290] sm:$0xff]
        %v267 = vld [vmem:[%s173 + $0x298] sm:$0xff]
        %v268 = vld [vmem:[%s173 + $0x2a0] sm:$0xff]
        %v269 = vld [vmem:[%s173 + $0x2a8] sm:$0xff]
        %v270 = vld [vmem:[%s173 + $0x2b0] sm:$0xff]
        %v271 = vld [vmem:[%s173 + $0x2b8] sm:$0xff]
        %v272 = vld [vmem:[%s173 + $0x2c0] sm:$0xff]
        %v273 = vld [vmem:[%s173 + $0x2c8] sm:$0xff]
        %v274 = vld [vmem:[%s173 + $0x2d0] sm:$0xff]
        %v275 = vld [vmem:[%s173 + $0x2d8] sm:$0xff]
        %v276 = vld [vmem:[%s173 + $0x2e0] sm:$0xff]
        %v277 = vld [vmem:[%s173 + $0x2e8] sm:$0xff]
        %v278 = vld [vmem:[%s173 + $0x2f0] sm:$0xff]
        %v279 = vld [vmem:[%s173 + $0x2f8] sm:$0xff]
        %v280 = vld [vmem:[%s173 + $0x300] sm:$0xff]
        %v281 = vld [vmem:[%s173 + $0x308] sm:$0xff]
        %v282 = vld [vmem:[%s173 + $0x310] sm:$0xff]
        %v283 = vld [vmem:[%s173 + $0x318] sm:$0xff]
        %v284 = vld [vmem:[%s173 + $0x320] sm:$0xff]
        %v285 = vld [vmem:[%s173 + $0x328] sm:$0xff]
        %v286 = vld [vmem:[%s173 + $0x330] sm:$0xff]
        %v287 = vld [vmem:[%s173 + $0x338] sm:$0xff]
        %v288 = vld [vmem:[%s173 + $0x340] sm:$0xff]
        %v289 = vld [vmem:[%s173 + $0x348] sm:$0xff]
        %v290 = vld [vmem:[%s173 + $0x350] sm:$0xff]
        %v291 = vld [vmem:[%s173 + $0x358] sm:$0xff]
        %v292 = vld [vmem:[%s173 + $0x360] sm:$0xff]
        %v293 = vld [vmem:[%s173 + $0x368] sm:$0xff]
        %v294 = vld [vmem:[%s173 + $0x370] sm:$0xff]
        %v295 = vld [vmem:[%s173 + $0x378] sm:$0xff]
        %v296 = vld [vmem:[%s173 + $0x380] sm:$0xff]
        %v297 = vld [vmem:[%s173 + $0x388] sm:$0xff]
        %v298 = vld [vmem:[%s173 + $0x390] sm:$0xff]
        %v299 = vld [vmem:[%s173 + $0x398] sm:$0xff]
        %v300 = vld [vmem:[%s173 + $0x3a0] sm:$0xff]
        %v301 = vld [vmem:[%s173 + $0x3a8] sm:$0xff]
        %v302 = vld [vmem:[%s173 + $0x3b0] sm:$0xff]
        %v303 = vld [vmem:[%s173 + $0x3b8] sm:$0xff]
        %v304 = vld [vmem:[%s173 + $0x3c0] sm:$0xff]
        %v305 = vld [vmem:[%s173 + $0x3c8] sm:$0xff]
        %v306 = vld [vmem:[%s173 + $0x3d0] sm:$0xff]
        %v307 = vld [vmem:[%s173 + $0x3d8] sm:$0xff]
        %v308 = vld [vmem:[%s173 + $0x3e0] sm:$0xff]
        %v309 = vld [vmem:[%s173 + $0x3e8] sm:$0xff]
        %v310 = vld [vmem:[%s173 + $0x3f0] sm:$0xff]
        %v311 = vld [vmem:[%s173 + $0x3f8] sm:$0xff]
        %v312 = vld [vmem:[%s180] sm:$0xff]
        %v313 = vld [vmem:[%s180 + $0x8] sm:$0xff]
        %v314 = vld [vmem:[%s180 + $0x10] sm:$0xff]
        %v315 = vld [vmem:[%s180 + $0x18] sm:$0xff]
        %v316 = vld [vmem:[%s180 + $0x20] sm:$0xff]
        %v317 = vld [vmem:[%s180 + $0x28] sm:$0xff]
        %v318 = vld [vmem:[%s180 + $0x30] sm:$0xff]
        %v319 = vld [vmem:[%s180 + $0x38] sm:$0xff]
        %v320 = vld [vmem:[%s180 + $0x40] sm:$0xff]
        %v321 = vld [vmem:[%s180 + $0x48] sm:$0xff]
        %v322 = vld [vmem:[%s180 + $0x50] sm:$0xff]
        %v323 = vld [vmem:[%s180 + $0x58] sm:$0xff]
        %v324 = vld [vmem:[%s180 + $0x60] sm:$0xff]
        %v325 = vld [vmem:[%s180 + $0x68] sm:$0xff]
        %v326 = vld [vmem:[%s180 + $0x70] sm:$0xff]
        %v327 = vld [vmem:[%s180 + $0x78] sm:$0xff]
        %v328 = vld [vmem:[%s180 + $0x80] sm:$0xff]
        %v329 = vld [vmem:[%s180 + $0x88] sm:$0xff]
        %v330 = vld [vmem:[%s180 + $0x90] sm:$0xff]
        %v331 = vld [vmem:[%s180 + $0x98] sm:$0xff]
        %v332 = vld [vmem:[%s180 + $0xa0] sm:$0xff]
        %v333 = vld [vmem:[%s180 + $0xa8] sm:$0xff]
        %v334 = vld [vmem:[%s180 + $0xb0] sm:$0xff]
        %v335 = vld [vmem:[%s180 + $0xb8] sm:$0xff]
        %v336 = vld [vmem:[%s180 + $0xc0] sm:$0xff]
        %v337 = vld [vmem:[%s180 + $0xc8] sm:$0xff]
        %v338 = vld [vmem:[%s180 + $0xd0] sm:$0xff]
        %v339 = vld [vmem:[%s180 + $0xd8] sm:$0xff]
        %v340 = vld [vmem:[%s180 + $0xe0] sm:$0xff]
        %v341 = vld [vmem:[%s180 + $0xe8] sm:$0xff]
        %v342 = vld [vmem:[%s180 + $0xf0] sm:$0xff]
        %v343 = vld [vmem:[%s180 + $0xf8] sm:$0xff]
        %v344 = vld [vmem:[%s180 + $0x100] sm:$0xff]
        %v345 = vld [vmem:[%s180 + $0x108] sm:$0xff]
        %v346 = vld [vmem:[%s180 + $0x110] sm:$0xff]
        %v347 = vld [vmem:[%s180 + $0x118] sm:$0xff]
        %v348 = vld [vmem:[%s180 + $0x120] sm:$0xff]
        %v349 = vld [vmem:[%s180 + $0x128] sm:$0xff]
        %v350 = vld [vmem:[%s180 + $0x130] sm:$0xff]
        %v351 = vld [vmem:[%s180 + $0x138] sm:$0xff]
        %v352 = vld [vmem:[%s180 + $0x140] sm:$0xff]
        %v353 = vld [vmem:[%s180 + $0x148] sm:$0xff]
        %v354 = vld [vmem:[%s180 + $0x150] sm:$0xff]
        %v355 = vld [vmem:[%s180 + $0x158] sm:$0xff]
        %v356 = vld [vmem:[%s180 + $0x160] sm:$0xff]
        %v357 = vld [vmem:[%s180 + $0x168] sm:$0xff]
        %v358 = vld [vmem:[%s180 + $0x170] sm:$0xff]
        %v359 = vld [vmem:[%s180 + $0x178] sm:$0xff]
        %v360 = vld [vmem:[%s180 + $0x180] sm:$0xff]
        %v361 = vld [vmem:[%s180 + $0x188] sm:$0xff]
        %v362 = vld [vmem:[%s180 + $0x190] sm:$0xff]
        %v363 = vld [vmem:[%s180 + $0x198] sm:$0xff]
        %v364 = vld [vmem:[%s180 + $0x1a0] sm:$0xff]
        %v365 = vld [vmem:[%s180 + $0x1a8] sm:$0xff]
        %v366 = vld [vmem:[%s180 + $0x1b0] sm:$0xff]
        %v367 = vld [vmem:[%s180 + $0x1b8] sm:$0xff]
        %v368 = vld [vmem:[%s180 + $0x1c0] sm:$0xff]
        %v369 = vld [vmem:[%s180 + $0x1c8] sm:$0xff]
        %v370 = vld [vmem:[%s180 + $0x1d0] sm:$0xff]
        %v371 = vld [vmem:[%s180 + $0x1d8] sm:$0xff]
        %v372 = vld [vmem:[%s180 + $0x1e0] sm:$0xff]
        %v373 = vld [vmem:[%s180 + $0x1e8] sm:$0xff]
        %v374 = vld [vmem:[%s180 + $0x1f0] sm:$0xff]
        %v375 = vld [vmem:[%s180 + $0x1f8] sm:$0xff]
        %v376 = vld [vmem:[%s180 + $0x200] sm:$0xff]
        %v377 = vld [vmem:[%s180 + $0x208] sm:$0xff]
        %v378 = vld [vmem:[%s180 + $0x210] sm:$0xff]
        %v379 = vld [vmem:[%s180 + $0x218] sm:$0xff]
        %v380 = vld [vmem:[%s180 + $0x220] sm:$0xff]
        %v381 = vld [vmem:[%s180 + $0x228] sm:$0xff]
        %v382 = vld [vmem:[%s180 + $0x230] sm:$0xff]
        %v383 = vld [vmem:[%s180 + $0x238] sm:$0xff]
        %v384 = vld [vmem:[%s180 + $0x240] sm:$0xff]
        %v385 = vld [vmem:[%s180 + $0x248] sm:$0xff]
        %v386 = vld [vmem:[%s180 + $0x250] sm:$0xff]
        %v387 = vld [vmem:[%s180 + $0x258] sm:$0xff]
        %v388 = vld [vmem:[%s180 + $0x260] sm:$0xff]
        %v389 = vld [vmem:[%s180 + $0x268] sm:$0xff]
        %v390 = vld [vmem:[%s180 + $0x270] sm:$0xff]
        %v391 = vld [vmem:[%s180 + $0x278] sm:$0xff]
        %v392 = vld [vmem:[%s180 + $0x280] sm:$0xff]
        %v393 = vld [vmem:[%s180 + $0x288] sm:$0xff]
        %v394 = vld [vmem:[%s180 + $0x290] sm:$0xff]
        %v395 = vld [vmem:[%s180 + $0x298] sm:$0xff]
        %v396 = vld [vmem:[%s180 + $0x2a0] sm:$0xff]
        %v397 = vld [vmem:[%s180 + $0x2a8] sm:$0xff]
        %v398 = vld [vmem:[%s180 + $0x2b0] sm:$0xff]
        %v399 = vld [vmem:[%s180 + $0x2b8] sm:$0xff]
        %v400 = vld [vmem:[%s180 + $0x2c0] sm:$0xff]
        %v401 = vld [vmem:[%s180 + $0x2c8] sm:$0xff]
        %v402 = vld [vmem:[%s180 + $0x2d0] sm:$0xff]
        %v403 = vld [vmem:[%s180 + $0x2d8] sm:$0xff]
        %v404 = vld [vmem:[%s180 + $0x2e0] sm:$0xff]
        %v405 = vld [vmem:[%s180 + $0x2e8] sm:$0xff]
        %v406 = vld [vmem:[%s180 + $0x2f0] sm:$0xff]
        %v407 = vld [vmem:[%s180 + $0x2f8] sm:$0xff]
        %408 = vmatpush.xpose.msra.mxu0 %v342
        %409 = vmatpush.xpose.msra.mxu0 %v340
        %410 = vmatpush.xpose.msra.mxu0 %v338
        %411 = vmatpush.xpose.msra.mxu0 %v336
        %412 = vmatpush.xpose.msra.mxu0 %v334
        %413 = vmatpush.xpose.msra.mxu0 %v332
        %414 = vmatpush.xpose.msra.mxu0 %v330
        %415 = vmatpush.xpose.msra.mxu0 %v328
        %416 = vmatpush.xpose.msra.mxu0 %v326
        %417 = vmatpush.xpose.msra.mxu0 %v324
        %418 = vmatpush.xpose.msra.mxu0 %v322
        %419 = vmatpush.xpose.msra.mxu0 %v320
        %420 = vmatpush.xpose.msra.mxu0 %v318
        %421 = vmatpush.xpose.msra.mxu0 %v316
        %422 = vmatpush.xpose.msra.mxu0 %v314
        %423 = vmatpush.xpose.msra.mxu0 %v312
        %424 = vmatmul.f32.gmra.mxu0 %v184
        %v425 = vpop.f32.mrf.mxu0
        %v426 = vadd.f32 0.0, %v425
        %427 = vmatmul.f32.gmra.mxu0 %v186
        %v428 = vpop.f32.mrf.mxu0
        %v429 = vadd.f32 0.0, %v428
        %430 = vmatmul.f32.gmra.mxu0 %v188
        %v431 = vpop.f32.mrf.mxu0
        %v432 = vadd.f32 0.0, %v431
        %433 = vmatmul.f32.gmra.mxu0 %v190
        %v434 = vpop.f32.mrf.mxu0
        %v435 = vadd.f32 0.0, %v434
        %436 = vmatmul.f32.gmra.mxu0 %v192
        %v437 = vpop.f32.mrf.mxu0
        %v438 = vadd.f32 0.0, %v437
        %439 = vmatmul.f32.gmra.mxu0 %v194
        %v440 = vpop.f32.mrf.mxu0
        %v441 = vadd.f32 0.0, %v440
        %442 = vmatmul.f32.gmra.mxu0 %v196
        %v443 = vpop.f32.mrf.mxu0
        %v444 = vadd.f32 0.0, %v443
        %445 = vmatmul.f32.gmra.mxu0 %v198
        %v446 = vpop.f32.mrf.mxu0
        %v447 = vadd.f32 0.0, %v446
        %448 = vmatmul.f32.gmra.mxu0 %v200
        %v449 = vpop.f32.mrf.mxu0
        %v450 = vadd.f32 0.0, %v449
        %451 = vmatmul.f32.gmra.mxu0 %v202
        %v452 = vpop.f32.mrf.mxu0
        %v453 = vadd.f32 0.0, %v452
        %454 = vmatmul.f32.gmra.mxu0 %v204
        %v455 = vpop.f32.mrf.mxu0
        %v456 = vadd.f32 0.0, %v455
        %457 = vmatmul.f32.gmra.mxu0 %v206
        %v458 = vpop.f32.mrf.mxu0
        %v459 = vadd.f32 0.0, %v458
        %460 = vmatmul.f32.gmra.mxu0 %v208
        %v461 = vpop.f32.mrf.mxu0
        %v462 = vadd.f32 0.0, %v461
        %463 = vmatmul.f32.gmra.mxu0 %v210
        %v464 = vpop.f32.mrf.mxu0
        %v465 = vadd.f32 0.0, %v464
        %466 = vmatmul.f32.gmra.mxu0 %v212
        %v467 = vpop.f32.mrf.mxu0
        %v468 = vadd.f32 0.0, %v467
        %469 = vmatmul.f32.gmra.mxu0 %v214
        %v470 = vpop.f32.mrf.mxu0
        %v471 = vadd.f32 0.0, %v470
        %472 = vmatmul.f32.gmra.mxu0 %v216
        %v473 = vpop.f32.mrf.mxu0
        %v474 = vadd.f32 0.0, %v473
        %475 = vmatmul.f32.gmra.mxu0 %v218
        %v476 = vpop.f32.mrf.mxu0
        %v477 = vadd.f32 0.0, %v476
        %478 = vmatmul.f32.gmra.mxu0 %v220
        %v479 = vpop.f32.mrf.mxu0
        %v480 = vadd.f32 0.0, %v479
        %481 = vmatmul.f32.gmra.mxu0 %v222
        %v482 = vpop.f32.mrf.mxu0
        %v483 = vadd.f32 0.0, %v482
        %484 = vmatmul.f32.gmra.mxu0 %v224
        %v485 = vpop.f32.mrf.mxu0
        %v486 = vadd.f32 0.0, %v485
        %487 = vmatmul.f32.gmra.mxu0 %v226
        %v488 = vpop.f32.mrf.mxu0
        %v489 = vadd.f32 0.0, %v488
        %490 = vmatmul.f32.gmra.mxu0 %v228
        %v491 = vpop.f32.mrf.mxu0
        %v492 = vadd.f32 0.0, %v491
        %493 = vmatmul.f32.gmra.mxu0 %v230
        %v494 = vpop.f32.mrf.mxu0
        %v495 = vadd.f32 0.0, %v494
        %496 = vmatmul.f32.gmra.mxu0 %v232
        %v497 = vpop.f32.mrf.mxu0
        %v498 = vadd.f32 0.0, %v497
        %499 = vmatmul.f32.gmra.mxu0 %v234
        %v500 = vpop.f32.mrf.mxu0
        %v501 = vadd.f32 0.0, %v500
        %502 = vmatmul.f32.gmra.mxu0 %v236
        %v503 = vpop.f32.mrf.mxu0
        %v504 = vadd.f32 0.0, %v503
        %505 = vmatmul.f32.gmra.mxu0 %v238
        %v506 = vpop.f32.mrf.mxu0
        %v507 = vadd.f32 0.0, %v506
        %508 = vmatmul.f32.gmra.mxu0 %v240
        %v509 = vpop.f32.mrf.mxu0
        %v510 = vadd.f32 0.0, %v509
        %511 = vmatmul.f32.gmra.mxu0 %v242
        %v512 = vpop.f32.mrf.mxu0
        %v513 = vadd.f32 0.0, %v512
        %514 = vmatmul.f32.gmra.mxu0 %v244
        %v515 = vpop.f32.mrf.mxu0
        %v516 = vadd.f32 0.0, %v515
        %517 = vmatmul.f32.gmra.mxu0 %v246
        %v518 = vpop.f32.mrf.mxu0
        %v519 = vadd.f32 0.0, %v518
        %520 = vmatmul.f32.gmra.mxu0 %v248
        %v521 = vpop.f32.mrf.mxu0
        %v522 = vadd.f32 0.0, %v521
        %523 = vmatmul.f32.gmra.mxu0 %v250
        %v524 = vpop.f32.mrf.mxu0
        %v525 = vadd.f32 0.0, %v524
        %526 = vmatmul.f32.gmra.mxu0 %v252
        %v527 = vpop.f32.mrf.mxu0
        %v528 = vadd.f32 0.0, %v527
        %529 = vmatmul.f32.gmra.mxu0 %v254
        %v530 = vpop.f32.mrf.mxu0
        %v531 = vadd.f32 0.0, %v530
        %532 = vmatmul.f32.gmra.mxu0 %v256
        %v533 = vpop.f32.mrf.mxu0
        %v534 = vadd.f32 0.0, %v533
        %535 = vmatmul.f32.gmra.mxu0 %v258
        %v536 = vpop.f32.mrf.mxu0
        %v537 = vadd.f32 0.0, %v536
        %538 = vmatmul.f32.gmra.mxu0 %v260
        %v539 = vpop.f32.mrf.mxu0
        %v540 = vadd.f32 0.0, %v539
        %541 = vmatmul.f32.gmra.mxu0 %v262
        %v542 = vpop.f32.mrf.mxu0
        %v543 = vadd.f32 0.0, %v542
        %544 = vmatmul.f32.gmra.mxu0 %v264
        %v545 = vpop.f32.mrf.mxu0
        %v546 = vadd.f32 0.0, %v545
        %547 = vmatmul.f32.gmra.mxu0 %v266
        %v548 = vpop.f32.mrf.mxu0
        %v549 = vadd.f32 0.0, %v548
        %550 = vmatmul.f32.gmra.mxu0 %v268
        %v551 = vpop.f32.mrf.mxu0
        %v552 = vadd.f32 0.0, %v551
        %553 = vmatmul.f32.gmra.mxu0 %v270
        %v554 = vpop.f32.mrf.mxu0
        %v555 = vadd.f32 0.0, %v554
        %556 = vmatmul.f32.gmra.mxu0 %v272
        %v557 = vpop.f32.mrf.mxu0
        %v558 = vadd.f32 0.0, %v557
        %559 = vmatmul.f32.gmra.mxu0 %v274
        %v560 = vpop.f32.mrf.mxu0
        %v561 = vadd.f32 0.0, %v560
        %562 = vmatmul.f32.gmra.mxu0 %v276
        %v563 = vpop.f32.mrf.mxu0
        %v564 = vadd.f32 0.0, %v563
        %565 = vmatmul.f32.gmra.mxu0 %v278
        %v566 = vpop.f32.mrf.mxu0
        %v567 = vadd.f32 0.0, %v566
        %568 = vmatmul.f32.gmra.mxu0 %v280
        %v569 = vpop.f32.mrf.mxu0
        %v570 = vadd.f32 0.0, %v569
        %571 = vmatmul.f32.gmra.mxu0 %v282
        %v572 = vpop.f32.mrf.mxu0
        %v573 = vadd.f32 0.0, %v572
        %574 = vmatmul.f32.gmra.mxu0 %v284
        %v575 = vpop.f32.mrf.mxu0
        %v576 = vadd.f32 0.0, %v575
        %577 = vmatmul.f32.gmra.mxu0 %v286
        %v578 = vpop.f32.mrf.mxu0
        %v579 = vadd.f32 0.0, %v578
        %580 = vmatmul.f32.gmra.mxu0 %v288
        %v581 = vpop.f32.mrf.mxu0
        %v582 = vadd.f32 0.0, %v581
        %583 = vmatmul.f32.gmra.mxu0 %v290
        %v584 = vpop.f32.mrf.mxu0
        %v585 = vadd.f32 0.0, %v584
        %586 = vmatmul.f32.gmra.mxu0 %v292
        %v587 = vpop.f32.mrf.mxu0
        %v588 = vadd.f32 0.0, %v587
        %589 = vmatmul.f32.gmra.mxu0 %v294
        %v590 = vpop.f32.mrf.mxu0
        %v591 = vadd.f32 0.0, %v590
        %592 = vmatmul.f32.gmra.mxu0 %v296
        %v593 = vpop.f32.mrf.mxu0
        %v594 = vadd.f32 0.0, %v593
        %595 = vmatmul.f32.gmra.mxu0 %v298
        %v596 = vpop.f32.mrf.mxu0
        %v597 = vadd.f32 0.0, %v596
        %598 = vmatmul.f32.gmra.mxu0 %v300
        %v599 = vpop.f32.mrf.mxu0
        %v600 = vadd.f32 0.0, %v599
        %601 = vmatmul.f32.gmra.mxu0 %v302
        %v602 = vpop.f32.mrf.mxu0
        %v603 = vadd.f32 0.0, %v602
        %604 = vmatmul.f32.gmra.mxu0 %v304
        %v605 = vpop.f32.mrf.mxu0
        %v606 = vadd.f32 0.0, %v605
        %607 = vmatmul.f32.gmra.mxu0 %v306
        %v608 = vpop.f32.mrf.mxu0
        %v609 = vadd.f32 0.0, %v608
        %610 = vmatmul.f32.gmra.mxu0 %v308
        %v611 = vpop.f32.mrf.mxu0
        %v612 = vadd.f32 0.0, %v611
        %613 = vmatmul.f32.gmra.mxu0 %v310
        %v614 = vpop.f32.mrf.mxu0
        %v615 = vadd.f32 0.0, %v614
        %616 = vdwg.mxu0
        %617 = vmatpush.xpose.msra.mxu0 %v343
        %618 = vmatpush.xpose.msra.mxu0 %v341
        %619 = vmatpush.xpose.msra.mxu0 %v339
        %620 = vmatpush.xpose.msra.mxu0 %v337
        %621 = vmatpush.xpose.msra.mxu0 %v335
        %622 = vmatpush.xpose.msra.mxu0 %v333
        %623 = vmatpush.xpose.msra.mxu0 %v331
        %624 = vmatpush.xpose.msra.mxu0 %v329
        %625 = vmatpush.xpose.msra.mxu0 %v327
        %626 = vmatpush.xpose.msra.mxu0 %v325
        %627 = vmatpush.xpose.msra.mxu0 %v323
        %628 = vmatpush.xpose.msra.mxu0 %v321
        %629 = vmatpush.xpose.msra.mxu0 %v319
        %630 = vmatpush.xpose.msra.mxu0 %v317
        %631 = vmatpush.xpose.msra.mxu0 %v315
        %632 = vmatpush.xpose.msra.mxu0 %v313
        %633 = vmatmul.f32.gmra.mxu0 %v185
        %v634 = vpop.f32.mrf.mxu0
        %v635 = vadd.f32 %v426, %v634
        %636 = vmatmul.f32.gmra.mxu0 %v187
        %v637 = vpop.f32.mrf.mxu0
        %v638 = vadd.f32 %v429, %v637
        %639 = vmatmul.f32.gmra.mxu0 %v189
        %v640 = vpop.f32.mrf.mxu0
        %v641 = vadd.f32 %v432, %v640
        %642 = vmatmul.f32.gmra.mxu0 %v191
        %v643 = vpop.f32.mrf.mxu0
        %v644 = vadd.f32 %v435, %v643
        %645 = vmatmul.f32.gmra.mxu0 %v193
        %v646 = vpop.f32.mrf.mxu0
        %v647 = vadd.f32 %v438, %v646
        %648 = vmatmul.f32.gmra.mxu0 %v195
        %v649 = vpop.f32.mrf.mxu0
        %v650 = vadd.f32 %v441, %v649
        %651 = vmatmul.f32.gmra.mxu0 %v197
        %v652 = vpop.f32.mrf.mxu0
        %v653 = vadd.f32 %v444, %v652
        %654 = vmatmul.f32.gmra.mxu0 %v199
        %v655 = vpop.f32.mrf.mxu0
        %v656 = vadd.f32 %v447, %v655
        %657 = vmatmul.f32.gmra.mxu0 %v201
        %v658 = vpop.f32.mrf.mxu0
        %v659 = vadd.f32 %v450, %v658
        %660 = vmatmul.f32.gmra.mxu0 %v203
        %v661 = vpop.f32.mrf.mxu0
        %v662 = vadd.f32 %v453, %v661
        %663 = vmatmul.f32.gmra.mxu0 %v205
        %v664 = vpop.f32.mrf.mxu0
        %v665 = vadd.f32 %v456, %v664
        %666 = vmatmul.f32.gmra.mxu0 %v207
        %v667 = vpop.f32.mrf.mxu0
        %v668 = vadd.f32 %v459, %v667
        %669 = vmatmul.f32.gmra.mxu0 %v209
        %v670 = vpop.f32.mrf.mxu0
        %v671 = vadd.f32 %v462, %v670
        %672 = vmatmul.f32.gmra.mxu0 %v211
        %v673 = vpop.f32.mrf.mxu0
        %v674 = vadd.f32 %v465, %v673
        %675 = vmatmul.f32.gmra.mxu0 %v213
        %v676 = vpop.f32.mrf.mxu0
        %v677 = vadd.f32 %v468, %v676
        %678 = vmatmul.f32.gmra.mxu0 %v215
        %v679 = vpop.f32.mrf.mxu0
        %v680 = vadd.f32 %v471, %v679
        %681 = vmatmul.f32.gmra.mxu0 %v217
        %v682 = vpop.f32.mrf.mxu0
        %v683 = vadd.f32 %v474, %v682
        %684 = vmatmul.f32.gmra.mxu0 %v219
        %v685 = vpop.f32.mrf.mxu0
        %v686 = vadd.f32 %v477, %v685
        %687 = vmatmul.f32.gmra.mxu0 %v221
        %v688 = vpop.f32.mrf.mxu0
        %v689 = vadd.f32 %v480, %v688
        %690 = vmatmul.f32.gmra.mxu0 %v223
        %v691 = vpop.f32.mrf.mxu0
        %v692 = vadd.f32 %v483, %v691
        %693 = vmatmul.f32.gmra.mxu0 %v225
        %v694 = vpop.f32.mrf.mxu0
        %v695 = vadd.f32 %v486, %v694
        %696 = vmatmul.f32.gmra.mxu0 %v227
        %v697 = vpop.f32.mrf.mxu0
        %v698 = vadd.f32 %v489, %v697
        %699 = vmatmul.f32.gmra.mxu0 %v229
        %v700 = vpop.f32.mrf.mxu0
        %v701 = vadd.f32 %v492, %v700
        %702 = vmatmul.f32.gmra.mxu0 %v231
        %v703 = vpop.f32.mrf.mxu0
        %v704 = vadd.f32 %v495, %v703
        %705 = vmatmul.f32.gmra.mxu0 %v233
        %v706 = vpop.f32.mrf.mxu0
        %v707 = vadd.f32 %v498, %v706
        %708 = vmatmul.f32.gmra.mxu0 %v235
        %v709 = vpop.f32.mrf.mxu0
        %v710 = vadd.f32 %v501, %v709
        %711 = vmatmul.f32.gmra.mxu0 %v237
        %v712 = vpop.f32.mrf.mxu0
        %v713 = vadd.f32 %v504, %v712
        %714 = vmatmul.f32.gmra.mxu0 %v239
        %v715 = vpop.f32.mrf.mxu0
        %v716 = vadd.f32 %v507, %v715
        %717 = vmatmul.f32.gmra.mxu0 %v241
        %v718 = vpop.f32.mrf.mxu0
        %v719 = vadd.f32 %v510, %v718
        %720 = vmatmul.f32.gmra.mxu0 %v243
        %v721 = vpop.f32.mrf.mxu0
        %v722 = vadd.f32 %v513, %v721
        %723 = vmatmul.f32.gmra.mxu0 %v245
        %v724 = vpop.f32.mrf.mxu0
        %v725 = vadd.f32 %v516, %v724
        %726 = vmatmul.f32.gmra.mxu0 %v247
        %v727 = vpop.f32.mrf.mxu0
        %v728 = vadd.f32 %v519, %v727
        %729 = vmatmul.f32.gmra.mxu0 %v249
        %v730 = vpop.f32.mrf.mxu0
        %v731 = vadd.f32 %v522, %v730
        %732 = vmatmul.f32.gmra.mxu0 %v251
        %v733 = vpop.f32.mrf.mxu0
        %v734 = vadd.f32 %v525, %v733
        %735 = vmatmul.f32.gmra.mxu0 %v253
        %v736 = vpop.f32.mrf.mxu0
        %v737 = vadd.f32 %v528, %v736
        %738 = vmatmul.f32.gmra.mxu0 %v255
        %v739 = vpop.f32.mrf.mxu0
        %v740 = vadd.f32 %v531, %v739
        %741 = vmatmul.f32.gmra.mxu0 %v257
        %v742 = vpop.f32.mrf.mxu0
        %v743 = vadd.f32 %v534, %v742
        %744 = vmatmul.f32.gmra.mxu0 %v259
        %v745 = vpop.f32.mrf.mxu0
        %v746 = vadd.f32 %v537, %v745
        %747 = vmatmul.f32.gmra.mxu0 %v261
        %v748 = vpop.f32.mrf.mxu0
        %v749 = vadd.f32 %v540, %v748
        %750 = vmatmul.f32.gmra.mxu0 %v263
        %v751 = vpop.f32.mrf.mxu0
        %v752 = vadd.f32 %v543, %v751
        %753 = vmatmul.f32.gmra.mxu0 %v265
        %v754 = vpop.f32.mrf.mxu0
        %v755 = vadd.f32 %v546, %v754
        %756 = vmatmul.f32.gmra.mxu0 %v267
        %v757 = vpop.f32.mrf.mxu0
        %v758 = vadd.f32 %v549, %v757
        %759 = vmatmul.f32.gmra.mxu0 %v269
        %v760 = vpop.f32.mrf.mxu0
        %v761 = vadd.f32 %v552, %v760
        %762 = vmatmul.f32.gmra.mxu0 %v271
        %v763 = vpop.f32.mrf.mxu0
        %v764 = vadd.f32 %v555, %v763
        %765 = vmatmul.f32.gmra.mxu0 %v273
        %v766 = vpop.f32.mrf.mxu0
        %v767 = vadd.f32 %v558, %v766
        %768 = vmatmul.f32.gmra.mxu0 %v275
        %v769 = vpop.f32.mrf.mxu0
        %v770 = vadd.f32 %v561, %v769
        %771 = vmatmul.f32.gmra.mxu0 %v277
        %v772 = vpop.f32.mrf.mxu0
        %v773 = vadd.f32 %v564, %v772
        %774 = vmatmul.f32.gmra.mxu0 %v279
        %v775 = vpop.f32.mrf.mxu0
        %v776 = vadd.f32 %v567, %v775
        %777 = vmatmul.f32.gmra.mxu0 %v281
        %v778 = vpop.f32.mrf.mxu0
        %v779 = vadd.f32 %v570, %v778
        %780 = vmatmul.f32.gmra.mxu0 %v283
        %v781 = vpop.f32.mrf.mxu0
        %v782 = vadd.f32 %v573, %v781
        %783 = vmatmul.f32.gmra.mxu0 %v285
        %v784 = vpop.f32.mrf.mxu0
        %v785 = vadd.f32 %v576, %v784
        %786 = vmatmul.f32.gmra.mxu0 %v287
        %v787 = vpop.f32.mrf.mxu0
        %v788 = vadd.f32 %v579, %v787
        %789 = vmatmul.f32.gmra.mxu0 %v289
        %v790 = vpop.f32.mrf.mxu0
        %v791 = vadd.f32 %v582, %v790
        %792 = vmatmul.f32.gmra.mxu0 %v291
        %v793 = vpop.f32.mrf.mxu0
        %v794 = vadd.f32 %v585, %v793
        %795 = vmatmul.f32.gmra.mxu0 %v293
        %v796 = vpop.f32.mrf.mxu0
        %v797 = vadd.f32 %v588, %v796
        %798 = vmatmul.f32.gmra.mxu0 %v295
        %v799 = vpop.f32.mrf.mxu0
        %v800 = vadd.f32 %v591, %v799
        %801 = vmatmul.f32.gmra.mxu0 %v297
        %v802 = vpop.f32.mrf.mxu0
        %v803 = vadd.f32 %v594, %v802
        %804 = vmatmul.f32.gmra.mxu0 %v299
        %v805 = vpop.f32.mrf.mxu0
        %v806 = vadd.f32 %v597, %v805
        %807 = vmatmul.f32.gmra.mxu0 %v301
        %v808 = vpop.f32.mrf.mxu0
        %v809 = vadd.f32 %v600, %v808
        %810 = vmatmul.f32.gmra.mxu0 %v303
        %v811 = vpop.f32.mrf.mxu0
        %v812 = vadd.f32 %v603, %v811
        %813 = vmatmul.f32.gmra.mxu0 %v305
        %v814 = vpop.f32.mrf.mxu0
        %v815 = vadd.f32 %v606, %v814
        %816 = vmatmul.f32.gmra.mxu0 %v307
        %v817 = vpop.f32.mrf.mxu0
        %v818 = vadd.f32 %v609, %v817
        %819 = vmatmul.f32.gmra.mxu0 %v309
        %v820 = vpop.f32.mrf.mxu0
        %v821 = vadd.f32 %v612, %v820
        %822 = vmatmul.f32.gmra.mxu0 %v311
        %v823 = vpop.f32.mrf.mxu0
        %v824 = vadd.f32 %v615, %v823
        %825 = vdwg.mxu0
        %826 = vmatpush.xpose.msra.mxu0 %v374
        %827 = vmatpush.xpose.msra.mxu0 %v372
        %828 = vmatpush.xpose.msra.mxu0 %v370
        %829 = vmatpush.xpose.msra.mxu0 %v368
        %830 = vmatpush.xpose.msra.mxu0 %v366
        %831 = vmatpush.xpose.msra.mxu0 %v364
        %832 = vmatpush.xpose.msra.mxu0 %v362
        %833 = vmatpush.xpose.msra.mxu0 %v360
        %834 = vmatpush.xpose.msra.mxu0 %v358
        %835 = vmatpush.xpose.msra.mxu0 %v356
        %836 = vmatpush.xpose.msra.mxu0 %v354
        %837 = vmatpush.xpose.msra.mxu0 %v352
        %838 = vmatpush.xpose.msra.mxu0 %v350
        %839 = vmatpush.xpose.msra.mxu0 %v348
        %840 = vmatpush.xpose.msra.mxu0 %v346
        %841 = vmatpush.xpose.msra.mxu0 %v344
        %842 = vmatmul.f32.gmra.mxu0 %v184
        %v843 = vpop.f32.mrf.mxu0
        %v844 = vadd.f32 0.0, %v843
        %845 = vmatmul.f32.gmra.mxu0 %v186
        %v846 = vpop.f32.mrf.mxu0
        %v847 = vadd.f32 0.0, %v846
        %848 = vmatmul.f32.gmra.mxu0 %v188
        %v849 = vpop.f32.mrf.mxu0
        %v850 = vadd.f32 0.0, %v849
        %851 = vmatmul.f32.gmra.mxu0 %v190
        %v852 = vpop.f32.mrf.mxu0
        %v853 = vadd.f32 0.0, %v852
        %854 = vmatmul.f32.gmra.mxu0 %v192
        %v855 = vpop.f32.mrf.mxu0
        %v856 = vadd.f32 0.0, %v855
        %857 = vmatmul.f32.gmra.mxu0 %v194
        %v858 = vpop.f32.mrf.mxu0
        %v859 = vadd.f32 0.0, %v858
        %860 = vmatmul.f32.gmra.mxu0 %v196
        %v861 = vpop.f32.mrf.mxu0
        %v862 = vadd.f32 0.0, %v861
        %863 = vmatmul.f32.gmra.mxu0 %v198
        %v864 = vpop.f32.mrf.mxu0
        %v865 = vadd.f32 0.0, %v864
        %866 = vmatmul.f32.gmra.mxu0 %v200
        %v867 = vpop.f32.mrf.mxu0
        %v868 = vadd.f32 0.0, %v867
        %869 = vmatmul.f32.gmra.mxu0 %v202
        %v870 = vpop.f32.mrf.mxu0
        %v871 = vadd.f32 0.0, %v870
        %872 = vmatmul.f32.gmra.mxu0 %v204
        %v873 = vpop.f32.mrf.mxu0
        %v874 = vadd.f32 0.0, %v873
        %875 = vmatmul.f32.gmra.mxu0 %v206
        %v876 = vpop.f32.mrf.mxu0
        %v877 = vadd.f32 0.0, %v876
        %878 = vmatmul.f32.gmra.mxu0 %v208
        %v879 = vpop.f32.mrf.mxu0
        %v880 = vadd.f32 0.0, %v879
        %881 = vmatmul.f32.gmra.mxu0 %v210
        %v882 = vpop.f32.mrf.mxu0
        %v883 = vadd.f32 0.0, %v882
        %884 = vmatmul.f32.gmra.mxu0 %v212
        %v885 = vpop.f32.mrf.mxu0
        %v886 = vadd.f32 0.0, %v885
        %887 = vmatmul.f32.gmra.mxu0 %v214
        %v888 = vpop.f32.mrf.mxu0
        %v889 = vadd.f32 0.0, %v888
        %890 = vmatmul.f32.gmra.mxu0 %v216
        %v891 = vpop.f32.mrf.mxu0
        %v892 = vadd.f32 0.0, %v891
        %893 = vmatmul.f32.gmra.mxu0 %v218
        %v894 = vpop.f32.mrf.mxu0
        %v895 = vadd.f32 0.0, %v894
        %896 = vmatmul.f32.gmra.mxu0 %v220
        %v897 = vpop.f32.mrf.mxu0
        %v898 = vadd.f32 0.0, %v897
        %899 = vmatmul.f32.gmra.mxu0 %v222
        %v900 = vpop.f32.mrf.mxu0
        %v901 = vadd.f32 0.0, %v900
        %902 = vmatmul.f32.gmra.mxu0 %v224
        %v903 = vpop.f32.mrf.mxu0
        %v904 = vadd.f32 0.0, %v903
        %905 = vmatmul.f32.gmra.mxu0 %v226
        %v906 = vpop.f32.mrf.mxu0
        %v907 = vadd.f32 0.0, %v906
        %908 = vmatmul.f32.gmra.mxu0 %v228
        %v909 = vpop.f32.mrf.mxu0
        %v910 = vadd.f32 0.0, %v909
        %911 = vmatmul.f32.gmra.mxu0 %v230
        %v912 = vpop.f32.mrf.mxu0
        %v913 = vadd.f32 0.0, %v912
        %914 = vmatmul.f32.gmra.mxu0 %v232
        %v915 = vpop.f32.mrf.mxu0
        %v916 = vadd.f32 0.0, %v915
        %917 = vmatmul.f32.gmra.mxu0 %v234
        %v918 = vpop.f32.mrf.mxu0
        %v919 = vadd.f32 0.0, %v918
        %920 = vmatmul.f32.gmra.mxu0 %v236
        %v921 = vpop.f32.mrf.mxu0
        %v922 = vadd.f32 0.0, %v921
        %923 = vmatmul.f32.gmra.mxu0 %v238
        %v924 = vpop.f32.mrf.mxu0
        %v925 = vadd.f32 0.0, %v924
        %926 = vmatmul.f32.gmra.mxu0 %v240
        %v927 = vpop.f32.mrf.mxu0
        %v928 = vadd.f32 0.0, %v927
        %929 = vmatmul.f32.gmra.mxu0 %v242
        %v930 = vpop.f32.mrf.mxu0
        %v931 = vadd.f32 0.0, %v930
        %932 = vmatmul.f32.gmra.mxu0 %v244
        %v933 = vpop.f32.mrf.mxu0
        %v934 = vadd.f32 0.0, %v933
        %935 = vmatmul.f32.gmra.mxu0 %v246
        %v936 = vpop.f32.mrf.mxu0
        %v937 = vadd.f32 0.0, %v936
        %938 = vmatmul.f32.gmra.mxu0 %v248
        %v939 = vpop.f32.mrf.mxu0
        %v940 = vadd.f32 0.0, %v939
        %941 = vmatmul.f32.gmra.mxu0 %v250
        %v942 = vpop.f32.mrf.mxu0
        %v943 = vadd.f32 0.0, %v942
        %944 = vmatmul.f32.gmra.mxu0 %v252
        %v945 = vpop.f32.mrf.mxu0
        %v946 = vadd.f32 0.0, %v945
        %947 = vmatmul.f32.gmra.mxu0 %v254
        %v948 = vpop.f32.mrf.mxu0
        %v949 = vadd.f32 0.0, %v948
        %950 = vmatmul.f32.gmra.mxu0 %v256
        %v951 = vpop.f32.mrf.mxu0
        %v952 = vadd.f32 0.0, %v951
        %953 = vmatmul.f32.gmra.mxu0 %v258
        %v954 = vpop.f32.mrf.mxu0
        %v955 = vadd.f32 0.0, %v954
        %956 = vmatmul.f32.gmra.mxu0 %v260
        %v957 = vpop.f32.mrf.mxu0
        %v958 = vadd.f32 0.0, %v957
        %959 = vmatmul.f32.gmra.mxu0 %v262
        %v960 = vpop.f32.mrf.mxu0
        %v961 = vadd.f32 0.0, %v960
        %962 = vmatmul.f32.gmra.mxu0 %v264
        %v963 = vpop.f32.mrf.mxu0
        %v964 = vadd.f32 0.0, %v963
        %965 = vmatmul.f32.gmra.mxu0 %v266
        %v966 = vpop.f32.mrf.mxu0
        %v967 = vadd.f32 0.0, %v966
        %968 = vmatmul.f32.gmra.mxu0 %v268
        %v969 = vpop.f32.mrf.mxu0
        %v970 = vadd.f32 0.0, %v969
        %971 = vmatmul.f32.gmra.mxu0 %v270
        %v972 = vpop.f32.mrf.mxu0
        %v973 = vadd.f32 0.0, %v972
        %974 = vmatmul.f32.gmra.mxu0 %v272
        %v975 = vpop.f32.mrf.mxu0
        %v976 = vadd.f32 0.0, %v975
        %977 = vmatmul.f32.gmra.mxu0 %v274
        %v978 = vpop.f32.mrf.mxu0
        %v979 = vadd.f32 0.0, %v978
        %980 = vmatmul.f32.gmra.mxu0 %v276
        %v981 = vpop.f32.mrf.mxu0
        %v982 = vadd.f32 0.0, %v981
        %983 = vmatmul.f32.gmra.mxu0 %v278
        %v984 = vpop.f32.mrf.mxu0
        %v985 = vadd.f32 0.0, %v984
        %986 = vmatmul.f32.gmra.mxu0 %v280
        %v987 = vpop.f32.mrf.mxu0
        %v988 = vadd.f32 0.0, %v987
        %989 = vmatmul.f32.gmra.mxu0 %v282
        %v990 = vpop.f32.mrf.mxu0
        %v991 = vadd.f32 0.0, %v990
        %992 = vmatmul.f32.gmra.mxu0 %v284
        %v993 = vpop.f32.mrf.mxu0
        %v994 = vadd.f32 0.0, %v993
        %995 = vmatmul.f32.gmra.mxu0 %v286
        %v996 = vpop.f32.mrf.mxu0
        %v997 = vadd.f32 0.0, %v996
        %998 = vmatmul.f32.gmra.mxu0 %v288
        %v999 = vpop.f32.mrf.mxu0
        %v1000 = vadd.f32 0.0, %v999
        %1001 = vmatmul.f32.gmra.mxu0 %v290
        %v1002 = vpop.f32.mrf.mxu0
        %v1003 = vadd.f32 0.0, %v1002
        %1004 = vmatmul.f32.gmra.mxu0 %v292
        %v1005 = vpop.f32.mrf.mxu0
        %v1006 = vadd.f32 0.0, %v1005
        %1007 = vmatmul.f32.gmra.mxu0 %v294
        %v1008 = vpop.f32.mrf.mxu0
        %v1009 = vadd.f32 0.0, %v1008
        %1010 = vmatmul.f32.gmra.mxu0 %v296
        %v1011 = vpop.f32.mrf.mxu0
        %v1012 = vadd.f32 0.0, %v1011
        %1013 = vmatmul.f32.gmra.mxu0 %v298
        %v1014 = vpop.f32.mrf.mxu0
        %v1015 = vadd.f32 0.0, %v1014
        %1016 = vmatmul.f32.gmra.mxu0 %v300
        %v1017 = vpop.f32.mrf.mxu0
        %v1018 = vadd.f32 0.0, %v1017
        %1019 = vmatmul.f32.gmra.mxu0 %v302
        %v1020 = vpop.f32.mrf.mxu0
        %v1021 = vadd.f32 0.0, %v1020
        %1022 = vmatmul.f32.gmra.mxu0 %v304
        %v1023 = vpop.f32.mrf.mxu0
        %v1024 = vadd.f32 0.0, %v1023
        %1025 = vmatmul.f32.gmra.mxu0 %v306
        %v1026 = vpop.f32.mrf.mxu0
        %v1027 = vadd.f32 0.0, %v1026
        %1028 = vmatmul.f32.gmra.mxu0 %v308
        %v1029 = vpop.f32.mrf.mxu0
        %v1030 = vadd.f32 0.0, %v1029
        %1031 = vmatmul.f32.gmra.mxu0 %v310
        %v1032 = vpop.f32.mrf.mxu0
        %v1033 = vadd.f32 0.0, %v1032
        %1034 = vdwg.mxu0
        %1035 = vmatpush.xpose.msra.mxu0 %v375
        %1036 = vmatpush.xpose.msra.mxu0 %v373
        %1037 = vmatpush.xpose.msra.mxu0 %v371
        %1038 = vmatpush.xpose.msra.mxu0 %v369
        %1039 = vmatpush.xpose.msra.mxu0 %v367
        %1040 = vmatpush.xpose.msra.mxu0 %v365
        %1041 = vmatpush.xpose.msra.mxu0 %v363
        %1042 = vmatpush.xpose.msra.mxu0 %v361
        %1043 = vmatpush.xpose.msra.mxu0 %v359
        %1044 = vmatpush.xpose.msra.mxu0 %v357
        %1045 = vmatpush.xpose.msra.mxu0 %v355
        %1046 = vmatpush.xpose.msra.mxu0 %v353
        %1047 = vmatpush.xpose.msra.mxu0 %v351
        %1048 = vmatpush.xpose.msra.mxu0 %v349
        %1049 = vmatpush.xpose.msra.mxu0 %v347
        %1050 = vmatpush.xpose.msra.mxu0 %v345
        %1051 = vmatmul.f32.gmra.mxu0 %v185
        %v1052 = vpop.f32.mrf.mxu0
        %v1053 = vadd.f32 %v844, %v1052
        %1054 = vmatmul.f32.gmra.mxu0 %v187
        %v1055 = vpop.f32.mrf.mxu0
        %v1056 = vadd.f32 %v847, %v1055
        %1057 = vmatmul.f32.gmra.mxu0 %v189
        %v1058 = vpop.f32.mrf.mxu0
        %v1059 = vadd.f32 %v850, %v1058
        %1060 = vmatmul.f32.gmra.mxu0 %v191
        %v1061 = vpop.f32.mrf.mxu0
        %v1062 = vadd.f32 %v853, %v1061
        %1063 = vmatmul.f32.gmra.mxu0 %v193
        %v1064 = vpop.f32.mrf.mxu0
        %v1065 = vadd.f32 %v856, %v1064
        %1066 = vmatmul.f32.gmra.mxu0 %v195
        %v1067 = vpop.f32.mrf.mxu0
        %v1068 = vadd.f32 %v859, %v1067
        %1069 = vmatmul.f32.gmra.mxu0 %v197
        %v1070 = vpop.f32.mrf.mxu0
        %v1071 = vadd.f32 %v862, %v1070
        %1072 = vmatmul.f32.gmra.mxu0 %v199
        %v1073 = vpop.f32.mrf.mxu0
        %v1074 = vadd.f32 %v865, %v1073
        %1075 = vmatmul.f32.gmra.mxu0 %v201
        %v1076 = vpop.f32.mrf.mxu0
        %v1077 = vadd.f32 %v868, %v1076
        %1078 = vmatmul.f32.gmra.mxu0 %v203
        %v1079 = vpop.f32.mrf.mxu0
        %v1080 = vadd.f32 %v871, %v1079
        %1081 = vmatmul.f32.gmra.mxu0 %v205
        %v1082 = vpop.f32.mrf.mxu0
        %v1083 = vadd.f32 %v874, %v1082
        %1084 = vmatmul.f32.gmra.mxu0 %v207
        %v1085 = vpop.f32.mrf.mxu0
        %v1086 = vadd.f32 %v877, %v1085
        %1087 = vmatmul.f32.gmra.mxu0 %v209
        %v1088 = vpop.f32.mrf.mxu0
        %v1089 = vadd.f32 %v880, %v1088
        %1090 = vmatmul.f32.gmra.mxu0 %v211
        %v1091 = vpop.f32.mrf.mxu0
        %v1092 = vadd.f32 %v883, %v1091
        %1093 = vmatmul.f32.gmra.mxu0 %v213
        %v1094 = vpop.f32.mrf.mxu0
        %v1095 = vadd.f32 %v886, %v1094
        %1096 = vmatmul.f32.gmra.mxu0 %v215
        %v1097 = vpop.f32.mrf.mxu0
        %v1098 = vadd.f32 %v889, %v1097
        %1099 = vmatmul.f32.gmra.mxu0 %v217
        %v1100 = vpop.f32.mrf.mxu0
        %v1101 = vadd.f32 %v892, %v1100
        %1102 = vmatmul.f32.gmra.mxu0 %v219
        %v1103 = vpop.f32.mrf.mxu0
        %v1104 = vadd.f32 %v895, %v1103
        %1105 = vmatmul.f32.gmra.mxu0 %v221
        %v1106 = vpop.f32.mrf.mxu0
        %v1107 = vadd.f32 %v898, %v1106
        %1108 = vmatmul.f32.gmra.mxu0 %v223
        %v1109 = vpop.f32.mrf.mxu0
        %v1110 = vadd.f32 %v901, %v1109
        %1111 = vmatmul.f32.gmra.mxu0 %v225
        %v1112 = vpop.f32.mrf.mxu0
        %v1113 = vadd.f32 %v904, %v1112
        %1114 = vmatmul.f32.gmra.mxu0 %v227
        %v1115 = vpop.f32.mrf.mxu0
        %v1116 = vadd.f32 %v907, %v1115
        %1117 = vmatmul.f32.gmra.mxu0 %v229
        %v1118 = vpop.f32.mrf.mxu0
        %v1119 = vadd.f32 %v910, %v1118
        %1120 = vmatmul.f32.gmra.mxu0 %v231
        %v1121 = vpop.f32.mrf.mxu0
        %v1122 = vadd.f32 %v913, %v1121
        %1123 = vmatmul.f32.gmra.mxu0 %v233
        %v1124 = vpop.f32.mrf.mxu0
        %v1125 = vadd.f32 %v916, %v1124
        %1126 = vmatmul.f32.gmra.mxu0 %v235
        %v1127 = vpop.f32.mrf.mxu0
        %v1128 = vadd.f32 %v919, %v1127
        %1129 = vmatmul.f32.gmra.mxu0 %v237
        %v1130 = vpop.f32.mrf.mxu0
        %v1131 = vadd.f32 %v922, %v1130
        %1132 = vmatmul.f32.gmra.mxu0 %v239
        %v1133 = vpop.f32.mrf.mxu0
        %v1134 = vadd.f32 %v925, %v1133
        %1135 = vmatmul.f32.gmra.mxu0 %v241
        %v1136 = vpop.f32.mrf.mxu0
        %v1137 = vadd.f32 %v928, %v1136
        %1138 = vmatmul.f32.gmra.mxu0 %v243
        %v1139 = vpop.f32.mrf.mxu0
        %v1140 = vadd.f32 %v931, %v1139
        %1141 = vmatmul.f32.gmra.mxu0 %v245
        %v1142 = vpop.f32.mrf.mxu0
        %v1143 = vadd.f32 %v934, %v1142
        %1144 = vmatmul.f32.gmra.mxu0 %v247
        %v1145 = vpop.f32.mrf.mxu0
        %v1146 = vadd.f32 %v937, %v1145
        %1147 = vmatmul.f32.gmra.mxu0 %v249
        %v1148 = vpop.f32.mrf.mxu0
        %v1149 = vadd.f32 %v940, %v1148
        %1150 = vmatmul.f32.gmra.mxu0 %v251
        %v1151 = vpop.f32.mrf.mxu0
        %v1152 = vadd.f32 %v943, %v1151
        %1153 = vmatmul.f32.gmra.mxu0 %v253
        %v1154 = vpop.f32.mrf.mxu0
        %v1155 = vadd.f32 %v946, %v1154
        %1156 = vmatmul.f32.gmra.mxu0 %v255
        %v1157 = vpop.f32.mrf.mxu0
        %v1158 = vadd.f32 %v949, %v1157
        %1159 = vmatmul.f32.gmra.mxu0 %v257
        %v1160 = vpop.f32.mrf.mxu0
        %v1161 = vadd.f32 %v952, %v1160
        %1162 = vmatmul.f32.gmra.mxu0 %v259
        %v1163 = vpop.f32.mrf.mxu0
        %v1164 = vadd.f32 %v955, %v1163
        %1165 = vmatmul.f32.gmra.mxu0 %v261
        %v1166 = vpop.f32.mrf.mxu0
        %v1167 = vadd.f32 %v958, %v1166
        %1168 = vmatmul.f32.gmra.mxu0 %v263
        %v1169 = vpop.f32.mrf.mxu0
        %v1170 = vadd.f32 %v961, %v1169
        %1171 = vmatmul.f32.gmra.mxu0 %v265
        %v1172 = vpop.f32.mrf.mxu0
        %v1173 = vadd.f32 %v964, %v1172
        %1174 = vmatmul.f32.gmra.mxu0 %v267
        %v1175 = vpop.f32.mrf.mxu0
        %v1176 = vadd.f32 %v967, %v1175
        %1177 = vmatmul.f32.gmra.mxu0 %v269
        %v1178 = vpop.f32.mrf.mxu0
        %v1179 = vadd.f32 %v970, %v1178
        %1180 = vmatmul.f32.gmra.mxu0 %v271
        %v1181 = vpop.f32.mrf.mxu0
        %v1182 = vadd.f32 %v973, %v1181
        %1183 = vmatmul.f32.gmra.mxu0 %v273
        %v1184 = vpop.f32.mrf.mxu0
        %v1185 = vadd.f32 %v976, %v1184
        %1186 = vmatmul.f32.gmra.mxu0 %v275
        %v1187 = vpop.f32.mrf.mxu0
        %v1188 = vadd.f32 %v979, %v1187
        %1189 = vmatmul.f32.gmra.mxu0 %v277
        %v1190 = vpop.f32.mrf.mxu0
        %v1191 = vadd.f32 %v982, %v1190
        %1192 = vmatmul.f32.gmra.mxu0 %v279
        %v1193 = vpop.f32.mrf.mxu0
        %v1194 = vadd.f32 %v985, %v1193
        %1195 = vmatmul.f32.gmra.mxu0 %v281
        %v1196 = vpop.f32.mrf.mxu0
        %v1197 = vadd.f32 %v988, %v1196
        %1198 = vmatmul.f32.gmra.mxu0 %v283
        %v1199 = vpop.f32.mrf.mxu0
        %v1200 = vadd.f32 %v991, %v1199
        %1201 = vmatmul.f32.gmra.mxu0 %v285
        %v1202 = vpop.f32.mrf.mxu0
        %v1203 = vadd.f32 %v994, %v1202
        %1204 = vmatmul.f32.gmra.mxu0 %v287
        %v1205 = vpop.f32.mrf.mxu0
        %v1206 = vadd.f32 %v997, %v1205
        %1207 = vmatmul.f32.gmra.mxu0 %v289
        %v1208 = vpop.f32.mrf.mxu0
        %v1209 = vadd.f32 %v1000, %v1208
        %1210 = vmatmul.f32.gmra.mxu0 %v291
        %v1211 = vpop.f32.mrf.mxu0
        %v1212 = vadd.f32 %v1003, %v1211
        %1213 = vmatmul.f32.gmra.mxu0 %v293
        %v1214 = vpop.f32.mrf.mxu0
        %v1215 = vadd.f32 %v1006, %v1214
        %1216 = vmatmul.f32.gmra.mxu0 %v295
        %v1217 = vpop.f32.mrf.mxu0
        %v1218 = vadd.f32 %v1009, %v1217
        %1219 = vmatmul.f32.gmra.mxu0 %v297
        %v1220 = vpop.f32.mrf.mxu0
        %v1221 = vadd.f32 %v1012, %v1220
        %1222 = vmatmul.f32.gmra.mxu0 %v299
        %v1223 = vpop.f32.mrf.mxu0
        %v1224 = vadd.f32 %v1015, %v1223
        %1225 = vmatmul.f32.gmra.mxu0 %v301
        %v1226 = vpop.f32.mrf.mxu0
        %v1227 = vadd.f32 %v1018, %v1226
        %1228 = vmatmul.f32.gmra.mxu0 %v303
        %v1229 = vpop.f32.mrf.mxu0
        %v1230 = vadd.f32 %v1021, %v1229
        %1231 = vmatmul.f32.gmra.mxu0 %v305
        %v1232 = vpop.f32.mrf.mxu0
        %v1233 = vadd.f32 %v1024, %v1232
        %1234 = vmatmul.f32.gmra.mxu0 %v307
        %v1235 = vpop.f32.mrf.mxu0
        %v1236 = vadd.f32 %v1027, %v1235
        %1237 = vmatmul.f32.gmra.mxu0 %v309
        %v1238 = vpop.f32.mrf.mxu0
        %v1239 = vadd.f32 %v1030, %v1238
        %1240 = vmatmul.f32.gmra.mxu0 %v311
        %v1241 = vpop.f32.mrf.mxu0
        %v1242 = vadd.f32 %v1033, %v1241
        %1243 = vdwg.mxu0
        %1244 = vmatpush.xpose.msra.mxu0 %v406
        %1245 = vmatpush.xpose.msra.mxu0 %v404
        %1246 = vmatpush.xpose.msra.mxu0 %v402
        %1247 = vmatpush.xpose.msra.mxu0 %v400
        %1248 = vmatpush.xpose.msra.mxu0 %v398
        %1249 = vmatpush.xpose.msra.mxu0 %v396
        %1250 = vmatpush.xpose.msra.mxu0 %v394
        %1251 = vmatpush.xpose.msra.mxu0 %v392
        %1252 = vmatpush.xpose.msra.mxu0 %v390
        %1253 = vmatpush.xpose.msra.mxu0 %v388
        %1254 = vmatpush.xpose.msra.mxu0 %v386
        %1255 = vmatpush.xpose.msra.mxu0 %v384
        %1256 = vmatpush.xpose.msra.mxu0 %v382
        %1257 = vmatpush.xpose.msra.mxu0 %v380
        %1258 = vmatpush.xpose.msra.mxu0 %v378
        %1259 = vmatpush.xpose.msra.mxu0 %v376
        %1260 = vmatmul.f32.gmra.mxu0 %v184
        %v1261 = vpop.f32.mrf.mxu0
        %v1262 = vadd.f32 0.0, %v1261
        %1263 = vmatmul.f32.gmra.mxu0 %v186
        %v1264 = vpop.f32.mrf.mxu0
        %v1265 = vadd.f32 0.0, %v1264
        %1266 = vmatmul.f32.gmra.mxu0 %v188
        %v1267 = vpop.f32.mrf.mxu0
        %v1268 = vadd.f32 0.0, %v1267
        %1269 = vmatmul.f32.gmra.mxu0 %v190
        %v1270 = vpop.f32.mrf.mxu0
        %v1271 = vadd.f32 0.0, %v1270
        %1272 = vmatmul.f32.gmra.mxu0 %v192
        %v1273 = vpop.f32.mrf.mxu0
        %v1274 = vadd.f32 0.0, %v1273
        %1275 = vmatmul.f32.gmra.mxu0 %v194
        %v1276 = vpop.f32.mrf.mxu0
        %v1277 = vadd.f32 0.0, %v1276
        %1278 = vmatmul.f32.gmra.mxu0 %v196
        %v1279 = vpop.f32.mrf.mxu0
        %v1280 = vadd.f32 0.0, %v1279
        %1281 = vmatmul.f32.gmra.mxu0 %v198
        %v1282 = vpop.f32.mrf.mxu0
        %v1283 = vadd.f32 0.0, %v1282
        %1284 = vmatmul.f32.gmra.mxu0 %v200
        %v1285 = vpop.f32.mrf.mxu0
        %v1286 = vadd.f32 0.0, %v1285
        %1287 = vmatmul.f32.gmra.mxu0 %v202
        %v1288 = vpop.f32.mrf.mxu0
        %v1289 = vadd.f32 0.0, %v1288
        %1290 = vmatmul.f32.gmra.mxu0 %v204
        %v1291 = vpop.f32.mrf.mxu0
        %v1292 = vadd.f32 0.0, %v1291
        %1293 = vmatmul.f32.gmra.mxu0 %v206
        %v1294 = vpop.f32.mrf.mxu0
        %v1295 = vadd.f32 0.0, %v1294
        %1296 = vmatmul.f32.gmra.mxu0 %v208
        %v1297 = vpop.f32.mrf.mxu0
        %v1298 = vadd.f32 0.0, %v1297
        %1299 = vmatmul.f32.gmra.mxu0 %v210
        %v1300 = vpop.f32.mrf.mxu0
        %v1301 = vadd.f32 0.0, %v1300
        %1302 = vmatmul.f32.gmra.mxu0 %v212
        %v1303 = vpop.f32.mrf.mxu0
        %v1304 = vadd.f32 0.0, %v1303
        %1305 = vmatmul.f32.gmra.mxu0 %v214
        %v1306 = vpop.f32.mrf.mxu0
        %v1307 = vadd.f32 0.0, %v1306
        %1308 = vmatmul.f32.gmra.mxu0 %v216
        %v1309 = vpop.f32.mrf.mxu0
        %v1310 = vadd.f32 0.0, %v1309
        %1311 = vmatmul.f32.gmra.mxu0 %v218
        %v1312 = vpop.f32.mrf.mxu0
        %v1313 = vadd.f32 0.0, %v1312
        %1314 = vmatmul.f32.gmra.mxu0 %v220
        %v1315 = vpop.f32.mrf.mxu0
        %v1316 = vadd.f32 0.0, %v1315
        %1317 = vmatmul.f32.gmra.mxu0 %v222
        %v1318 = vpop.f32.mrf.mxu0
        %v1319 = vadd.f32 0.0, %v1318
        %1320 = vmatmul.f32.gmra.mxu0 %v224
        %v1321 = vpop.f32.mrf.mxu0
        %v1322 = vadd.f32 0.0, %v1321
        %1323 = vmatmul.f32.gmra.mxu0 %v226
        %v1324 = vpop.f32.mrf.mxu0
        %v1325 = vadd.f32 0.0, %v1324
        %1326 = vmatmul.f32.gmra.mxu0 %v228
        %v1327 = vpop.f32.mrf.mxu0
        %v1328 = vadd.f32 0.0, %v1327
        %1329 = vmatmul.f32.gmra.mxu0 %v230
        %v1330 = vpop.f32.mrf.mxu0
        %v1331 = vadd.f32 0.0, %v1330
        %1332 = vmatmul.f32.gmra.mxu0 %v232
        %v1333 = vpop.f32.mrf.mxu0
        %v1334 = vadd.f32 0.0, %v1333
        %1335 = vmatmul.f32.gmra.mxu0 %v234
        %v1336 = vpop.f32.mrf.mxu0
        %v1337 = vadd.f32 0.0, %v1336
        %1338 = vmatmul.f32.gmra.mxu0 %v236
        %v1339 = vpop.f32.mrf.mxu0
        %v1340 = vadd.f32 0.0, %v1339
        %1341 = vmatmul.f32.gmra.mxu0 %v238
        %v1342 = vpop.f32.mrf.mxu0
        %v1343 = vadd.f32 0.0, %v1342
        %1344 = vmatmul.f32.gmra.mxu0 %v240
        %v1345 = vpop.f32.mrf.mxu0
        %v1346 = vadd.f32 0.0, %v1345
        %1347 = vmatmul.f32.gmra.mxu0 %v242
        %v1348 = vpop.f32.mrf.mxu0
        %v1349 = vadd.f32 0.0, %v1348
        %1350 = vmatmul.f32.gmra.mxu0 %v244
        %v1351 = vpop.f32.mrf.mxu0
        %v1352 = vadd.f32 0.0, %v1351
        %1353 = vmatmul.f32.gmra.mxu0 %v246
        %v1354 = vpop.f32.mrf.mxu0
        %v1355 = vadd.f32 0.0, %v1354
        %1356 = vmatmul.f32.gmra.mxu0 %v248
        %v1357 = vpop.f32.mrf.mxu0
        %v1358 = vadd.f32 0.0, %v1357
        %1359 = vmatmul.f32.gmra.mxu0 %v250
        %v1360 = vpop.f32.mrf.mxu0
        %v1361 = vadd.f32 0.0, %v1360
        %1362 = vmatmul.f32.gmra.mxu0 %v252
        %v1363 = vpop.f32.mrf.mxu0
        %v1364 = vadd.f32 0.0, %v1363
        %1365 = vmatmul.f32.gmra.mxu0 %v254
        %v1366 = vpop.f32.mrf.mxu0
        %v1367 = vadd.f32 0.0, %v1366
        %1368 = vmatmul.f32.gmra.mxu0 %v256
        %v1369 = vpop.f32.mrf.mxu0
        %v1370 = vadd.f32 0.0, %v1369
        %1371 = vmatmul.f32.gmra.mxu0 %v258
        %v1372 = vpop.f32.mrf.mxu0
        %v1373 = vadd.f32 0.0, %v1372
        %1374 = vmatmul.f32.gmra.mxu0 %v260
        %v1375 = vpop.f32.mrf.mxu0
        %v1376 = vadd.f32 0.0, %v1375
        %1377 = vmatmul.f32.gmra.mxu0 %v262
        %v1378 = vpop.f32.mrf.mxu0
        %v1379 = vadd.f32 0.0, %v1378
        %1380 = vmatmul.f32.gmra.mxu0 %v264
        %v1381 = vpop.f32.mrf.mxu0
        %v1382 = vadd.f32 0.0, %v1381
        %1383 = vmatmul.f32.gmra.mxu0 %v266
        %v1384 = vpop.f32.mrf.mxu0
        %v1385 = vadd.f32 0.0, %v1384
        %1386 = vmatmul.f32.gmra.mxu0 %v268
        %v1387 = vpop.f32.mrf.mxu0
        %v1388 = vadd.f32 0.0, %v1387
        %1389 = vmatmul.f32.gmra.mxu0 %v270
        %v1390 = vpop.f32.mrf.mxu0
        %v1391 = vadd.f32 0.0, %v1390
        %1392 = vmatmul.f32.gmra.mxu0 %v272
        %v1393 = vpop.f32.mrf.mxu0
        %v1394 = vadd.f32 0.0, %v1393
        %1395 = vmatmul.f32.gmra.mxu0 %v274
        %v1396 = vpop.f32.mrf.mxu0
        %v1397 = vadd.f32 0.0, %v1396
        %1398 = vmatmul.f32.gmra.mxu0 %v276
        %v1399 = vpop.f32.mrf.mxu0
        %v1400 = vadd.f32 0.0, %v1399
        %1401 = vmatmul.f32.gmra.mxu0 %v278
        %v1402 = vpop.f32.mrf.mxu0
        %v1403 = vadd.f32 0.0, %v1402
        %1404 = vmatmul.f32.gmra.mxu0 %v280
        %v1405 = vpop.f32.mrf.mxu0
        %v1406 = vadd.f32 0.0, %v1405
        %1407 = vmatmul.f32.gmra.mxu0 %v282
        %v1408 = vpop.f32.mrf.mxu0
        %v1409 = vadd.f32 0.0, %v1408
        %1410 = vmatmul.f32.gmra.mxu0 %v284
        %v1411 = vpop.f32.mrf.mxu0
        %v1412 = vadd.f32 0.0, %v1411
        %1413 = vmatmul.f32.gmra.mxu0 %v286
        %v1414 = vpop.f32.mrf.mxu0
        %v1415 = vadd.f32 0.0, %v1414
        %1416 = vmatmul.f32.gmra.mxu0 %v288
        %v1417 = vpop.f32.mrf.mxu0
        %v1418 = vadd.f32 0.0, %v1417
        %1419 = vmatmul.f32.gmra.mxu0 %v290
        %v1420 = vpop.f32.mrf.mxu0
        %v1421 = vadd.f32 0.0, %v1420
        %1422 = vmatmul.f32.gmra.mxu0 %v292
        %v1423 = vpop.f32.mrf.mxu0
        %v1424 = vadd.f32 0.0, %v1423
        %1425 = vmatmul.f32.gmra.mxu0 %v294
        %v1426 = vpop.f32.mrf.mxu0
        %v1427 = vadd.f32 0.0, %v1426
        %1428 = vmatmul.f32.gmra.mxu0 %v296
        %v1429 = vpop.f32.mrf.mxu0
        %v1430 = vadd.f32 0.0, %v1429
        %1431 = vmatmul.f32.gmra.mxu0 %v298
        %v1432 = vpop.f32.mrf.mxu0
        %v1433 = vadd.f32 0.0, %v1432
        %1434 = vmatmul.f32.gmra.mxu0 %v300
        %v1435 = vpop.f32.mrf.mxu0
        %v1436 = vadd.f32 0.0, %v1435
        %1437 = vmatmul.f32.gmra.mxu0 %v302
        %v1438 = vpop.f32.mrf.mxu0
        %v1439 = vadd.f32 0.0, %v1438
        %1440 = vmatmul.f32.gmra.mxu0 %v304
        %v1441 = vpop.f32.mrf.mxu0
        %v1442 = vadd.f32 0.0, %v1441
        %1443 = vmatmul.f32.gmra.mxu0 %v306
        %v1444 = vpop.f32.mrf.mxu0
        %v1445 = vadd.f32 0.0, %v1444
        %1446 = vmatmul.f32.gmra.mxu0 %v308
        %v1447 = vpop.f32.mrf.mxu0
        %v1448 = vadd.f32 0.0, %v1447
        %1449 = vmatmul.f32.gmra.mxu0 %v310
        %v1450 = vpop.f32.mrf.mxu0
        %v1451 = vadd.f32 0.0, %v1450
        %1452 = vdwg.mxu0
        %1453 = vmatpush.xpose.msra.mxu0 %v407
        %1454 = vmatpush.xpose.msra.mxu0 %v405
        %1455 = vmatpush.xpose.msra.mxu0 %v403
        %1456 = vmatpush.xpose.msra.mxu0 %v401
        %1457 = vmatpush.xpose.msra.mxu0 %v399
        %1458 = vmatpush.xpose.msra.mxu0 %v397
        %1459 = vmatpush.xpose.msra.mxu0 %v395
        %1460 = vmatpush.xpose.msra.mxu0 %v393
        %1461 = vmatpush.xpose.msra.mxu0 %v391
        %1462 = vmatpush.xpose.msra.mxu0 %v389
        %1463 = vmatpush.xpose.msra.mxu0 %v387
        %1464 = vmatpush.xpose.msra.mxu0 %v385
        %1465 = vmatpush.xpose.msra.mxu0 %v383
        %1466 = vmatpush.xpose.msra.mxu0 %v381
        %1467 = vmatpush.xpose.msra.mxu0 %v379
        %1468 = vmatpush.xpose.msra.mxu0 %v377
        %1469 = vmatmul.f32.gmra.mxu0 %v185
        %v1470 = vpop.f32.mrf.mxu0
        %v1471 = vadd.f32 %v1262, %v1470
        %1472 = vmatmul.f32.gmra.mxu0 %v187
        %v1473 = vpop.f32.mrf.mxu0
        %v1474 = vadd.f32 %v1265, %v1473
        %1475 = vmatmul.f32.gmra.mxu0 %v189
        %v1476 = vpop.f32.mrf.mxu0
        %v1477 = vadd.f32 %v1268, %v1476
        %1478 = vmatmul.f32.gmra.mxu0 %v191
        %v1479 = vpop.f32.mrf.mxu0
        %v1480 = vadd.f32 %v1271, %v1479
        %1481 = vmatmul.f32.gmra.mxu0 %v193
        %v1482 = vpop.f32.mrf.mxu0
        %v1483 = vadd.f32 %v1274, %v1482
        %1484 = vmatmul.f32.gmra.mxu0 %v195
        %v1485 = vpop.f32.mrf.mxu0
        %v1486 = vadd.f32 %v1277, %v1485
        %1487 = vmatmul.f32.gmra.mxu0 %v197
        %v1488 = vpop.f32.mrf.mxu0
        %v1489 = vadd.f32 %v1280, %v1488
        %1490 = vmatmul.f32.gmra.mxu0 %v199
        %v1491 = vpop.f32.mrf.mxu0
        %v1492 = vadd.f32 %v1283, %v1491
        %1493 = vmatmul.f32.gmra.mxu0 %v201
        %v1494 = vpop.f32.mrf.mxu0
        %v1495 = vadd.f32 %v1286, %v1494
        %1496 = vmatmul.f32.gmra.mxu0 %v203
        %v1497 = vpop.f32.mrf.mxu0
        %v1498 = vadd.f32 %v1289, %v1497
        %1499 = vmatmul.f32.gmra.mxu0 %v205
        %v1500 = vpop.f32.mrf.mxu0
        %v1501 = vadd.f32 %v1292, %v1500
        %1502 = vmatmul.f32.gmra.mxu0 %v207
        %v1503 = vpop.f32.mrf.mxu0
        %v1504 = vadd.f32 %v1295, %v1503
        %1505 = vmatmul.f32.gmra.mxu0 %v209
        %v1506 = vpop.f32.mrf.mxu0
        %v1507 = vadd.f32 %v1298, %v1506
        %1508 = vmatmul.f32.gmra.mxu0 %v211
        %v1509 = vpop.f32.mrf.mxu0
        %v1510 = vadd.f32 %v1301, %v1509
        %1511 = vmatmul.f32.gmra.mxu0 %v213
        %v1512 = vpop.f32.mrf.mxu0
        %v1513 = vadd.f32 %v1304, %v1512
        %1514 = vmatmul.f32.gmra.mxu0 %v215
        %v1515 = vpop.f32.mrf.mxu0
        %v1516 = vadd.f32 %v1307, %v1515
        %1517 = vmatmul.f32.gmra.mxu0 %v217
        %v1518 = vpop.f32.mrf.mxu0
        %v1519 = vadd.f32 %v1310, %v1518
        %1520 = vmatmul.f32.gmra.mxu0 %v219
        %v1521 = vpop.f32.mrf.mxu0
        %v1522 = vadd.f32 %v1313, %v1521
        %1523 = vmatmul.f32.gmra.mxu0 %v221
        %v1524 = vpop.f32.mrf.mxu0
        %v1525 = vadd.f32 %v1316, %v1524
        %1526 = vmatmul.f32.gmra.mxu0 %v223
        %v1527 = vpop.f32.mrf.mxu0
        %v1528 = vadd.f32 %v1319, %v1527
        %1529 = vmatmul.f32.gmra.mxu0 %v225
        %v1530 = vpop.f32.mrf.mxu0
        %v1531 = vadd.f32 %v1322, %v1530
        %1532 = vmatmul.f32.gmra.mxu0 %v227
        %v1533 = vpop.f32.mrf.mxu0
        %v1534 = vadd.f32 %v1325, %v1533
        %1535 = vmatmul.f32.gmra.mxu0 %v229
        %v1536 = vpop.f32.mrf.mxu0
        %v1537 = vadd.f32 %v1328, %v1536
        %1538 = vmatmul.f32.gmra.mxu0 %v231
        %v1539 = vpop.f32.mrf.mxu0
        %v1540 = vadd.f32 %v1331, %v1539
        %1541 = vmatmul.f32.gmra.mxu0 %v233
        %v1542 = vpop.f32.mrf.mxu0
        %v1543 = vadd.f32 %v1334, %v1542
        %1544 = vmatmul.f32.gmra.mxu0 %v235
        %v1545 = vpop.f32.mrf.mxu0
        %v1546 = vadd.f32 %v1337, %v1545
        %1547 = vmatmul.f32.gmra.mxu0 %v237
        %v1548 = vpop.f32.mrf.mxu0
        %v1549 = vadd.f32 %v1340, %v1548
        %1550 = vmatmul.f32.gmra.mxu0 %v239
        %v1551 = vpop.f32.mrf.mxu0
        %v1552 = vadd.f32 %v1343, %v1551
        %1553 = vmatmul.f32.gmra.mxu0 %v241
        %v1554 = vpop.f32.mrf.mxu0
        %v1555 = vadd.f32 %v1346, %v1554
        %1556 = vmatmul.f32.gmra.mxu0 %v243
        %v1557 = vpop.f32.mrf.mxu0
        %v1558 = vadd.f32 %v1349, %v1557
        %1559 = vmatmul.f32.gmra.mxu0 %v245
        %v1560 = vpop.f32.mrf.mxu0
        %v1561 = vadd.f32 %v1352, %v1560
        %1562 = vmatmul.f32.gmra.mxu0 %v247
        %v1563 = vpop.f32.mrf.mxu0
        %v1564 = vadd.f32 %v1355, %v1563
        %1565 = vmatmul.f32.gmra.mxu0 %v249
        %v1566 = vpop.f32.mrf.mxu0
        %v1567 = vadd.f32 %v1358, %v1566
        %1568 = vmatmul.f32.gmra.mxu0 %v251
        %v1569 = vpop.f32.mrf.mxu0
        %v1570 = vadd.f32 %v1361, %v1569
        %1571 = vmatmul.f32.gmra.mxu0 %v253
        %v1572 = vpop.f32.mrf.mxu0
        %v1573 = vadd.f32 %v1364, %v1572
        %1574 = vmatmul.f32.gmra.mxu0 %v255
        %v1575 = vpop.f32.mrf.mxu0
        %v1576 = vadd.f32 %v1367, %v1575
        %1577 = vmatmul.f32.gmra.mxu0 %v257
        %v1578 = vpop.f32.mrf.mxu0
        %v1579 = vadd.f32 %v1370, %v1578
        %1580 = vmatmul.f32.gmra.mxu0 %v259
        %v1581 = vpop.f32.mrf.mxu0
        %v1582 = vadd.f32 %v1373, %v1581
        %1583 = vmatmul.f32.gmra.mxu0 %v261
        %v1584 = vpop.f32.mrf.mxu0
        %v1585 = vadd.f32 %v1376, %v1584
        %1586 = vmatmul.f32.gmra.mxu0 %v263
        %v1587 = vpop.f32.mrf.mxu0
        %v1588 = vadd.f32 %v1379, %v1587
        %1589 = vmatmul.f32.gmra.mxu0 %v265
        %v1590 = vpop.f32.mrf.mxu0
        %v1591 = vadd.f32 %v1382, %v1590
        %1592 = vmatmul.f32.gmra.mxu0 %v267
        %v1593 = vpop.f32.mrf.mxu0
        %v1594 = vadd.f32 %v1385, %v1593
        %1595 = vmatmul.f32.gmra.mxu0 %v269
        %v1596 = vpop.f32.mrf.mxu0
        %v1597 = vadd.f32 %v1388, %v1596
        %1598 = vmatmul.f32.gmra.mxu0 %v271
        %v1599 = vpop.f32.mrf.mxu0
        %v1600 = vadd.f32 %v1391, %v1599
        %1601 = vmatmul.f32.gmra.mxu0 %v273
        %v1602 = vpop.f32.mrf.mxu0
        %v1603 = vadd.f32 %v1394, %v1602
        %1604 = vmatmul.f32.gmra.mxu0 %v275
        %v1605 = vpop.f32.mrf.mxu0
        %v1606 = vadd.f32 %v1397, %v1605
        %1607 = vmatmul.f32.gmra.mxu0 %v277
        %v1608 = vpop.f32.mrf.mxu0
        %v1609 = vadd.f32 %v1400, %v1608
        %1610 = vmatmul.f32.gmra.mxu0 %v279
        %v1611 = vpop.f32.mrf.mxu0
        %v1612 = vadd.f32 %v1403, %v1611
        %1613 = vmatmul.f32.gmra.mxu0 %v281
        %v1614 = vpop.f32.mrf.mxu0
        %v1615 = vadd.f32 %v1406, %v1614
        %1616 = vmatmul.f32.gmra.mxu0 %v283
        %v1617 = vpop.f32.mrf.mxu0
        %v1618 = vadd.f32 %v1409, %v1617
        %1619 = vmatmul.f32.gmra.mxu0 %v285
        %v1620 = vpop.f32.mrf.mxu0
        %v1621 = vadd.f32 %v1412, %v1620
        %1622 = vmatmul.f32.gmra.mxu0 %v287
        %v1623 = vpop.f32.mrf.mxu0
        %v1624 = vadd.f32 %v1415, %v1623
        %1625 = vmatmul.f32.gmra.mxu0 %v289
        %v1626 = vpop.f32.mrf.mxu0
        %v1627 = vadd.f32 %v1418, %v1626
        %1628 = vmatmul.f32.gmra.mxu0 %v291
        %v1629 = vpop.f32.mrf.mxu0
        %v1630 = vadd.f32 %v1421, %v1629
        %1631 = vmatmul.f32.gmra.mxu0 %v293
        %v1632 = vpop.f32.mrf.mxu0
        %v1633 = vadd.f32 %v1424, %v1632
        %1634 = vmatmul.f32.gmra.mxu0 %v295
        %v1635 = vpop.f32.mrf.mxu0
        %v1636 = vadd.f32 %v1427, %v1635
        %1637 = vmatmul.f32.gmra.mxu0 %v297
        %v1638 = vpop.f32.mrf.mxu0
        %v1639 = vadd.f32 %v1430, %v1638
        %1640 = vmatmul.f32.gmra.mxu0 %v299
        %v1641 = vpop.f32.mrf.mxu0
        %v1642 = vadd.f32 %v1433, %v1641
        %1643 = vmatmul.f32.gmra.mxu0 %v301
        %v1644 = vpop.f32.mrf.mxu0
        %v1645 = vadd.f32 %v1436, %v1644
        %1646 = vmatmul.f32.gmra.mxu0 %v303
        %v1647 = vpop.f32.mrf.mxu0
        %v1648 = vadd.f32 %v1439, %v1647
        %1649 = vmatmul.f32.gmra.mxu0 %v305
        %v1650 = vpop.f32.mrf.mxu0
        %v1651 = vadd.f32 %v1442, %v1650
        %1652 = vmatmul.f32.gmra.mxu0 %v307
        %v1653 = vpop.f32.mrf.mxu0
        %v1654 = vadd.f32 %v1445, %v1653
        %1655 = vmatmul.f32.gmra.mxu0 %v309
        %v1656 = vpop.f32.mrf.mxu0
        %v1657 = vadd.f32 %v1448, %v1656
        %1658 = vmatmul.f32.gmra.mxu0 %v311
        %v1659 = vpop.f32.mrf.mxu0
        %v1660 = vadd.f32 %v1451, %v1659
        %1661 = vdwg.mxu0
        %1662 = vst [vmem:[%s167] sm:$0xff] %v635
        %1663 = vst [vmem:[%s167 + $0x8] sm:$0xff] %v1053
        %1664 = vst [vmem:[%s167 + $0x10] sm:$0xff] %v1471
        %1665 = vst [vmem:[%s167 + $0x18] sm:$0xff] %v638
        %1666 = vst [vmem:[%s167 + $0x20] sm:$0xff] %v1056
        %1667 = vst [vmem:[%s167 + $0x28] sm:$0xff] %v1474
        %1668 = vst [vmem:[%s167 + $0x30] sm:$0xff] %v641
        %1669 = vst [vmem:[%s167 + $0x38] sm:$0xff] %v1059
        %1670 = vst [vmem:[%s167 + $0x40] sm:$0xff] %v1477
        %1671 = vst [vmem:[%s167 + $0x48] sm:$0xff] %v644
        %1672 = vst [vmem:[%s167 + $0x50] sm:$0xff] %v1062
        %1673 = vst [vmem:[%s167 + $0x58] sm:$0xff] %v1480
        %1674 = vst [vmem:[%s167 + $0x60] sm:$0xff] %v647
        %1675 = vst [vmem:[%s167 + $0x68] sm:$0xff] %v1065
        %1676 = vst [vmem:[%s167 + $0x70] sm:$0xff] %v1483
        %1677 = vst [vmem:[%s167 + $0x78] sm:$0xff] %v650
        %1678 = vst [vmem:[%s167 + $0x80] sm:$0xff] %v1068
        %1679 = vst [vmem:[%s167 + $0x88] sm:$0xff] %v1486
        %1680 = vst [vmem:[%s167 + $0x90] sm:$0xff] %v653
        %1681 = vst [vmem:[%s167 + $0x98] sm:$0xff] %v1071
        %1682 = vst [vmem:[%s167 + $0xa0] sm:$0xff] %v1489
        %1683 = vst [vmem:[%s167 + $0xa8] sm:$0xff] %v656
        %1684 = vst [vmem:[%s167 + $0xb0] sm:$0xff] %v1074
        %1685 = vst [vmem:[%s167 + $0xb8] sm:$0xff] %v1492
        %1686 = vst [vmem:[%s167 + $0xc0] sm:$0xff] %v659
        %1687 = vst [vmem:[%s167 + $0xc8] sm:$0xff] %v1077
        %1688 = vst [vmem:[%s167 + $0xd0] sm:$0xff] %v1495
        %1689 = vst [vmem:[%s167 + $0xd8] sm:$0xff] %v662
        %1690 = vst [vmem:[%s167 + $0xe0] sm:$0xff] %v1080
        %1691 = vst [vmem:[%s167 + $0xe8] sm:$0xff] %v1498
        %1692 = vst [vmem:[%s167 + $0xf0] sm:$0xff] %v665
        %1693 = vst [vmem:[%s167 + $0xf8] sm:$0xff] %v1083
        %1694 = vst [vmem:[%s167 + $0x100] sm:$0xff] %v1501
        %1695 = vst [vmem:[%s167 + $0x108] sm:$0xff] %v668
        %1696 = vst [vmem:[%s167 + $0x110] sm:$0xff] %v1086
        %1697 = vst [vmem:[%s167 + $0x118] sm:$0xff] %v1504
        %1698 = vst [vmem:[%s167 + $0x120] sm:$0xff] %v671
        %1699 = vst [vmem:[%s167 + $0x128] sm:$0xff] %v1089
        %1700 = vst [vmem:[%s167 + $0x130] sm:$0xff] %v1507
        %1701 = vst [vmem:[%s167 + $0x138] sm:$0xff] %v674
        %1702 = vst [vmem:[%s167 + $0x140] sm:$0xff] %v1092
        %1703 = vst [vmem:[%s167 + $0x148] sm:$0xff] %v1510
        %1704 = vst [vmem:[%s167 + $0x150] sm:$0xff] %v677
        %1705 = vst [vmem:[%s167 + $0x158] sm:$0xff] %v1095
        %1706 = vst [vmem:[%s167 + $0x160] sm:$0xff] %v1513
        %1707 = vst [vmem:[%s167 + $0x168] sm:$0xff] %v680
        %1708 = vst [vmem:[%s167 + $0x170] sm:$0xff] %v1098
        %1709 = vst [vmem:[%s167 + $0x178] sm:$0xff] %v1516
        %1710 = vst [vmem:[%s167 + $0x180] sm:$0xff] %v683
        %1711 = vst [vmem:[%s167 + $0x188] sm:$0xff] %v1101
        %1712 = vst [vmem:[%s167 + $0x190] sm:$0xff] %v1519
        %1713 = vst [vmem:[%s167 + $0x198] sm:$0xff] %v686
        %1714 = vst [vmem:[%s167 + $0x1a0] sm:$0xff] %v1104
        %1715 = vst [vmem:[%s167 + $0x1a8] sm:$0xff] %v1522
        %1716 = vst [vmem:[%s167 + $0x1b0] sm:$0xff] %v689
        %1717 = vst [vmem:[%s167 + $0x1b8] sm:$0xff] %v1107
        %1718 = vst [vmem:[%s167 + $0x1c0] sm:$0xff] %v1525
        %1719 = vst [vmem:[%s167 + $0x1c8] sm:$0xff] %v692
        %1720 = vst [vmem:[%s167 + $0x1d0] sm:$0xff] %v1110
        %1721 = vst [vmem:[%s167 + $0x1d8] sm:$0xff] %v1528
        %1722 = vst [vmem:[%s167 + $0x1e0] sm:$0xff] %v695
        %1723 = vst [vmem:[%s167 + $0x1e8] sm:$0xff] %v1113
        %1724 = vst [vmem:[%s167 + $0x1f0] sm:$0xff] %v1531
        %1725 = vst [vmem:[%s167 + $0x1f8] sm:$0xff] %v698
        %1726 = vst [vmem:[%s167 + $0x200] sm:$0xff] %v1116
        %1727 = vst [vmem:[%s167 + $0x208] sm:$0xff] %v1534
        %1728 = vst [vmem:[%s167 + $0x210] sm:$0xff] %v701
        %1729 = vst [vmem:[%s167 + $0x218] sm:$0xff] %v1119
        %1730 = vst [vmem:[%s167 + $0x220] sm:$0xff] %v1537
        %1731 = vst [vmem:[%s167 + $0x228] sm:$0xff] %v704
        %1732 = vst [vmem:[%s167 + $0x230] sm:$0xff] %v1122
        %1733 = vst [vmem:[%s167 + $0x238] sm:$0xff] %v1540
        %1734 = vst [vmem:[%s167 + $0x240] sm:$0xff] %v707
        %1735 = vst [vmem:[%s167 + $0x248] sm:$0xff] %v1125
        %1736 = vst [vmem:[%s167 + $0x250] sm:$0xff] %v1543
        %1737 = vst [vmem:[%s167 + $0x258] sm:$0xff] %v710
        %1738 = vst [vmem:[%s167 + $0x260] sm:$0xff] %v1128
        %1739 = vst [vmem:[%s167 + $0x268] sm:$0xff] %v1546
        %1740 = vst [vmem:[%s167 + $0x270] sm:$0xff] %v713
        %1741 = vst [vmem:[%s167 + $0x278] sm:$0xff] %v1131
        %1742 = vst [vmem:[%s167 + $0x280] sm:$0xff] %v1549
        %1743 = vst [vmem:[%s167 + $0x288] sm:$0xff] %v716
        %1744 = vst [vmem:[%s167 + $0x290] sm:$0xff] %v1134
        %1745 = vst [vmem:[%s167 + $0x298] sm:$0xff] %v1552
        %1746 = vst [vmem:[%s167 + $0x2a0] sm:$0xff] %v719
        %1747 = vst [vmem:[%s167 + $0x2a8] sm:$0xff] %v1137
        %1748 = vst [vmem:[%s167 + $0x2b0] sm:$0xff] %v1555
        %1749 = vst [vmem:[%s167 + $0x2b8] sm:$0xff] %v722
        %1750 = vst [vmem:[%s167 + $0x2c0] sm:$0xff] %v1140
        %1751 = vst [vmem:[%s167 + $0x2c8] sm:$0xff] %v1558
        %1752 = vst [vmem:[%s167 + $0x2d0] sm:$0xff] %v725
        %1753 = vst [vmem:[%s167 + $0x2d8] sm:$0xff] %v1143
        %1754 = vst [vmem:[%s167 + $0x2e0] sm:$0xff] %v1561
        %1755 = vst [vmem:[%s167 + $0x2e8] sm:$0xff] %v728
        %1756 = vst [vmem:[%s167 + $0x2f0] sm:$0xff] %v1146
        %1757 = vst [vmem:[%s167 + $0x2f8] sm:$0xff] %v1564
        %1758 = vst [vmem:[%s167 + $0x300] sm:$0xff] %v731
        %1759 = vst [vmem:[%s167 + $0x308] sm:$0xff] %v1149
        %1760 = vst [vmem:[%s167 + $0x310] sm:$0xff] %v1567
        %1761 = vst [vmem:[%s167 + $0x318] sm:$0xff] %v734
        %1762 = vst [vmem:[%s167 + $0x320] sm:$0xff] %v1152
        %1763 = vst [vmem:[%s167 + $0x328] sm:$0xff] %v1570
        %1764 = vst [vmem:[%s167 + $0x330] sm:$0xff] %v737
        %1765 = vst [vmem:[%s167 + $0x338] sm:$0xff] %v1155
        %1766 = vst [vmem:[%s167 + $0x340] sm:$0xff] %v1573
        %1767 = vst [vmem:[%s167 + $0x348] sm:$0xff] %v740
        %1768 = vst [vmem:[%s167 + $0x350] sm:$0xff] %v1158
        %1769 = vst [vmem:[%s167 + $0x358] sm:$0xff] %v1576
        %1770 = vst [vmem:[%s167 + $0x360] sm:$0xff] %v743
        %1771 = vst [vmem:[%s167 + $0x368] sm:$0xff] %v1161
        %1772 = vst [vmem:[%s167 + $0x370] sm:$0xff] %v1579
        %1773 = vst [vmem:[%s167 + $0x378] sm:$0xff] %v746
        %1774 = vst [vmem:[%s167 + $0x380] sm:$0xff] %v1164
        %1775 = vst [vmem:[%s167 + $0x388] sm:$0xff] %v1582
        %1776 = vst [vmem:[%s167 + $0x390] sm:$0xff] %v749
        %1777 = vst [vmem:[%s167 + $0x398] sm:$0xff] %v1167
        %1778 = vst [vmem:[%s167 + $0x3a0] sm:$0xff] %v1585
        %1779 = vst [vmem:[%s167 + $0x3a8] sm:$0xff] %v752
        %1780 = vst [vmem:[%s167 + $0x3b0] sm:$0xff] %v1170
        %1781 = vst [vmem:[%s167 + $0x3b8] sm:$0xff] %v1588
        %1782 = vst [vmem:[%s167 + $0x3c0] sm:$0xff] %v755
        %1783 = vst [vmem:[%s167 + $0x3c8] sm:$0xff] %v1173
        %1784 = vst [vmem:[%s167 + $0x3d0] sm:$0xff] %v1591
        %1785 = vst [vmem:[%s167 + $0x3d8] sm:$0xff] %v758
        %1786 = vst [vmem:[%s167 + $0x3e0] sm:$0xff] %v1176
        %1787 = vst [vmem:[%s167 + $0x3e8] sm:$0xff] %v1594
        %1788 = vst [vmem:[%s167 + $0x3f0] sm:$0xff] %v761
        %1789 = vst [vmem:[%s167 + $0x3f8] sm:$0xff] %v1179
        %1790 = vst [vmem:[%s167 + $0x400] sm:$0xff] %v1597
        %1791 = vst [vmem:[%s167 + $0x408] sm:$0xff] %v764
        %1792 = vst [vmem:[%s167 + $0x410] sm:$0xff] %v1182
        %1793 = vst [vmem:[%s167 + $0x418] sm:$0xff] %v1600
        %1794 = vst [vmem:[%s167 + $0x420] sm:$0xff] %v767
        %1795 = vst [vmem:[%s167 + $0x428] sm:$0xff] %v1185
        %1796 = vst [vmem:[%s167 + $0x430] sm:$0xff] %v1603
        %1797 = vst [vmem:[%s167 + $0x438] sm:$0xff] %v770
        %1798 = vst [vmem:[%s167 + $0x440] sm:$0xff] %v1188
        %1799 = vst [vmem:[%s167 + $0x448] sm:$0xff] %v1606
        %1800 = vst [vmem:[%s167 + $0x450] sm:$0xff] %v773
        %1801 = vst [vmem:[%s167 + $0x458] sm:$0xff] %v1191
        %1802 = vst [vmem:[%s167 + $0x460] sm:$0xff] %v1609
        %1803 = vst [vmem:[%s167 + $0x468] sm:$0xff] %v776
        %1804 = vst [vmem:[%s167 + $0x470] sm:$0xff] %v1194
        %1805 = vst [vmem:[%s167 + $0x478] sm:$0xff] %v1612
        %1806 = vst [vmem:[%s167 + $0x480] sm:$0xff] %v779
        %1807 = vst [vmem:[%s167 + $0x488] sm:$0xff] %v1197
        %1808 = vst [vmem:[%s167 + $0x490] sm:$0xff] %v1615
        %1809 = vst [vmem:[%s167 + $0x498] sm:$0xff] %v782
        %1810 = vst [vmem:[%s167 + $0x4a0] sm:$0xff] %v1200
        %1811 = vst [vmem:[%s167 + $0x4a8] sm:$0xff] %v1618
        %1812 = vst [vmem:[%s167 + $0x4b0] sm:$0xff] %v785
        %1813 = vst [vmem:[%s167 + $0x4b8] sm:$0xff] %v1203
        %1814 = vst [vmem:[%s167 + $0x4c0] sm:$0xff] %v1621
        %1815 = vst [vmem:[%s167 + $0x4c8] sm:$0xff] %v788
        %1816 = vst [vmem:[%s167 + $0x4d0] sm:$0xff] %v1206
        %1817 = vst [vmem:[%s167 + $0x4d8] sm:$0xff] %v1624
        %1818 = vst [vmem:[%s167 + $0x4e0] sm:$0xff] %v791
        %1819 = vst [vmem:[%s167 + $0x4e8] sm:$0xff] %v1209
        %1820 = vst [vmem:[%s167 + $0x4f0] sm:$0xff] %v1627
        %1821 = vst [vmem:[%s167 + $0x4f8] sm:$0xff] %v794
        %1822 = vst [vmem:[%s167 + $0x500] sm:$0xff] %v1212
        %1823 = vst [vmem:[%s167 + $0x508] sm:$0xff] %v1630
        %1824 = vst [vmem:[%s167 + $0x510] sm:$0xff] %v797
        %1825 = vst [vmem:[%s167 + $0x518] sm:$0xff] %v1215
        %1826 = vst [vmem:[%s167 + $0x520] sm:$0xff] %v1633
        %1827 = vst [vmem:[%s167 + $0x528] sm:$0xff] %v800
        %1828 = vst [vmem:[%s167 + $0x530] sm:$0xff] %v1218
        %1829 = vst [vmem:[%s167 + $0x538] sm:$0xff] %v1636
        %1830 = vst [vmem:[%s167 + $0x540] sm:$0xff] %v803
        %1831 = vst [vmem:[%s167 + $0x548] sm:$0xff] %v1221
        %1832 = vst [vmem:[%s167 + $0x550] sm:$0xff] %v1639
        %1833 = vst [vmem:[%s167 + $0x558] sm:$0xff] %v806
        %1834 = vst [vmem:[%s167 + $0x560] sm:$0xff] %v1224
        %1835 = vst [vmem:[%s167 + $0x568] sm:$0xff] %v1642
        %1836 = vst [vmem:[%s167 + $0x570] sm:$0xff] %v809
        %1837 = vst [vmem:[%s167 + $0x578] sm:$0xff] %v1227
        %1838 = vst [vmem:[%s167 + $0x580] sm:$0xff] %v1645
        %1839 = vst [vmem:[%s167 + $0x588] sm:$0xff] %v812
        %1840 = vst [vmem:[%s167 + $0x590] sm:$0xff] %v1230
        %1841 = vst [vmem:[%s167 + $0x598] sm:$0xff] %v1648
        %1842 = vst [vmem:[%s167 + $0x5a0] sm:$0xff] %v815
        %1843 = vst [vmem:[%s167 + $0x5a8] sm:$0xff] %v1233
        %1844 = vst [vmem:[%s167 + $0x5b0] sm:$0xff] %v1651
        %1845 = vst [vmem:[%s167 + $0x5b8] sm:$0xff] %v818
        %1846 = vst [vmem:[%s167 + $0x5c0] sm:$0xff] %v1236
        %1847 = vst [vmem:[%s167 + $0x5c8] sm:$0xff] %v1654
        %1848 = vst [vmem:[%s167 + $0x5d0] sm:$0xff] %v821
        %1849 = vst [vmem:[%s167 + $0x5d8] sm:$0xff] %v1239
        %1850 = vst [vmem:[%s167 + $0x5e0] sm:$0xff] %v1657
        %1851 = vst [vmem:[%s167 + $0x5e8] sm:$0xff] %v824
        %1852 = vst [vmem:[%s167 + $0x5f0] sm:$0xff] %v1242
        %1853 = vst [vmem:[%s167 + $0x5f8] sm:$0xff] %v1660
        %s1854 = sand.u32 %s87, 1
        %s1855 = sand.u32 %s87, 1
        %s1856 = smul.addr %s1855, 1536
        %s1857 = scalar_lea.vmem [#allocation2], %s1856
        // Predicated region
        $region29: #{attention_forward.3} parent=27 // pred_check
          %p1858 = pneg %p97
        $region30: #{attention_forward.3} parent=27 // pred_check_branch
          %1860 = sbr.rel (%p1858) target = $region32
        $region31: #{attention_forward.3} parent=27 // pred_region
          %s1861 = smul.u32 64, %s17
          %s1862 = smul.u32 3, %s18
          %s1863 = smul.addr %s1861, 6
          %s1864 = sadd.s32 %s1862, %s1863
          %s1865 = smul.addr %s1864, 8
          %s1866 = scalar_lea.vmem %s2, %s1865
          // Predicated region
          $region33: #{attention_forward.3} parent=31 // pred_check
            _
          $region34: #{attention_forward.3} parent=31 // pred_check_branch
            %1868 = sbr.rel (0) target = $region36
          $region35: #{attention_forward.3} parent=31 // pred_region
            // Predicated region
            $region37: #{attention_forward.3} parent=35 // pred_check
              _
            $region38: #{attention_forward.3} parent=35 // pred_check_branch
              %1870 = sbr.rel (0) target = $region40
            $region39: #{attention_forward.3} parent=35 // pred_region
              loop: start=0, step=1, limit=1
              $region41: #{attention_forward.3} parent=39 // loop_pre_header
                _
              $region42: #{attention_forward.3} parent=39 // loop_header
                %s1872 = sphi 0, %s1876
                %p1873 = scmp.ge.s32.totalorder %s1872, 1
                %s1877 = sphi %s1857, %s1857
                %s1878 = sphi %s1866, %s1866
              $region43: #{attention_forward.3} parent=39 // loop_header_branch
                %1875 = sbr.rel (%p1873) target = $region47
              $region44: #{attention_forward.3} parent=39 // loop_body
                %v1879 = vld [vmem:[%s1877] sm:$0xff]
                %1880 = vst [vmem:[%s1878] sm:$0xff] %v1879
                %v1881 = vld [vmem:[%s1877 + $0x8] sm:$0xff]
                %1882 = vst [vmem:[%s1878 + $0x8] sm:$0xff] %v1881
                %v1883 = vld [vmem:[%s1877 + $0x10] sm:$0xff]
                %1884 = vst [vmem:[%s1878 + $0x10] sm:$0xff] %v1883
                %v1885 = vld [vmem:[%s1877 + $0x18] sm:$0xff]
                %1886 = vst [vmem:[%s1878 + $0x30] sm:$0xff] %v1885
                %v1887 = vld [vmem:[%s1877 + $0x20] sm:$0xff]
                %1888 = vst [vmem:[%s1878 + $0x38] sm:$0xff] %v1887
                %v1889 = vld [vmem:[%s1877 + $0x28] sm:$0xff]
                %1890 = vst [vmem:[%s1878 + $0x40] sm:$0xff] %v1889
                %v1891 = vld [vmem:[%s1877 + $0x30] sm:$0xff]
                %1892 = vst [vmem:[%s1878 + $0x60] sm:$0xff] %v1891
                %v1893 = vld [vmem:[%s1877 + $0x38] sm:$0xff]
                %1894 = vst [vmem:[%s1878 + $0x68] sm:$0xff] %v1893
                %v1895 = vld [vmem:[%s1877 + $0x40] sm:$0xff]
                %1896 = vst [vmem:[%s1878 + $0x70] sm:$0xff] %v1895
                %v1897 = vld [vmem:[%s1877 + $0x48] sm:$0xff]
                %1898 = vst [vmem:[%s1878 + $0x90] sm:$0xff] %v1897
                %v1899 = vld [vmem:[%s1877 + $0x50] sm:$0xff]
                %1900 = vst [vmem:[%s1878 + $0x98] sm:$0xff] %v1899
                %v1901 = vld [vmem:[%s1877 + $0x58] sm:$0xff]
                %1902 = vst [vmem:[%s1878 + $0xa0] sm:$0xff] %v1901
                %v1903 = vld [vmem:[%s1877 + $0x60] sm:$0xff]
                %1904 = vst [vmem:[%s1878 + $0xc0] sm:$0xff] %v1903
                %v1905 = vld [vmem:[%s1877 + $0x68] sm:$0xff]
                %1906 = vst [vmem:[%s1878 + $0xc8] sm:$0xff] %v1905
                %v1907 = vld [vmem:[%s1877 + $0x70] sm:$0xff]
                %1908 = vst [vmem:[%s1878 + $0xd0] sm:$0xff] %v1907
                %v1909 = vld [vmem:[%s1877 + $0x78] sm:$0xff]
                %1910 = vst [vmem:[%s1878 + $0xf0] sm:$0xff] %v1909
                %v1911 = vld [vmem:[%s1877 + $0x80] sm:$0xff]
                %1912 = vst [vmem:[%s1878 + $0xf8] sm:$0xff] %v1911
                %v1913 = vld [vmem:[%s1877 + $0x88] sm:$0xff]
                %1914 = vst [vmem:[%s1878 + $0x100] sm:$0xff] %v1913
                %v1915 = vld [vmem:[%s1877 + $0x90] sm:$0xff]
                %1916 = vst [vmem:[%s1878 + $0x120] sm:$0xff] %v1915
                %v1917 = vld [vmem:[%s1877 + $0x98] sm:$0xff]
                %1918 = vst [vmem:[%s1878 + $0x128] sm:$0xff] %v1917
                %v1919 = vld [vmem:[%s1877 + $0xa0] sm:$0xff]
                %1920 = vst [vmem:[%s1878 + $0x130] sm:$0xff] %v1919
                %v1921 = vld [vmem:[%s1877 + $0xa8] sm:$0xff]
                %1922 = vst [vmem:[%s1878 + $0x150] sm:$0xff] %v1921
                %v1923 = vld [vmem:[%s1877 + $0xb0] sm:$0xff]
                %1924 = vst [vmem:[%s1878 + $0x158] sm:$0xff] %v1923
                %v1925 = vld [vmem:[%s1877 + $0xb8] sm:$0xff]
                %1926 = vst [vmem:[%s1878 + $0x160] sm:$0xff] %v1925
                %v1927 = vld [vmem:[%s1877 + $0xc0] sm:$0xff]
                %1928 = vst [vmem:[%s1878 + $0x180] sm:$0xff] %v1927
                %v1929 = vld [vmem:[%s1877 + $0xc8] sm:$0xff]
                %1930 = vst [vmem:[%s1878 + $0x188] sm:$0xff] %v1929
                %v1931 = vld [vmem:[%s1877 + $0xd0] sm:$0xff]
                %1932 = vst [vmem:[%s1878 + $0x190] sm:$0xff] %v1931
                %v1933 = vld [vmem:[%s1877 + $0xd8] sm:$0xff]
                %1934 = vst [vmem:[%s1878 + $0x1b0] sm:$0xff] %v1933
                %v1935 = vld [vmem:[%s1877 + $0xe0] sm:$0xff]
                %1936 = vst [vmem:[%s1878 + $0x1b8] sm:$0xff] %v1935
                %v1937 = vld [vmem:[%s1877 + $0xe8] sm:$0xff]
                %1938 = vst [vmem:[%s1878 + $0x1c0] sm:$0xff] %v1937
                %v1939 = vld [vmem:[%s1877 + $0xf0] sm:$0xff]
                %1940 = vst [vmem:[%s1878 + $0x1e0] sm:$0xff] %v1939
                %v1941 = vld [vmem:[%s1877 + $0xf8] sm:$0xff]
                %1942 = vst [vmem:[%s1878 + $0x1e8] sm:$0xff] %v1941
                %v1943 = vld [vmem:[%s1877 + $0x100] sm:$0xff]
                %1944 = vst [vmem:[%s1878 + $0x1f0] sm:$0xff] %v1943
                %v1945 = vld [vmem:[%s1877 + $0x108] sm:$0xff]
                %1946 = vst [vmem:[%s1878 + $0x210] sm:$0xff] %v1945
                %v1947 = vld [vmem:[%s1877 + $0x110] sm:$0xff]
                %1948 = vst [vmem:[%s1878 + $0x218] sm:$0xff] %v1947
                %v1949 = vld [vmem:[%s1877 + $0x118] sm:$0xff]
                %1950 = vst [vmem:[%s1878 + $0x220] sm:$0xff] %v1949
                %v1951 = vld [vmem:[%s1877 + $0x120] sm:$0xff]
                %1952 = vst [vmem:[%s1878 + $0x240] sm:$0xff] %v1951
                %v1953 = vld [vmem:[%s1877 + $0x128] sm:$0xff]
                %1954 = vst [vmem:[%s1878 + $0x248] sm:$0xff] %v1953
                %v1955 = vld [vmem:[%s1877 + $0x130] sm:$0xff]
                %1956 = vst [vmem:[%s1878 + $0x250] sm:$0xff] %v1955
                %v1957 = vld [vmem:[%s1877 + $0x138] sm:$0xff]
                %1958 = vst [vmem:[%s1878 + $0x270] sm:$0xff] %v1957
                %v1959 = vld [vmem:[%s1877 + $0x140] sm:$0xff]
                %1960 = vst [vmem:[%s1878 + $0x278] sm:$0xff] %v1959
                %v1961 = vld [vmem:[%s1877 + $0x148] sm:$0xff]
                %1962 = vst [vmem:[%s1878 + $0x280] sm:$0xff] %v1961
                %v1963 = vld [vmem:[%s1877 + $0x150] sm:$0xff]
                %1964 = vst [vmem:[%s1878 + $0x2a0] sm:$0xff] %v1963
                %v1965 = vld [vmem:[%s1877 + $0x158] sm:$0xff]
                %1966 = vst [vmem:[%s1878 + $0x2a8] sm:$0xff] %v1965
                %v1967 = vld [vmem:[%s1877 + $0x160] sm:$0xff]
                %1968 = vst [vmem:[%s1878 + $0x2b0] sm:$0xff] %v1967
                %v1969 = vld [vmem:[%s1877 + $0x168] sm:$0xff]
                %1970 = vst [vmem:[%s1878 + $0x2d0] sm:$0xff] %v1969
                %v1971 = vld [vmem:[%s1877 + $0x170] sm:$0xff]
                %1972 = vst [vmem:[%s1878 + $0x2d8] sm:$0xff] %v1971
                %v1973 = vld [vmem:[%s1877 + $0x178] sm:$0xff]
                %1974 = vst [vmem:[%s1878 + $0x2e0] sm:$0xff] %v1973
                %v1975 = vld [vmem:[%s1877 + $0x180] sm:$0xff]
                %1976 = vst [vmem:[%s1878 + $0x300] sm:$0xff] %v1975
                %v1977 = vld [vmem:[%s1877 + $0x188] sm:$0xff]
                %1978 = vst [vmem:[%s1878 + $0x308] sm:$0xff] %v1977
                %v1979 = vld [vmem:[%s1877 + $0x190] sm:$0xff]
                %1980 = vst [vmem:[%s1878 + $0x310] sm:$0xff] %v1979
                %v1981 = vld [vmem:[%s1877 + $0x198] sm:$0xff]
                %1982 = vst [vmem:[%s1878 + $0x330] sm:$0xff] %v1981
                %v1983 = vld [vmem:[%s1877 + $0x1a0] sm:$0xff]
                %1984 = vst [vmem:[%s1878 + $0x338] sm:$0xff] %v1983
                %v1985 = vld [vmem:[%s1877 + $0x1a8] sm:$0xff]
                %1986 = vst [vmem:[%s1878 + $0x340] sm:$0xff] %v1985
                %v1987 = vld [vmem:[%s1877 + $0x1b0] sm:$0xff]
                %1988 = vst [vmem:[%s1878 + $0x360] sm:$0xff] %v1987
                %v1989 = vld [vmem:[%s1877 + $0x1b8] sm:$0xff]
                %1990 = vst [vmem:[%s1878 + $0x368] sm:$0xff] %v1989
                %v1991 = vld [vmem:[%s1877 + $0x1c0] sm:$0xff]
                %1992 = vst [vmem:[%s1878 + $0x370] sm:$0xff] %v1991
                %v1993 = vld [vmem:[%s1877 + $0x1c8] sm:$0xff]
                %1994 = vst [vmem:[%s1878 + $0x390] sm:$0xff] %v1993
                %v1995 = vld [vmem:[%s1877 + $0x1d0] sm:$0xff]
                %1996 = vst [vmem:[%s1878 + $0x398] sm:$0xff] %v1995
                %v1997 = vld [vmem:[%s1877 + $0x1d8] sm:$0xff]
                %1998 = vst [vmem:[%s1878 + $0x3a0] sm:$0xff] %v1997
                %v1999 = vld [vmem:[%s1877 + $0x1e0] sm:$0xff]
                %2000 = vst [vmem:[%s1878 + $0x3c0] sm:$0xff] %v1999
                %v2001 = vld [vmem:[%s1877 + $0x1e8] sm:$0xff]
                %2002 = vst [vmem:[%s1878 + $0x3c8] sm:$0xff] %v2001
                %v2003 = vld [vmem:[%s1877 + $0x1f0] sm:$0xff]
                %2004 = vst [vmem:[%s1878 + $0x3d0] sm:$0xff] %v2003
                %v2005 = vld [vmem:[%s1877 + $0x1f8] sm:$0xff]
                %2006 = vst [vmem:[%s1878 + $0x3f0] sm:$0xff] %v2005
                %v2007 = vld [vmem:[%s1877 + $0x200] sm:$0xff]
                %2008 = vst [vmem:[%s1878 + $0x3f8] sm:$0xff] %v2007
                %v2009 = vld [vmem:[%s1877 + $0x208] sm:$0xff]
                %2010 = vst [vmem:[%s1878 + $0x400] sm:$0xff] %v2009
                %v2011 = vld [vmem:[%s1877 + $0x210] sm:$0xff]
                %2012 = vst [vmem:[%s1878 + $0x420] sm:$0xff] %v2011
                %v2013 = vld [vmem:[%s1877 + $0x218] sm:$0xff]
                %2014 = vst [vmem:[%s1878 + $0x428] sm:$0xff] %v2013
                %v2015 = vld [vmem:[%s1877 + $0x220] sm:$0xff]
                %2016 = vst [vmem:[%s1878 + $0x430] sm:$0xff] %v2015
                %v2017 = vld [vmem:[%s1877 + $0x228] sm:$0xff]
                %2018 = vst [vmem:[%s1878 + $0x450] sm:$0xff] %v2017
                %v2019 = vld [vmem:[%s1877 + $0x230] sm:$0xff]
                %2020 = vst [vmem:[%s1878 + $0x458] sm:$0xff] %v2019
                %v2021 = vld [vmem:[%s1877 + $0x238] sm:$0xff]
                %2022 = vst [vmem:[%s1878 + $0x460] sm:$0xff] %v2021
                %v2023 = vld [vmem:[%s1877 + $0x240] sm:$0xff]
                %2024 = vst [vmem:[%s1878 + $0x480] sm:$0xff] %v2023
                %v2025 = vld [vmem:[%s1877 + $0x248] sm:$0xff]
                %2026 = vst [vmem:[%s1878 + $0x488] sm:$0xff] %v2025
                %v2027 = vld [vmem:[%s1877 + $0x250] sm:$0xff]
                %2028 = vst [vmem:[%s1878 + $0x490] sm:$0xff] %v2027
                %v2029 = vld [vmem:[%s1877 + $0x258] sm:$0xff]
                %2030 = vst [vmem:[%s1878 + $0x4b0] sm:$0xff] %v2029
                %v2031 = vld [vmem:[%s1877 + $0x260] sm:$0xff]
                %2032 = vst [vmem:[%s1878 + $0x4b8] sm:$0xff] %v2031
                %v2033 = vld [vmem:[%s1877 + $0x268] sm:$0xff]
                %2034 = vst [vmem:[%s1878 + $0x4c0] sm:$0xff] %v2033
                %v2035 = vld [vmem:[%s1877 + $0x270] sm:$0xff]
                %2036 = vst [vmem:[%s1878 + $0x4e0] sm:$0xff] %v2035
                %v2037 = vld [vmem:[%s1877 + $0x278] sm:$0xff]
                %2038 = vst [vmem:[%s1878 + $0x4e8] sm:$0xff] %v2037
                %v2039 = vld [vmem:[%s1877 + $0x280] sm:$0xff]
                %2040 = vst [vmem:[%s1878 + $0x4f0] sm:$0xff] %v2039
                %v2041 = vld [vmem:[%s1877 + $0x288] sm:$0xff]
                %2042 = vst [vmem:[%s1878 + $0x510] sm:$0xff] %v2041
                %v2043 = vld [vmem:[%s1877 + $0x290] sm:$0xff]
                %2044 = vst [vmem:[%s1878 + $0x518] sm:$0xff] %v2043
                %v2045 = vld [vmem:[%s1877 + $0x298] sm:$0xff]
                %2046 = vst [vmem:[%s1878 + $0x520] sm:$0xff] %v2045
                %v2047 = vld [vmem:[%s1877 + $0x2a0] sm:$0xff]
                %2048 = vst [vmem:[%s1878 + $0x540] sm:$0xff] %v2047
                %v2049 = vld [vmem:[%s1877 + $0x2a8] sm:$0xff]
                %2050 = vst [vmem:[%s1878 + $0x548] sm:$0xff] %v2049
                %v2051 = vld [vmem:[%s1877 + $0x2b0] sm:$0xff]
                %2052 = vst [vmem:[%s1878 + $0x550] sm:$0xff] %v2051
                %v2053 = vld [vmem:[%s1877 + $0x2b8] sm:$0xff]
                %2054 = vst [vmem:[%s1878 + $0x570] sm:$0xff] %v2053
                %v2055 = vld [vmem:[%s1877 + $0x2c0] sm:$0xff]
                %2056 = vst [vmem:[%s1878 + $0x578] sm:$0xff] %v2055
                %v2057 = vld [vmem:[%s1877 + $0x2c8] sm:$0xff]
                %2058 = vst [vmem:[%s1878 + $0x580] sm:$0xff] %v2057
                %v2059 = vld [vmem:[%s1877 + $0x2d0] sm:$0xff]
                %2060 = vst [vmem:[%s1878 + $0x5a0] sm:$0xff] %v2059
                %v2061 = vld [vmem:[%s1877 + $0x2d8] sm:$0xff]
                %2062 = vst [vmem:[%s1878 + $0x5a8] sm:$0xff] %v2061
                %v2063 = vld [vmem:[%s1877 + $0x2e0] sm:$0xff]
                %2064 = vst [vmem:[%s1878 + $0x5b0] sm:$0xff] %v2063
                %v2065 = vld [vmem:[%s1877 + $0x2e8] sm:$0xff]
                %2066 = vst [vmem:[%s1878 + $0x5d0] sm:$0xff] %v2065
                %v2067 = vld [vmem:[%s1877 + $0x2f0] sm:$0xff]
                %2068 = vst [vmem:[%s1878 + $0x5d8] sm:$0xff] %v2067
                %v2069 = vld [vmem:[%s1877 + $0x2f8] sm:$0xff]
                %2070 = vst [vmem:[%s1878 + $0x5e0] sm:$0xff] %v2069
                %v2071 = vld [vmem:[%s1877 + $0x300] sm:$0xff]
                %2072 = vst [vmem:[%s1878 + $0x600] sm:$0xff] %v2071
                %v2073 = vld [vmem:[%s1877 + $0x308] sm:$0xff]
                %2074 = vst [vmem:[%s1878 + $0x608] sm:$0xff] %v2073
                %v2075 = vld [vmem:[%s1877 + $0x310] sm:$0xff]
                %2076 = vst [vmem:[%s1878 + $0x610] sm:$0xff] %v2075
                %v2077 = vld [vmem:[%s1877 + $0x318] sm:$0xff]
                %2078 = vst [vmem:[%s1878 + $0x630] sm:$0xff] %v2077
                %v2079 = vld [vmem:[%s1877 + $0x320] sm:$0xff]
                %2080 = vst [vmem:[%s1878 + $0x638] sm:$0xff] %v2079
                %v2081 = vld [vmem:[%s1877 + $0x328] sm:$0xff]
                %2082 = vst [vmem:[%s1878 + $0x640] sm:$0xff] %v2081
                %v2083 = vld [vmem:[%s1877 + $0x330] sm:$0xff]
                %2084 = vst [vmem:[%s1878 + $0x660] sm:$0xff] %v2083
                %v2085 = vld [vmem:[%s1877 + $0x338] sm:$0xff]
                %2086 = vst [vmem:[%s1878 + $0x668] sm:$0xff] %v2085
                %v2087 = vld [vmem:[%s1877 + $0x340] sm:$0xff]
                %2088 = vst [vmem:[%s1878 + $0x670] sm:$0xff] %v2087
                %v2089 = vld [vmem:[%s1877 + $0x348] sm:$0xff]
                %2090 = vst [vmem:[%s1878 + $0x690] sm:$0xff] %v2089
                %v2091 = vld [vmem:[%s1877 + $0x350] sm:$0xff]
                %2092 = vst [vmem:[%s1878 + $0x698] sm:$0xff] %v2091
                %v2093 = vld [vmem:[%s1877 + $0x358] sm:$0xff]
                %2094 = vst [vmem:[%s1878 + $0x6a0] sm:$0xff] %v2093
                %v2095 = vld [vmem:[%s1877 + $0x360] sm:$0xff]
                %2096 = vst [vmem:[%s1878 + $0x6c0] sm:$0xff] %v2095
                %v2097 = vld [vmem:[%s1877 + $0x368] sm:$0xff]
                %2098 = vst [vmem:[%s1878 + $0x6c8] sm:$0xff] %v2097
                %v2099 = vld [vmem:[%s1877 + $0x370] sm:$0xff]
                %2100 = vst [vmem:[%s1878 + $0x6d0] sm:$0xff] %v2099
                %v2101 = vld [vmem:[%s1877 + $0x378] sm:$0xff]
                %2102 = vst [vmem:[%s1878 + $0x6f0] sm:$0xff] %v2101
                %v2103 = vld [vmem:[%s1877 + $0x380] sm:$0xff]
                %2104 = vst [vmem:[%s1878 + $0x6f8] sm:$0xff] %v2103
                %v2105 = vld [vmem:[%s1877 + $0x388] sm:$0xff]
                %2106 = vst [vmem:[%s1878 + $0x700] sm:$0xff] %v2105
                %v2107 = vld [vmem:[%s1877 + $0x390] sm:$0xff]
                %2108 = vst [vmem:[%s1878 + $0x720] sm:$0xff] %v2107
                %v2109 = vld [vmem:[%s1877 + $0x398] sm:$0xff]
                %2110 = vst [vmem:[%s1878 + $0x728] sm:$0xff] %v2109
                %v2111 = vld [vmem:[%s1877 + $0x3a0] sm:$0xff]
                %2112 = vst [vmem:[%s1878 + $0x730] sm:$0xff] %v2111
                %v2113 = vld [vmem:[%s1877 + $0x3a8] sm:$0xff]
                %2114 = vst [vmem:[%s1878 + $0x750] sm:$0xff] %v2113
                %v2115 = vld [vmem:[%s1877 + $0x3b0] sm:$0xff]
                %2116 = vst [vmem:[%s1878 + $0x758] sm:$0xff] %v2115
                %v2117 = vld [vmem:[%s1877 + $0x3b8] sm:$0xff]
                %2118 = vst [vmem:[%s1878 + $0x760] sm:$0xff] %v2117
                %v2119 = vld [vmem:[%s1877 + $0x3c0] sm:$0xff]
                %2120 = vst [vmem:[%s1878 + $0x780] sm:$0xff] %v2119
                %v2121 = vld [vmem:[%s1877 + $0x3c8] sm:$0xff]
                %2122 = vst [vmem:[%s1878 + $0x788] sm:$0xff] %v2121
                %v2123 = vld [vmem:[%s1877 + $0x3d0] sm:$0xff]
                %2124 = vst [vmem:[%s1878 + $0x790] sm:$0xff] %v2123
                %v2125 = vld [vmem:[%s1877 + $0x3d8] sm:$0xff]
                %2126 = vst [vmem:[%s1878 + $0x7b0] sm:$0xff] %v2125
                %v2127 = vld [vmem:[%s1877 + $0x3e0] sm:$0xff]
                %2128 = vst [vmem:[%s1878 + $0x7b8] sm:$0xff] %v2127
                %v2129 = vld [vmem:[%s1877 + $0x3e8] sm:$0xff]
                %2130 = vst [vmem:[%s1878 + $0x7c0] sm:$0xff] %v2129
                %v2131 = vld [vmem:[%s1877 + $0x3f0] sm:$0xff]
                %2132 = vst [vmem:[%s1878 + $0x7e0] sm:$0xff] %v2131
                %v2133 = vld [vmem:[%s1877 + $0x3f8] sm:$0xff]
                %2134 = vst [vmem:[%s1878 + $0x7e8] sm:$0xff] %v2133
                %v2135 = vld [vmem:[%s1877 + $0x400] sm:$0xff]
                %2136 = vst [vmem:[%s1878 + $0x7f0] sm:$0xff] %v2135
                %v2137 = vld [vmem:[%s1877 + $0x408] sm:$0xff]
                %2138 = vst [vmem:[%s1878 + $0x810] sm:$0xff] %v2137
                %v2139 = vld [vmem:[%s1877 + $0x410] sm:$0xff]
                %2140 = vst [vmem:[%s1878 + $0x818] sm:$0xff] %v2139
                %v2141 = vld [vmem:[%s1877 + $0x418] sm:$0xff]
                %2142 = vst [vmem:[%s1878 + $0x820] sm:$0xff] %v2141
                %v2143 = vld [vmem:[%s1877 + $0x420] sm:$0xff]
                %2144 = vst [vmem:[%s1878 + $0x840] sm:$0xff] %v2143
                %v2145 = vld [vmem:[%s1877 + $0x428] sm:$0xff]
                %2146 = vst [vmem:[%s1878 + $0x848] sm:$0xff] %v2145
                %v2147 = vld [vmem:[%s1877 + $0x430] sm:$0xff]
                %2148 = vst [vmem:[%s1878 + $0x850] sm:$0xff] %v2147
                %v2149 = vld [vmem:[%s1877 + $0x438] sm:$0xff]
                %2150 = vst [vmem:[%s1878 + $0x870] sm:$0xff] %v2149
                %v2151 = vld [vmem:[%s1877 + $0x440] sm:$0xff]
                %2152 = vst [vmem:[%s1878 + $0x878] sm:$0xff] %v2151
                %v2153 = vld [vmem:[%s1877 + $0x448] sm:$0xff]
                %2154 = vst [vmem:[%s1878 + $0x880] sm:$0xff] %v2153
                %v2155 = vld [vmem:[%s1877 + $0x450] sm:$0xff]
                %2156 = vst [vmem:[%s1878 + $0x8a0] sm:$0xff] %v2155
                %v2157 = vld [vmem:[%s1877 + $0x458] sm:$0xff]
                %2158 = vst [vmem:[%s1878 + $0x8a8] sm:$0xff] %v2157
                %v2159 = vld [vmem:[%s1877 + $0x460] sm:$0xff]
                %2160 = vst [vmem:[%s1878 + $0x8b0] sm:$0xff] %v2159
                %v2161 = vld [vmem:[%s1877 + $0x468] sm:$0xff]
                %2162 = vst [vmem:[%s1878 + $0x8d0] sm:$0xff] %v2161
                %v2163 = vld [vmem:[%s1877 + $0x470] sm:$0xff]
                %2164 = vst [vmem:[%s1878 + $0x8d8] sm:$0xff] %v2163
                %v2165 = vld [vmem:[%s1877 + $0x478] sm:$0xff]
                %2166 = vst [vmem:[%s1878 + $0x8e0] sm:$0xff] %v2165
                %v2167 = vld [vmem:[%s1877 + $0x480] sm:$0xff]
                %2168 = vst [vmem:[%s1878 + $0x900] sm:$0xff] %v2167
                %v2169 = vld [vmem:[%s1877 + $0x488] sm:$0xff]
                %2170 = vst [vmem:[%s1878 + $0x908] sm:$0xff] %v2169
                %v2171 = vld [vmem:[%s1877 + $0x490] sm:$0xff]
                %2172 = vst [vmem:[%s1878 + $0x910] sm:$0xff] %v2171
                %v2173 = vld [vmem:[%s1877 + $0x498] sm:$0xff]
                %2174 = vst [vmem:[%s1878 + $0x930] sm:$0xff] %v2173
                %v2175 = vld [vmem:[%s1877 + $0x4a0] sm:$0xff]
                %2176 = vst [vmem:[%s1878 + $0x938] sm:$0xff] %v2175
                %v2177 = vld [vmem:[%s1877 + $0x4a8] sm:$0xff]
                %2178 = vst [vmem:[%s1878 + $0x940] sm:$0xff] %v2177
                %v2179 = vld [vmem:[%s1877 + $0x4b0] sm:$0xff]
                %2180 = vst [vmem:[%s1878 + $0x960] sm:$0xff] %v2179
                %v2181 = vld [vmem:[%s1877 + $0x4b8] sm:$0xff]
                %2182 = vst [vmem:[%s1878 + $0x968] sm:$0xff] %v2181
                %v2183 = vld [vmem:[%s1877 + $0x4c0] sm:$0xff]
                %2184 = vst [vmem:[%s1878 + $0x970] sm:$0xff] %v2183
                %v2185 = vld [vmem:[%s1877 + $0x4c8] sm:$0xff]
                %2186 = vst [vmem:[%s1878 + $0x990] sm:$0xff] %v2185
                %v2187 = vld [vmem:[%s1877 + $0x4d0] sm:$0xff]
                %2188 = vst [vmem:[%s1878 + $0x998] sm:$0xff] %v2187
                %v2189 = vld [vmem:[%s1877 + $0x4d8] sm:$0xff]
                %2190 = vst [vmem:[%s1878 + $0x9a0] sm:$0xff] %v2189
                %v2191 = vld [vmem:[%s1877 + $0x4e0] sm:$0xff]
                %2192 = vst [vmem:[%s1878 + $0x9c0] sm:$0xff] %v2191
                %v2193 = vld [vmem:[%s1877 + $0x4e8] sm:$0xff]
                %2194 = vst [vmem:[%s1878 + $0x9c8] sm:$0xff] %v2193
                %v2195 = vld [vmem:[%s1877 + $0x4f0] sm:$0xff]
                %2196 = vst [vmem:[%s1878 + $0x9d0] sm:$0xff] %v2195
                %v2197 = vld [vmem:[%s1877 + $0x4f8] sm:$0xff]
                %2198 = vst [vmem:[%s1878 + $0x9f0] sm:$0xff] %v2197
                %v2199 = vld [vmem:[%s1877 + $0x500] sm:$0xff]
                %2200 = vst [vmem:[%s1878 + $0x9f8] sm:$0xff] %v2199
                %v2201 = vld [vmem:[%s1877 + $0x508] sm:$0xff]
                %2202 = vst [vmem:[%s1878 + $0xa00] sm:$0xff] %v2201
                %v2203 = vld [vmem:[%s1877 + $0x510] sm:$0xff]
                %2204 = vst [vmem:[%s1878 + $0xa20] sm:$0xff] %v2203
                %v2205 = vld [vmem:[%s1877 + $0x518] sm:$0xff]
                %2206 = vst [vmem:[%s1878 + $0xa28] sm:$0xff] %v2205
                %v2207 = vld [vmem:[%s1877 + $0x520] sm:$0xff]
                %2208 = vst [vmem:[%s1878 + $0xa30] sm:$0xff] %v2207
                %v2209 = vld [vmem:[%s1877 + $0x528] sm:$0xff]
                %2210 = vst [vmem:[%s1878 + $0xa50] sm:$0xff] %v2209
                %v2211 = vld [vmem:[%s1877 + $0x530] sm:$0xff]
                %2212 = vst [vmem:[%s1878 + $0xa58] sm:$0xff] %v2211
                %v2213 = vld [vmem:[%s1877 + $0x538] sm:$0xff]
                %2214 = vst [vmem:[%s1878 + $0xa60] sm:$0xff] %v2213
                %v2215 = vld [vmem:[%s1877 + $0x540] sm:$0xff]
                %2216 = vst [vmem:[%s1878 + $0xa80] sm:$0xff] %v2215
                %v2217 = vld [vmem:[%s1877 + $0x548] sm:$0xff]
                %2218 = vst [vmem:[%s1878 + $0xa88] sm:$0xff] %v2217
                %v2219 = vld [vmem:[%s1877 + $0x550] sm:$0xff]
                %2220 = vst [vmem:[%s1878 + $0xa90] sm:$0xff] %v2219
                %v2221 = vld [vmem:[%s1877 + $0x558] sm:$0xff]
                %2222 = vst [vmem:[%s1878 + $0xab0] sm:$0xff] %v2221
                %v2223 = vld [vmem:[%s1877 + $0x560] sm:$0xff]
                %2224 = vst [vmem:[%s1878 + $0xab8] sm:$0xff] %v2223
                %v2225 = vld [vmem:[%s1877 + $0x568] sm:$0xff]
                %2226 = vst [vmem:[%s1878 + $0xac0] sm:$0xff] %v2225
                %v2227 = vld [vmem:[%s1877 + $0x570] sm:$0xff]
                %2228 = vst [vmem:[%s1878 + $0xae0] sm:$0xff] %v2227
                %v2229 = vld [vmem:[%s1877 + $0x578] sm:$0xff]
                %2230 = vst [vmem:[%s1878 + $0xae8] sm:$0xff] %v2229
                %v2231 = vld [vmem:[%s1877 + $0x580] sm:$0xff]
                %2232 = vst [vmem:[%s1878 + $0xaf0] sm:$0xff] %v2231
                %v2233 = vld [vmem:[%s1877 + $0x588] sm:$0xff]
                %2234 = vst [vmem:[%s1878 + $0xb10] sm:$0xff] %v2233
                %v2235 = vld [vmem:[%s1877 + $0x590] sm:$0xff]
                %2236 = vst [vmem:[%s1878 + $0xb18] sm:$0xff] %v2235
                %v2237 = vld [vmem:[%s1877 + $0x598] sm:$0xff]
                %2238 = vst [vmem:[%s1878 + $0xb20] sm:$0xff] %v2237
                %v2239 = vld [vmem:[%s1877 + $0x5a0] sm:$0xff]
                %2240 = vst [vmem:[%s1878 + $0xb40] sm:$0xff] %v2239
                %v2241 = vld [vmem:[%s1877 + $0x5a8] sm:$0xff]
                %2242 = vst [vmem:[%s1878 + $0xb48] sm:$0xff] %v2241
                %v2243 = vld [vmem:[%s1877 + $0x5b0] sm:$0xff]
                %2244 = vst [vmem:[%s1878 + $0xb50] sm:$0xff] %v2243
                %v2245 = vld [vmem:[%s1877 + $0x5b8] sm:$0xff]
                %2246 = vst [vmem:[%s1878 + $0xb70] sm:$0xff] %v2245
                %v2247 = vld [vmem:[%s1877 + $0x5c0] sm:$0xff]
                %2248 = vst [vmem:[%s1878 + $0xb78] sm:$0xff] %v2247
                %v2249 = vld [vmem:[%s1877 + $0x5c8] sm:$0xff]
                %2250 = vst [vmem:[%s1878 + $0xb80] sm:$0xff] %v2249
                %v2251 = vld [vmem:[%s1877 + $0x5d0] sm:$0xff]
                %2252 = vst [vmem:[%s1878 + $0xba0] sm:$0xff] %v2251
                %v2253 = vld [vmem:[%s1877 + $0x5d8] sm:$0xff]
                %2254 = vst [vmem:[%s1878 + $0xba8] sm:$0xff] %v2253
                %v2255 = vld [vmem:[%s1877 + $0x5e0] sm:$0xff]
                %2256 = vst [vmem:[%s1878 + $0xbb0] sm:$0xff] %v2255
                %v2257 = vld [vmem:[%s1877 + $0x5e8] sm:$0xff]
                %2258 = vst [vmem:[%s1878 + $0xbd0] sm:$0xff] %v2257
                %v2259 = vld [vmem:[%s1877 + $0x5f0] sm:$0xff]
                %2260 = vst [vmem:[%s1878 + $0xbd8] sm:$0xff] %v2259
                %v2261 = vld [vmem:[%s1877 + $0x5f8] sm:$0xff]
                %2262 = vst [vmem:[%s1878 + $0xbe0] sm:$0xff] %v2261
              $region45: #{attention_forward.3} parent=39 // loop_footer
                %s1876 = sadd.s32 1, %s1872
              $region46: #{attention_forward.3} parent=39 // loop_footer_branch
                %1871 = sbr.rel target = $region42
              $region47: #{attention_forward.3} parent=39 // loop_exit
                _
            $region40: #{attention_forward.3} parent=35 // pred_fallthru
              _
            // Predicated region
            $region48: #{attention_forward.3} parent=35 // pred_check
              _
            $region49: #{attention_forward.3} parent=35 // pred_check_branch
              %2264 = sbr.rel target = $region51
            $region50: #{attention_forward.3} parent=35 // pred_region
              _
            $region51: #{attention_forward.3} parent=35 // pred_fallthru
              _
          $region36: #{attention_forward.3} parent=31 // pred_fallthru
            _
          %2265 = vnop
        $region32: #{attention_forward.3} parent=27 // pred_fallthru
          _
      $region28: #{attention_forward.3} parent=5 // pred_fallthru
        _
      %p2266 = scmp.le.s32.totalorder 2, %s8
      // Predicated region
      $region52: #{attention_forward.3} parent=5 // pred_check
        %p2267 = pneg %p2266
      $region53: #{attention_forward.3} parent=5 // pred_check_branch
        %2269 = sbr.rel (%p2267) target = $region55
      $region54: #{attention_forward.3} parent=5 // pred_region
        %s2270 = ssub.s32 %s8, 2
        // Predicated region
        $region56: #{attention_forward.3} parent=54 // pred_check
          %p2271 = pneg %p103
        $region57: #{attention_forward.3} parent=54 // pred_check_branch
          %2273 = sbr.rel (%p2271) target = $region59
        $region58: #{attention_forward.3} parent=54 // pred_region
          %s2274 = sand.u32 %s88, 1
          %s2275 = sand.u32 %s88, 1
          %s2276 = smul.addr %s2275, 1536
          %s2277 = scalar_lea.vmem [#allocation2], %s2276
        $region59: #{attention_forward.3} parent=54 // pred_fallthru
          _
      $region55: #{attention_forward.3} parent=5 // pred_fallthru
        _
    $region6: #{attention_forward.3} parent=1 // loop_footer
      %s12 = sadd.s32 1, %s8
    $region7: #{attention_forward.3} parent=1 // loop_footer_branch
      %7 = sbr.rel target = $region3
    $region8: #{attention_forward.3} parent=1 // loop_exit
      _

</llo_original>
